<compile_context>
chip_gen: v6e
topology: v6e:2x2x1
jax: 0.10.0
libtpu: 0.0.40
codegen_flags: <defaults>
</compile_context>

<pallas_src>
import math
import numpy as np
import jax
import jax.numpy as jnp
from jax.experimental import pallas as pl
from jax.experimental.pallas import tpu as pltpu

Z_DIM = 32
NGF   = 16                  # hardcoded in the module's __init__
COEF  = 4                   # hardcoded in the module's __init__
CIN   = COEF                # 4
COUT  = NGF * COEF          # 64
H = W = NGF                 # 16
KH = KW = 5
PAD = 2
LIN_OUT = COEF * NGF * NGF  # 1024
KROW = (W + 2 * PAD) * CIN  # 80   : padded-row width in the HWC slab
NCOL = COUT * W             # 1024 : conv output columns, ordered [co*16 + j]

_GELU_K = math.sqrt(2.0 / math.pi)


def _gelu_tanh(x):
    # tanh-GELU approximation (max abs dev from exact erf-GELU ~1e-3; the
    # transcendental runs on the EUP slot instead of a long VPU polynomial).
    return 0.5 * x * (1.0 + jnp.tanh(_GELU_K * (x + 0.044715 * (x * x * x))))


# --------------------------- fused kernel ---------------------------
def projection_kernel(z_ref, wl_ref, bl_ref, wc_ref, o_ref, xpad_ref):
    # ---- Linear + GELU for one batch element.  Weight columns are already
    #      permuted so h[(i*16+j)*4+c] == gelu(linear(z))[c, i, j]. ----
    h = jnp.dot(z_ref[0], wl_ref[...], preferred_element_type=jnp.float32)
    h = _gelu_tanh(h + bl_ref[...])                       # (1, 1024)

    # ---- Assemble the zero-padded conv input slab X (20, 80) in VMEM:
    #      X[2+i, (2+j)*CIN + c] = h[(i*16+j)*CIN + c]. ----
    xpad_ref[...] = jnp.zeros_like(xpad_ref)
    for i in range(H):
        xpad_ref[PAD + i:PAD + i + 1, PAD * CIN:(PAD + W) * CIN] = (
            h[:, i * (W * CIN):(i + 1) * (W * CIN)])

    # ---- ConvTranspose2d(s=1, p=2) == "same" 5x5 conv with flipped kernel,
    #      done as 5 row-shifted matmuls with a banded weight matrix:
    #      acc[i, co*16+j] = sum_ky X[i+ky, :] @ W_big[ky]. ----
    acc = jnp.zeros((H, NCOL), jnp.float32)
    for ky in range(KH):
        acc += jnp.dot(xpad_ref[ky:ky + H, :], wc_ref[ky],
                       preferred_element_type=jnp.float32)

    o_ref[0] = _gelu_tanh(acc).astype(o_ref.dtype)        # lane-dense (16, 1024)


def projection_forward(z, packed):
    z2 = z.reshape(z.shape[0], -1)            # matches torch z.view(B, -1)
    B = z2.shape[0]
    out = pl.pallas_call(
        projection_kernel,
        out_shape=jax.ShapeDtypeStruct((B, H, NCOL), jnp.float32),
        grid=(B,),
        in_specs=[
            pl.BlockSpec((1, 1, Z_DIM), lambda b: (b, 0, 0)),      # z
            pl.BlockSpec((Z_DIM, LIN_OUT), lambda b: (0, 0)),      # w_lin_p
            pl.BlockSpec((1, LIN_OUT), lambda b: (0, 0)),          # b_lin_p
            pl.BlockSpec((KH, KROW, NCOL), lambda b: (0, 0, 0)),   # w_big
        ],
        out_specs=pl.BlockSpec((1, H, NCOL), lambda b: (b, 0, 0)),
        scratch_shapes=[pltpu.VMEM((H + 2 * PAD, KROW), jnp.float32)],
        compiler_params=pltpu.CompilerParams(
            dimension_semantics=("parallel",)),
    )(z2.reshape(B, 1, Z_DIM), packed["w_lin_p"], packed["b_lin_p"],
      packed["w_big"])
    # rows = image row i, cols = co*16 + j  ->  NCHW (B, 64, 16, 16)
    # TODO(synk): could fold this one transpose into the kernel by emitting a
    # (COUT, H*W) tile directly, at the cost of an in-kernel (16,64,16) relayout.
    return jnp.transpose(out.reshape(B, H, COUT, W), (0, 2, 1, 3))


# ----------------- parameter init & one-time packing -----------------
def init_params(key):
    k1, k2, k3 = jax.random.split(key, 3)
    # torch layouts: Linear weight (out, in); ConvTranspose2d weight (in, out, kh, kw)
    w_lin = 0.1 * jax.random.normal(k1, (LIN_OUT, Z_DIM), jnp.float32)
    b_lin = 0.01 * jax.random.normal(k2, (LIN_OUT,), jnp.float32)
    w_dc = 0.1 * jax.random.normal(k3, (CIN, COUT, KH, KW), jnp.float32)
    return dict(w_lin=w_lin, b_lin=b_lin, w_dc=w_dc)


def pack_params(params):
    """One-time host-side repack of torch-layout params into kernel layout."""
    w_lin = np.asarray(params["w_lin"])      # (1024, 32)
    b_lin = np.asarray(params["b_lin"])      # (1024,)
    w_dc = np.asarray(params["w_dc"])        # (4, 64, 5, 5)

    # linear: kernel column n = (i*16+j)*4+c  <-  torch output index c*256+i*16+j
    n = np.arange(LIN_OUT)
    cc, ij = n % CIN, n // CIN
    ii, jj = ij // W, ij % W
    perm = cc * (H * W) + ii * W + jj
    w_lin_p = w_lin.T[:, perm].astype(np.float32)                 # (32, 1024)
    b_lin_p = b_lin[perm].reshape(1, LIN_OUT).astype(np.float32)  # (1, 1024)

    # deconv: flipped kernel Wf[ky,kx,ci,co] = W_dc[ci,co,4-ky,4-kx], packed into
    # banded matrices W_big[ky, (j+kx)*4+ci, co*16+j] = Wf[ky,kx,ci,co]
    wf = w_dc[:, :, ::-1, ::-1].transpose(2, 3, 0, 1)             # (ky,kx,ci,co)
    w4 = np.zeros((KH, KROW, COUT, W), np.float32)
    for ky in range(KH):
        for kx in range(KW):
            for j in range(W):
                w4[ky, (j + kx) * CIN:(j + kx + 1) * CIN, :, j] = wf[ky, kx]
    w_big = w4.reshape(KH, KROW, NCOL)                            # (5, 80, 1024)

    return dict(w_lin_p=jnp.asarray(w_lin_p),
                b_lin_p=jnp.asarray(b_lin_p),
                w_big=jnp.asarray(w_big))


# ----------------- pure-JAX reference (exact erf GELU) -----------------
def reference_forward(z, params):
    B = z.shape[0]
    h = z.reshape(B, -1) @ params["w_lin"].T + params["b_lin"]
    h = 0.5 * h * (1.0 + jax.scipy.special.erf(h / math.sqrt(2.0)))
    x = h.reshape(B, COEF, NGF, NGF)
    w_conv = jnp.transpose(params["w_dc"][:, :, ::-1, ::-1], (1, 0, 2, 3))
    y = jax.lax.conv_general_dilated(
        x, w_conv, window_strides=(1, 1), padding=((PAD, PAD), (PAD, PAD)),
        dimension_numbers=("NCHW", "OIHW", "NCHW"))
    return 0.5 * y * (1.0 + jax.scipy.special.erf(y / math.sqrt(2.0)))


if __name__ == "__main__":
    key = jax.random.PRNGKey(0)
    kz, kp = jax.random.split(key)
    params = init_params(kp)
    packed = pack_params(params)
    z = jax.random.normal(kz, (2, Z_DIM), jnp.float32)   # batch=2, z_dim=32

    fwd = jax.jit(projection_forward)
    out = jax.block_until_ready(fwd(z, packed))
    assert out.shape == (2, COUT, H, W), out.shape

    ref = reference_forward(z, params)
    max_err = float(jnp.max(jnp.abs(out - ref)))
    assert max_err < 1e-2, f"max abs err {max_err}"
    print("KERNEL_OK")
</pallas_src>

<mosaic_0001>
module attributes {stable_mosaic.version = 11 : i64} {
  func.func @projection_kernel(%arg0: i32, %arg1: memref<1x1x32xf32, #tpu.memory_space<vmem>>, %arg2: memref<32x1024xf32, #tpu.memory_space<vmem>>, %arg3: memref<1x1024xf32, #tpu.memory_space<vmem>>, %arg4: memref<5x80x1024xf32, #tpu.memory_space<vmem>>, %arg5: memref<1x16x1024xf32, #tpu.memory_space<vmem>>, %arg6: memref<20x80xf32, #tpu.memory_space<vmem>>) attributes {dimension_semantics = [#tpu.dimension_semantics<parallel>], iteration_bounds = array<i64: 2>, scalar_prefetch = 0 : i64, scratch_operands = 1 : i64, tpu.core_type = #tpu.core_type<tc>, window_params = [{transform_indices = @transform_0, window_bounds = array<i64: 1, 1, 32>}, {pipeline_mode = #tpu.pipeline_mode<synchronous>, transform_indices = @transform_1, window_bounds = array<i64: 32, 1024>}, {pipeline_mode = #tpu.pipeline_mode<synchronous>, transform_indices = @transform_2, window_bounds = array<i64: 1, 1024>}, {pipeline_mode = #tpu.pipeline_mode<synchronous>, transform_indices = @transform_3, window_bounds = array<i64: 5, 80, 1024>}, {transform_indices = @transform_4, window_bounds = array<i64: 1, 16, 1024>}]} {
    %c0 = arith.constant 0 : index
    %c0_0 = arith.constant 0 : index
    %c0_1 = arith.constant 0 : index
    %0 = vector.load %arg1[%c0, %c0_0, %c0_1] : memref<1x1x32xf32, #tpu.memory_space<vmem>>, vector<1x1x32xf32>
    %1 = vector.shape_cast %0 : vector<1x1x32xf32> to vector<1x32xf32>
    %c0_2 = arith.constant 0 : index
    %c0_3 = arith.constant 0 : index
    %2 = vector.load %arg2[%c0_2, %c0_3] : memref<32x1024xf32, #tpu.memory_space<vmem>>, vector<32x1024xf32>
    %cst = arith.constant dense<0.000000e+00> : vector<1x1024xf32>
    %3 = tpu.matmul %1, %2, %cst {dimension_numbers = #tpu.dot_dimension_numbers<[1], [0], [0], [1], [0, 0, 1, 1], [], []>} : vector<1x32xf32>, vector<32x1024xf32>, vector<1x1024xf32> -> vector<1x1024xf32>
    %c0_4 = arith.constant 0 : index
    %c0_5 = arith.constant 0 : index
    %4 = vector.load %arg3[%c0_4, %c0_5] : memref<1x1024xf32, #tpu.memory_space<vmem>>, vector<1x1024xf32>
    %5 = arith.addf %3, %4 : vector<1x1024xf32>
    %cst_6 = arith.constant 5.000000e-01 : f32
    %6 = vector.broadcast %cst_6 : f32 to vector<1x1024xf32>
    %7 = arith.mulf %6, %5 : vector<1x1024xf32>
    %8 = arith.mulf %5, %5 : vector<1x1024xf32>
    %9 = arith.mulf %8, %5 : vector<1x1024xf32>
    %cst_7 = arith.constant 4.471500e-02 : f32
    %10 = vector.broadcast %cst_7 : f32 to vector<1x1024xf32>
    %11 = arith.mulf %10, %9 : vector<1x1024xf32>
    %12 = arith.addf %5, %11 : vector<1x1024xf32>
    %cst_8 = arith.constant 0.797884583 : f32
    %13 = vector.broadcast %cst_8 : f32 to vector<1x1024xf32>
    %14 = arith.mulf %13, %12 : vector<1x1024xf32>
    %15 = math.tanh %14 : vector<1x1024xf32>
    %cst_9 = arith.constant 1.000000e+00 : f32
    %16 = vector.broadcast %cst_9 : f32 to vector<1x1024xf32>
    %17 = arith.addf %16, %15 : vector<1x1024xf32>
    %18 = arith.mulf %7, %17 : vector<1x1024xf32>
    %cst_10 = arith.constant 0.000000e+00 : f32
    %19 = vector.broadcast %cst_10 : f32 to vector<20x80xf32>
    %c0_11 = arith.constant 0 : index
    %c0_12 = arith.constant 0 : index
    %20 = vector.load %arg6[%c0_11, %c0_12] : memref<20x80xf32, #tpu.memory_space<vmem>>, vector<20x80xf32>
    tpu.vector_store %arg6[%c0_11, %c0_12], %19 {strides = array<i32>} : memref<20x80xf32, #tpu.memory_space<vmem>>, vector<20x80xf32>,
    %21 = vector.extract_strided_slice %18 {offsets = [0, 0], sizes = [1, 64], strides = [1, 1]} : vector<1x1024xf32> to vector<1x64xf32>
    %c2 = arith.constant 2 : index
    %c8 = arith.constant 8 : index
    %22 = vector.load %arg6[%c2, %c8] : memref<20x80xf32, #tpu.memory_space<vmem>>, vector<1x64xf32>
    tpu.vector_store %arg6[%c2, %c8], %21 {strides = array<i32>} : memref<20x80xf32, #tpu.memory_space<vmem>>, vector<1x64xf32>,
    %23 = vector.extract_strided_slice %18 {offsets = [0, 64], sizes = [1, 64], strides = [1, 1]} : vector<1x1024xf32> to vector<1x64xf32>
    %c3 = arith.constant 3 : index
    %c8_13 = arith.constant 8 : index
    %24 = vector.load %arg6[%c3, %c8_13] : memref<20x80xf32, #tpu.memory_space<vmem>>, vector<1x64xf32>
    tpu.vector_store %arg6[%c3, %c8_13], %23 {strides = array<i32>} : memref<20x80xf32, #tpu.memory_space<vmem>>, vector<1x64xf32>,
    %25 = vector.extract_strided_slice %18 {offsets = [0, 128], sizes = [1, 64], strides = [1, 1]} : vector<1x1024xf32> to vector<1x64xf32>
    %c4 = arith.constant 4 : index
    %c8_14 = arith.constant 8 : index
    %26 = vector.load %arg6[%c4, %c8_14] : memref<20x80xf32, #tpu.memory_space<vmem>>, vector<1x64xf32>
    tpu.vector_store %arg6[%c4, %c8_14], %25 {strides = array<i32>} : memref<20x80xf32, #tpu.memory_space<vmem>>, vector<1x64xf32>,
    %27 = vector.extract_strided_slice %18 {offsets = [0, 192], sizes = [1, 64], strides = [1, 1]} : vector<1x1024xf32> to vector<1x64xf32>
    %c5 = arith.constant 5 : index
    %c8_15 = arith.constant 8 : index
    %28 = vector.load %arg6[%c5, %c8_15] : memref<20x80xf32, #tpu.memory_space<vmem>>, vector<1x64xf32>
    tpu.vector_store %arg6[%c5, %c8_15], %27 {strides = array<i32>} : memref<20x80xf32, #tpu.memory_space<vmem>>, vector<1x64xf32>,
    %29 = vector.extract_strided_slice %18 {offsets = [0, 256], sizes = [1, 64], strides = [1, 1]} : vector<1x1024xf32> to vector<1x64xf32>
    %c6 = arith.constant 6 : index
    %c8_16 = arith.constant 8 : index
    %30 = vector.load %arg6[%c6, %c8_16] : memref<20x80xf32, #tpu.memory_space<vmem>>, vector<1x64xf32>
    tpu.vector_store %arg6[%c6, %c8_16], %29 {strides = array<i32>} : memref<20x80xf32, #tpu.memory_space<vmem>>, vector<1x64xf32>,
    %31 = vector.extract_strided_slice %18 {offsets = [0, 320], sizes = [1, 64], strides = [1, 1]} : vector<1x1024xf32> to vector<1x64xf32>
    %c7 = arith.constant 7 : index
    %c8_17 = arith.constant 8 : index
    %32 = vector.load %arg6[%c7, %c8_17] : memref<20x80xf32, #tpu.memory_space<vmem>>, vector<1x64xf32>
    tpu.vector_store %arg6[%c7, %c8_17], %31 {strides = array<i32>} : memref<20x80xf32, #tpu.memory_space<vmem>>, vector<1x64xf32>,
    %33 = vector.extract_strided_slice %18 {offsets = [0, 384], sizes = [1, 64], strides = [1, 1]} : vector<1x1024xf32> to vector<1x64xf32>
    %c8_18 = arith.constant 8 : index
    %c8_19 = arith.constant 8 : index
    %34 = vector.load %arg6[%c8_18, %c8_19] : memref<20x80xf32, #tpu.memory_space<vmem>>, vector<1x64xf32>
    tpu.vector_store %arg6[%c8_18, %c8_19], %33 {strides = array<i32>} : memref<20x80xf32, #tpu.memory_space<vmem>>, vector<1x64xf32>,
    %35 = vector.extract_strided_slice %18 {offsets = [0, 448], sizes = [1, 64], strides = [1, 1]} : vector<1x1024xf32> to vector<1x64xf32>
    %c9 = arith.constant 9 : index
    %c8_20 = arith.constant 8 : index
    %36 = vector.load %arg6[%c9, %c8_20] : memref<20x80xf32, #tpu.memory_space<vmem>>, vector<1x64xf32>
    tpu.vector_store %arg6[%c9, %c8_20], %35 {strides = array<i32>} : memref<20x80xf32, #tpu.memory_space<vmem>>, vector<1x64xf32>,
    %37 = vector.extract_strided_slice %18 {offsets = [0, 512], sizes = [1, 64], strides = [1, 1]} : vector<1x1024xf32> to vector<1x64xf32>
    %c10 = arith.constant 10 : index
    %c8_21 = arith.constant 8 : index
    %38 = vector.load %arg6[%c10, %c8_21] : memref<20x80xf32, #tpu.memory_space<vmem>>, vector<1x64xf32>
    tpu.vector_store %arg6[%c10, %c8_21], %37 {strides = array<i32>} : memref<20x80xf32, #tpu.memory_space<vmem>>, vector<1x64xf32>,
    %39 = vector.extract_strided_slice %18 {offsets = [0, 576], sizes = [1, 64], strides = [1, 1]} : vector<1x1024xf32> to vector<1x64xf32>
    %c11 = arith.constant 11 : index
    %c8_22 = arith.constant 8 : index
    %40 = vector.load %arg6[%c11, %c8_22] : memref<20x80xf32, #tpu.memory_space<vmem>>, vector<1x64xf32>
    tpu.vector_store %arg6[%c11, %c8_22], %39 {strides = array<i32>} : memref<20x80xf32, #tpu.memory_space<vmem>>, vector<1x64xf32>,
    %41 = vector.extract_strided_slice %18 {offsets = [0, 640], sizes = [1, 64], strides = [1, 1]} : vector<1x1024xf32> to vector<1x64xf32>
    %c12 = arith.constant 12 : index
    %c8_23 = arith.constant 8 : index
    %42 = vector.load %arg6[%c12, %c8_23] : memref<20x80xf32, #tpu.memory_space<vmem>>, vector<1x64xf32>
    tpu.vector_store %arg6[%c12, %c8_23], %41 {strides = array<i32>} : memref<20x80xf32, #tpu.memory_space<vmem>>, vector<1x64xf32>,
    %43 = vector.extract_strided_slice %18 {offsets = [0, 704], sizes = [1, 64], strides = [1, 1]} : vector<1x1024xf32> to vector<1x64xf32>
    %c13 = arith.constant 13 : index
    %c8_24 = arith.constant 8 : index
    %44 = vector.load %arg6[%c13, %c8_24] : memref<20x80xf32, #tpu.memory_space<vmem>>, vector<1x64xf32>
    tpu.vector_store %arg6[%c13, %c8_24], %43 {strides = array<i32>} : memref<20x80xf32, #tpu.memory_space<vmem>>, vector<1x64xf32>,
    %45 = vector.extract_strided_slice %18 {offsets = [0, 768], sizes = [1, 64], strides = [1, 1]} : vector<1x1024xf32> to vector<1x64xf32>
    %c14 = arith.constant 14 : index
    %c8_25 = arith.constant 8 : index
    %46 = vector.load %arg6[%c14, %c8_25] : memref<20x80xf32, #tpu.memory_space<vmem>>, vector<1x64xf32>
    tpu.vector_store %arg6[%c14, %c8_25], %45 {strides = array<i32>} : memref<20x80xf32, #tpu.memory_space<vmem>>, vector<1x64xf32>,
    %47 = vector.extract_strided_slice %18 {offsets = [0, 832], sizes = [1, 64], strides = [1, 1]} : vector<1x1024xf32> to vector<1x64xf32>
    %c15 = arith.constant 15 : index
    %c8_26 = arith.constant 8 : index
    %48 = vector.load %arg6[%c15, %c8_26] : memref<20x80xf32, #tpu.memory_space<vmem>>, vector<1x64xf32>
    tpu.vector_store %arg6[%c15, %c8_26], %47 {strides = array<i32>} : memref<20x80xf32, #tpu.memory_space<vmem>>, vector<1x64xf32>,
    %49 = vector.extract_strided_slice %18 {offsets = [0, 896], sizes = [1, 64], strides = [1, 1]} : vector<1x1024xf32> to vector<1x64xf32>
    %c16 = arith.constant 16 : index
    %c8_27 = arith.constant 8 : index
    %50 = vector.load %arg6[%c16, %c8_27] : memref<20x80xf32, #tpu.memory_space<vmem>>, vector<1x64xf32>
    tpu.vector_store %arg6[%c16, %c8_27], %49 {strides = array<i32>} : memref<20x80xf32, #tpu.memory_space<vmem>>, vector<1x64xf32>,
    %51 = vector.extract_strided_slice %18 {offsets = [0, 960], sizes = [1, 64], strides = [1, 1]} : vector<1x1024xf32> to vector<1x64xf32>
    %c17 = arith.constant 17 : index
    %c8_28 = arith.constant 8 : index
    %52 = vector.load %arg6[%c17, %c8_28] : memref<20x80xf32, #tpu.memory_space<vmem>>, vector<1x64xf32>
    tpu.vector_store %arg6[%c17, %c8_28], %51 {strides = array<i32>} : memref<20x80xf32, #tpu.memory_space<vmem>>, vector<1x64xf32>,
    %cst_29 = arith.constant 0.000000e+00 : f32
    %53 = vector.broadcast %cst_29 : f32 to vector<16x1024xf32>
    %c0_30 = arith.constant 0 : index
    %c0_31 = arith.constant 0 : index
    %54 = vector.load %arg6[%c0_30, %c0_31] : memref<20x80xf32, #tpu.memory_space<vmem>>, vector<16x80xf32>
    %c0_32 = arith.constant 0 : index
    %c0_33 = arith.constant 0 : index
    %c0_34 = arith.constant 0 : index
    %55 = vector.load %arg4[%c0_32, %c0_33, %c0_34] : memref<5x80x1024xf32, #tpu.memory_space<vmem>>, vector<1x80x1024xf32>
    %56 = vector.shape_cast %55 : vector<1x80x1024xf32> to vector<80x1024xf32>
    %cst_35 = arith.constant dense<0.000000e+00> : vector<16x1024xf32>
    %57 = tpu.matmul %54, %56, %cst_35 {dimension_numbers = #tpu.dot_dimension_numbers<[1], [0], [0], [1], [0, 0, 1, 1], [], []>} : vector<16x80xf32>, vector<80x1024xf32>, vector<16x1024xf32> -> vector<16x1024xf32>
    %58 = arith.addf %53, %57 : vector<16x1024xf32>
    %c1 = arith.constant 1 : index
    %c0_36 = arith.constant 0 : index
    %59 = vector.load %arg6[%c1, %c0_36] : memref<20x80xf32, #tpu.memory_space<vmem>>, vector<16x80xf32>
    %c1_37 = arith.constant 1 : index
    %c0_38 = arith.constant 0 : index
    %c0_39 = arith.constant 0 : index
    %60 = vector.load %arg4[%c1_37, %c0_38, %c0_39] : memref<5x80x1024xf32, #tpu.memory_space<vmem>>, vector<1x80x1024xf32>
    %61 = vector.shape_cast %60 : vector<1x80x1024xf32> to vector<80x1024xf32>
    %cst_40 = arith.constant dense<0.000000e+00> : vector<16x1024xf32>
    %62 = tpu.matmul %59, %61, %cst_40 {dimension_numbers = #tpu.dot_dimension_numbers<[1], [0], [0], [1], [0, 0, 1, 1], [], []>} : vector<16x80xf32>, vector<80x1024xf32>, vector<16x1024xf32> -> vector<16x1024xf32>
    %63 = arith.addf %58, %62 : vector<16x1024xf32>
    %c2_41 = arith.constant 2 : index
    %c0_42 = arith.constant 0 : index
    %64 = vector.load %arg6[%c2_41, %c0_42] : memref<20x80xf32, #tpu.memory_space<vmem>>, vector<16x80xf32>
    %c2_43 = arith.constant 2 : index
    %c0_44 = arith.constant 0 : index
    %c0_45 = arith.constant 0 : index
    %65 = vector.load %arg4[%c2_43, %c0_44, %c0_45] : memref<5x80x1024xf32, #tpu.memory_space<vmem>>, vector<1x80x1024xf32>
    %66 = vector.shape_cast %65 : vector<1x80x1024xf32> to vector<80x1024xf32>
    %cst_46 = arith.constant dense<0.000000e+00> : vector<16x1024xf32>
    %67 = tpu.matmul %64, %66, %cst_46 {dimension_numbers = #tpu.dot_dimension_numbers<[1], [0], [0], [1], [0, 0, 1, 1], [], []>} : vector<16x80xf32>, vector<80x1024xf32>, vector<16x1024xf32> -> vector<16x1024xf32>
    %68 = arith.addf %63, %67 : vector<16x1024xf32>
    %c3_47 = arith.constant 3 : index
    %c0_48 = arith.constant 0 : index
    %69 = vector.load %arg6[%c3_47, %c0_48] : memref<20x80xf32, #tpu.memory_space<vmem>>, vector<16x80xf32>
    %c3_49 = arith.constant 3 : index
    %c0_50 = arith.constant 0 : index
    %c0_51 = arith.constant 0 : index
    %70 = vector.load %arg4[%c3_49, %c0_50, %c0_51] : memref<5x80x1024xf32, #tpu.memory_space<vmem>>, vector<1x80x1024xf32>
    %71 = vector.shape_cast %70 : vector<1x80x1024xf32> to vector<80x1024xf32>
    %cst_52 = arith.constant dense<0.000000e+00> : vector<16x1024xf32>
    %72 = tpu.matmul %69, %71, %cst_52 {dimension_numbers = #tpu.dot_dimension_numbers<[1], [0], [0], [1], [0, 0, 1, 1], [], []>} : vector<16x80xf32>, vector<80x1024xf32>, vector<16x1024xf32> -> vector<16x1024xf32>
    %73 = arith.addf %68, %72 : vector<16x1024xf32>
    %c4_53 = arith.constant 4 : index
    %c0_54 = arith.constant 0 : index
    %74 = vector.load %arg6[%c4_53, %c0_54] : memref<20x80xf32, #tpu.memory_space<vmem>>, vector<16x80xf32>
    %c4_55 = arith.constant 4 : index
    %c0_56 = arith.constant 0 : index
    %c0_57 = arith.constant 0 : index
    %75 = vector.load %arg4[%c4_55, %c0_56, %c0_57] : memref<5x80x1024xf32, #tpu.memory_space<vmem>>, vector<1x80x1024xf32>
    %76 = vector.shape_cast %75 : vector<1x80x1024xf32> to vector<80x1024xf32>
    %cst_58 = arith.constant dense<0.000000e+00> : vector<16x1024xf32>
    %77 = tpu.matmul %74, %76, %cst_58 {dimension_numbers = #tpu.dot_dimension_numbers<[1], [0], [0], [1], [0, 0, 1, 1], [], []>} : vector<16x80xf32>, vector<80x1024xf32>, vector<16x1024xf32> -> vector<16x1024xf32>
    %78 = arith.addf %73, %77 : vector<16x1024xf32>
    %cst_59 = arith.constant 5.000000e-01 : f32
    %79 = vector.broadcast %cst_59 : f32 to vector<16x1024xf32>
    %80 = arith.mulf %79, %78 : vector<16x1024xf32>
    %81 = arith.mulf %78, %78 : vector<16x1024xf32>
    %82 = arith.mulf %81, %78 : vector<16x1024xf32>
    %cst_60 = arith.constant 4.471500e-02 : f32
    %83 = vector.broadcast %cst_60 : f32 to vector<16x1024xf32>
    %84 = arith.mulf %83, %82 : vector<16x1024xf32>
    %85 = arith.addf %78, %84 : vector<16x1024xf32>
    %cst_61 = arith.constant 0.797884583 : f32
    %86 = vector.broadcast %cst_61 : f32 to vector<16x1024xf32>
    %87 = arith.mulf %86, %85 : vector<16x1024xf32>
    %88 = math.tanh %87 : vector<16x1024xf32>
    %cst_62 = arith.constant 1.000000e+00 : f32
    %89 = vector.broadcast %cst_62 : f32 to vector<16x1024xf32>
    %90 = arith.addf %89, %88 : vector<16x1024xf32>
    %91 = arith.mulf %80, %90 : vector<16x1024xf32>
    %c0_63 = arith.constant 0 : index
    %c0_64 = arith.constant 0 : index
    %c0_65 = arith.constant 0 : index
    %92 = vector.load %arg5[%c0_63, %c0_64, %c0_65] : memref<1x16x1024xf32, #tpu.memory_space<vmem>>, vector<1x16x1024xf32>
    %93 = vector.shape_cast %92 : vector<1x16x1024xf32> to vector<16x1024xf32>
    %94 = vector.shape_cast %91 : vector<16x1024xf32> to vector<1x16x1024xf32>
    tpu.vector_store %arg5[%c0_63, %c0_64, %c0_65], %94 {strides = array<i32>} : memref<1x16x1024xf32, #tpu.memory_space<vmem>>, vector<1x16x1024xf32>,
    return
  }
  func.func @transform_0(%arg0: i32) -> (i32, i32, i32) {
    %c0_i32 = arith.constant 0 : i32
    %c0_i32_0 = arith.constant 0 : i32
    %c0_i32_1 = arith.constant 0 : i32
    return %arg0, %c0_i32, %c0_i32_0 : i32, i32, i32
  }
  func.func @transform_1(%arg0: i32) -> (i32, i32) {
    %c0_i32 = arith.constant 0 : i32
    %c0_i32_0 = arith.constant 0 : i32
    %c0_i32_1 = arith.constant 0 : i32
    return %c0_i32, %c0_i32_0 : i32, i32
  }
  func.func @transform_2(%arg0: i32) -> (i32, i32) {
    %c0_i32 = arith.constant 0 : i32
    %c0_i32_0 = arith.constant 0 : i32
    %c0_i32_1 = arith.constant 0 : i32
    return %c0_i32, %c0_i32_0 : i32, i32
  }
  func.func @transform_3(%arg0: i32) -> (i32, i32, i32) {
    %c0_i32 = arith.constant 0 : i32
    %c0_i32_0 = arith.constant 0 : i32
    %c0_i32_1 = arith.constant 0 : i32
    %c0_i32_2 = arith.constant 0 : i32
    return %c0_i32, %c0_i32_0, %c0_i32_1 : i32, i32, i32
  }
  func.func @transform_4(%arg0: i32) -> (i32, i32, i32) {
    %c0_i32 = arith.constant 0 : i32
    %c0_i32_0 = arith.constant 0 : i32
    %c0_i32_1 = arith.constant 0 : i32
    return %arg0, %c0_i32, %c0_i32_0 : i32, i32, i32
  }
}

</mosaic_0001>

<llo_original>
// kernel: projection_forward.1
$region0: #{projection_forward.1}
  #allocation0 [shape = 'u32[]', space=smem, size = 0x4, offset = 0x4, fixed_abs, tag = 'smem constant byte address 0x4 - core index']
  #allocation1 [shape = 'u32[144,128]{1,0:T(1,128)}', space=vmem, size = 0x12000, scoped, tag = 'internal scratch']
  #allocation2 [shape = 'f32[20,80]{1,0:T(8,128)}', space=vmem, size = 0x3000, scoped, tag = 'scratch operand']
  %s0 = inlined_call_operand.hbm [shape: f32[2,1,32], index: 0, kind: input, shape index: {}]
  %s1 = inlined_call_operand.hbm [shape: f32[32,1024], index: 1, kind: input, shape index: {}]
  %s2 = inlined_call_operand.hbm [shape: f32[1,1024], index: 2, kind: input, shape index: {}]
  %s3 = inlined_call_operand.hbm [shape: f32[5,80,1024], index: 3, kind: input, shape index: {}]
  %s4 = inlined_call_operand.vmem [shape: f32[2,16,1024], index: 4, kind: output, shape index: {}]
  %s5 = sld [smem:[#allocation0]]
  $region65: #{projection_forward.1} parent=0
    _
  %s7 = ssub.s32 1, %s5
  %s8 = scalar_select 0, %s7, %s5
  $region1: #{projection_forward.1} parent=0
    #allocation3 [shape = 'u8[1024]{0}', space=vmem, size = 0x400, scoped, tag = 'input window, operand 0']
    #allocation4 [shape = 's32[2]{0}', space=sflag, size = 0x8, scoped, tag = 'scoped memory for projection_forward.1']
    #allocation5 [shape = 'u8[131072]{0}', space=vmem, size = 0x20000, scoped, tag = 'input window, operand 1, single buffered']
    #allocation6 [shape = 's32[1]{0}', space=sflag, size = 0x4, scoped, tag = 'scoped memory for projection_forward.1']
    #allocation7 [shape = 'u8[4096]{0}', space=vmem, size = 0x1000, scoped, tag = 'input window, operand 2, single buffered']
    #allocation8 [shape = 'u8[1638400]{0}', space=vmem, size = 0x190000, scoped, tag = 'input window, operand 3, single buffered']
    #allocation9 [shape = 's32[1]{0}', space=sflag, size = 0x4, scoped, tag = 'scoped memory for projection_forward.1']
    %9 = vsyncpa [#allocation4], 0
    %s10 = scalar_lea.sflag [#allocation4], 1
    %11 = vsyncpa %s10, 0
    %12 = vsyncpa [#allocation6], 0
    %13 = vsyncpa [#allocation9], 0
    loop: start=0, step=1, limit=4
    $region2: #{projection_forward.1} parent=1 // loop_pre_header
      _
    $region3: #{projection_forward.1} parent=1 // loop_header
      %s15 = sphi 0, %s19
      %p16 = scmp.ge.s32.totalorder %s15, 4
      %s25 = sphi 0, %s27
      %s28 = sphi 0, %s25
      %s29 = sphi 0, %s28
      %s45 = sphi 0, %s29
      %s49 = sphi 0, %s49
      %s51 = sphi 0, %s49
      %s52 = sphi 0, %s51
      %s66 = sphi 0, %s52
      %s70 = sphi 0, %s70
      %s72 = sphi 0, %s70
      %s73 = sphi 0, %s72
      %s87 = sphi 0, %s73
      %s91 = sphi 0, %s91
      %s93 = sphi 0, %s91
      %s94 = sphi 0, %s93
      %s108 = sphi 0, %s94
      %s114 = sphi 0, %s116
      %s117 = sphi 0, %s114
      %s118 = sphi 0, %s117
      %s134 = sphi 0, %s118
    $region4: #{projection_forward.1} parent=1 // loop_header_branch
      %18 = sbr.rel (%p16) target = $region8
    $region5: #{projection_forward.1} parent=1 // loop_body
      %s20 = ssub.s32 %s15, 1
      %s21 = ssub.s32 %s15, 2
      %s22 = sadd.s32 %s15, 1
      %s23 = ssub.s32 %s15, %s22
      %p24 = scmp.eq.s32.totalorder %s23, 0
      %s26 = sadd.s32 %s25, 1
      %s27 = scalar_select %p24, %s25, %s26
      %p30 = pneg %p24
      %p31 = scmp.eq.s32.totalorder %s15, 1
      %p32 = por %p30, %p31
      %p33 = scmp.ne.s32.totalorder %s25, %s28
      %p34 = scmp.eq.s32.totalorder %s15, 0
      %p35 = por %p33, %p34
      %p36 = scmp.ne.s32.totalorder %s25, %s28
      %p37 = scmp.eq.s32.totalorder %s20, 1
      %p38 = por %p36, %p37
      %p39 = scmp.ne.s32.totalorder %s28, %s29
      %p40 = scmp.eq.s32.totalorder %s20, 0
      %p41 = por %p39, %p40
      %p42 = scmp.ne.s32.totalorder %s28, %s29
      %p43 = scmp.eq.s32.totalorder %s21, 1
      %p44 = por %p42, %p43
      %p46 = scmp.ne.s32.totalorder %s29, %s45
      %p47 = scmp.eq.s32.totalorder %s21, 0
      %p48 = por %p46, %p47
      %s50 = sadd.s32 %s49, 1
      %p53 = scmp.eq.s32.totalorder %s15, 1
      %p54 = scmp.ne.s32.totalorder %s49, %s51
      %p55 = scmp.eq.s32.totalorder %s15, 0
      %p56 = por %p54, %p55
      %p57 = scmp.ne.s32.totalorder %s49, %s51
      %p58 = scmp.eq.s32.totalorder %s20, 1
      %p59 = por %p57, %p58
      %p60 = scmp.ne.s32.totalorder %s51, %s52
      %p61 = scmp.eq.s32.totalorder %s20, 0
      %p62 = por %p60, %p61
      %p63 = scmp.ne.s32.totalorder %s51, %s52
      %p64 = scmp.eq.s32.totalorder %s21, 1
      %p65 = por %p63, %p64
      %p67 = scmp.ne.s32.totalorder %s52, %s66
      %p68 = scmp.eq.s32.totalorder %s21, 0
      %p69 = por %p67, %p68
      %s71 = sadd.s32 %s70, 1
      %p74 = scmp.eq.s32.totalorder %s15, 1
      %p75 = scmp.ne.s32.totalorder %s70, %s72
      %p76 = scmp.eq.s32.totalorder %s15, 0
      %p77 = por %p75, %p76
      %p78 = scmp.ne.s32.totalorder %s70, %s72
      %p79 = scmp.eq.s32.totalorder %s20, 1
      %p80 = por %p78, %p79
      %p81 = scmp.ne.s32.totalorder %s72, %s73
      %p82 = scmp.eq.s32.totalorder %s20, 0
      %p83 = por %p81, %p82
      %p84 = scmp.ne.s32.totalorder %s72, %s73
      %p85 = scmp.eq.s32.totalorder %s21, 1
      %p86 = por %p84, %p85
      %p88 = scmp.ne.s32.totalorder %s73, %s87
      %p89 = scmp.eq.s32.totalorder %s21, 0
      %p90 = por %p88, %p89
      %s92 = sadd.s32 %s91, 1
      %p95 = scmp.eq.s32.totalorder %s15, 1
      %p96 = scmp.ne.s32.totalorder %s91, %s93
      %p97 = scmp.eq.s32.totalorder %s15, 0
      %p98 = por %p96, %p97
      %p99 = scmp.ne.s32.totalorder %s91, %s93
      %p100 = scmp.eq.s32.totalorder %s20, 1
      %p101 = por %p99, %p100
      %p102 = scmp.ne.s32.totalorder %s93, %s94
      %p103 = scmp.eq.s32.totalorder %s20, 0
      %p104 = por %p102, %p103
      %p105 = scmp.ne.s32.totalorder %s93, %s94
      %p106 = scmp.eq.s32.totalorder %s21, 1
      %p107 = por %p105, %p106
      %p109 = scmp.ne.s32.totalorder %s94, %s108
      %p110 = scmp.eq.s32.totalorder %s21, 0
      %p111 = por %p109, %p110
      %s112 = ssub.s32 %s15, %s22
      %p113 = scmp.eq.s32.totalorder %s112, 0
      %s115 = sadd.s32 %s114, 1
      %s116 = scalar_select %p113, %s114, %s115
      %p119 = pneg %p113
      %p120 = scmp.eq.s32.totalorder %s15, 1
      %p121 = por %p119, %p120
      %p122 = scmp.ne.s32.totalorder %s114, %s117
      %p123 = scmp.eq.s32.totalorder %s15, 0
      %p124 = por %p122, %p123
      %p125 = scmp.ne.s32.totalorder %s114, %s117
      %p126 = scmp.eq.s32.totalorder %s20, 1
      %p127 = por %p125, %p126
      %p128 = scmp.ne.s32.totalorder %s117, %s118
      %p129 = scmp.eq.s32.totalorder %s20, 0
      %p130 = por %p128, %p129
      %p131 = scmp.ne.s32.totalorder %s117, %s118
      %p132 = scmp.eq.s32.totalorder %s21, 1
      %p133 = por %p131, %p132
      %p135 = scmp.ne.s32.totalorder %s118, %s134
      %p136 = scmp.eq.s32.totalorder %s21, 0
      %p137 = por %p135, %p136
      %p138 = scmp.le.s32.totalorder 1, %s15
      %p139 = scmp.lt.s32.totalorder %s15, 3
      %p140 = pnand %p138, %p139
      %p141 = pneg %p140
      // Predicated region
      $region9: #{projection_forward.1} parent=5 // pred_check
        _
      $region10: #{projection_forward.1} parent=5 // pred_check_branch
        %143 = sbr.rel (%p140) target = $region12
      $region11: #{projection_forward.1} parent=5 // pred_region
        %s144 = ssub.s32 %s15, 1
        // Predicated region
        $region13: #{projection_forward.1} parent=11 // pred_check
          %p145 = pneg %p62
        $region14: #{projection_forward.1} parent=11 // pred_check_branch
          %147 = sbr.rel (%p145) target = $region16
        $region15: #{projection_forward.1} parent=11 // pred_region
          %s149 = ssub.s32 4096, 4096
          %150 = vsyncadd [#allocation6], %s149
          %s151 = sshll.u32 [#allocation5], 4
          %s152 = int_to_ptr.vmem [resolvable:$true] %s151
          %157 = dma.hbm_to_vmem [thread:$0]  %s1, 4096, %s152, [#allocation6], 1024, 1024, 64
        $region16: #{projection_forward.1} parent=11 // pred_fallthru
          _
        // Predicated region
        $region17: #{projection_forward.1} parent=11 // pred_check
          %p158 = pneg %p83
        $region18: #{projection_forward.1} parent=11 // pred_check_branch
          %160 = sbr.rel (%p158) target = $region20
        $region19: #{projection_forward.1} parent=11 // pred_region
          %s162 = ssub.s32 128, 128
          %163 = vsyncadd [#allocation6], %s162
          %s165 = sshll.u32 [#allocation7], 4
          %s166 = int_to_ptr.vmem [resolvable:$true] %s165
          %168 = dma.hbm_to_vmem [thread:$0]  %s2, 128, %s166, [#allocation6]
        $region20: #{projection_forward.1} parent=11 // pred_fallthru
          _
        // Predicated region
        $region21: #{projection_forward.1} parent=11 // pred_check
          %p169 = pneg %p104
        $region22: #{projection_forward.1} parent=11 // pred_check_branch
          %171 = sbr.rel (%p169) target = $region24
        $region23: #{projection_forward.1} parent=11 // pred_region
          %s173 = ssub.s32 51200, 51200
          %174 = vsyncadd [#allocation9], %s173
          %s175 = sshll.u32 [#allocation8], 4
          %s176 = int_to_ptr.vmem [resolvable:$true] %s175
          %181 = dma.hbm_to_vmem [thread:$0]  %s3, 51200, %s176, [#allocation9], 1024, 1024, 64
        $region24: #{projection_forward.1} parent=11 // pred_fallthru
          _
      $region12: #{projection_forward.1} parent=5 // pred_fallthru
        _
      %p182 = scmp.lt.s32.totalorder %s15, 2
      // Predicated region
      $region25: #{projection_forward.1} parent=5 // pred_check
        %p183 = pneg %p182
      $region26: #{projection_forward.1} parent=5 // pred_check_branch
        %185 = sbr.rel (%p183) target = $region28
      $region27: #{projection_forward.1} parent=5 // pred_region
        // Predicated region
        $region29: #{projection_forward.1} parent=27 // pred_check
          %p186 = pneg %p35
        $region30: #{projection_forward.1} parent=27 // pred_check_branch
          %188 = sbr.rel (%p186) target = $region32
        $region31: #{projection_forward.1} parent=27 // pred_region
          %s189 = sand.u32 %s25, 1
          %s190 = scalar_lea.sflag [#allocation4], %s189
          %s191 = sand.u32 %s25, 1
          %s192 = scalar_lea.vmem [#allocation3], %s191
          %s194 = ssub.s32 16, 16
          %195 = vsyncadd %s190, %s194
          %s196 = smul.addr %s15, 16
          %s197 = scalar_lea.hbm %s0, %s196
          %s199 = sshll.u32 %s192, 4
          %s200 = int_to_ptr.vmem [resolvable:$true] %s199
          %202 = dma.hbm_to_vmem [thread:$0]  %s197, 16, %s200, %s190
        $region32: #{projection_forward.1} parent=27 // pred_fallthru
          _
      $region28: #{projection_forward.1} parent=5 // pred_fallthru
        _
      %p203 = scmp.le.s32.totalorder 1, %s15
      %p204 = scmp.lt.s32.totalorder %s15, 3
      %p205 = pnand %p203, %p204
      %p206 = pneg %p205
      // Predicated region
      $region33: #{projection_forward.1} parent=5 // pred_check
        _
      $region34: #{projection_forward.1} parent=5 // pred_check_branch
        %208 = sbr.rel (%p205) target = $region36
      $region35: #{projection_forward.1} parent=5 // pred_region
        %s209 = ssub.s32 %s15, 1
        %s210 = sand.u32 %s28, 1
        %s211 = scalar_lea.sflag [#allocation4], %s210
        %s212 = sand.u32 %s28, 1
        %s213 = scalar_lea.vmem [#allocation3], %s212
        // Predicated region
        $region37: #{projection_forward.1} parent=35 // pred_check
          %p214 = pneg %p41
        $region38: #{projection_forward.1} parent=35 // pred_check_branch
          %216 = sbr.rel (%p214) target = $region40
        $region39: #{projection_forward.1} parent=35 // pred_region
          %217 = dma.done %s211, 16
        $region40: #{projection_forward.1} parent=35 // pred_fallthru
          _
        // Predicated region
        $region41: #{projection_forward.1} parent=35 // pred_check
          %p218 = pneg %p62
        $region42: #{projection_forward.1} parent=35 // pred_check_branch
          %220 = sbr.rel (%p218) target = $region44
        $region43: #{projection_forward.1} parent=35 // pred_region
          %221 = dma.done [#allocation6], 4096
        $region44: #{projection_forward.1} parent=35 // pred_fallthru
          _
        // Predicated region
        $region45: #{projection_forward.1} parent=35 // pred_check
          %p222 = pneg %p83
        $region46: #{projection_forward.1} parent=35 // pred_check_branch
          %224 = sbr.rel (%p222) target = $region48
        $region47: #{projection_forward.1} parent=35 // pred_region
          %225 = dma.done [#allocation6], 128
        $region48: #{projection_forward.1} parent=35 // pred_fallthru
          _
        // Predicated region
        $region49: #{projection_forward.1} parent=35 // pred_check
          %p226 = pneg %p104
        $region50: #{projection_forward.1} parent=35 // pred_check_branch
          %228 = sbr.rel (%p226) target = $region52
        $region51: #{projection_forward.1} parent=35 // pred_region
          %229 = dma.done [#allocation9], 51200
        $region52: #{projection_forward.1} parent=35 // pred_fallthru
          _
        %s230 = sand.u32 %s28, 1
        %s231 = scalar_lea.sflag [#allocation4], %s230
        %s232 = sand.u32 %s28, 1
        %s233 = scalar_lea.vmem [#allocation3], %s232
        %p234 = pneg %p41
        %p235 = pneg %p38
        %p236 = pneg %p62
        %p237 = pneg %p59
        %p238 = pneg %p83
        %p239 = pneg %p80
        %p240 = pneg %p104
        %p241 = pneg %p101
        %p242 = pneg %p130
        %p243 = pneg %p127
        %p244 = scmp.lt.s32.totalorder %s20, 1
        %s245 = scalar_select %p244, %s20, 1
        %s246 = smul.addr %s245, 16
        %s247 = smul.addr %s246, 8
        %s248 = scalar_lea.vmem %s4, %s247
        %p249 = scmp.lt.s32.totalorder %s20, 1
        %s250 = scalar_select %p249, %s20, 1
        %s251 = smul.addr %s250, 16
        %s252 = smul.addr %s251, 8
        %s253 = scalar_lea.vmem %s4, %s252
        %v254 = vld [vmem:[%s213] sm:$0x1]
        %v255 = vld [vmem:[#allocation5] sm:$0xff]
        %v256 = vld [vmem:[#allocation5 + $0x8] sm:$0xff]
        %v257 = vld [vmem:[#allocation5 + $0x10] sm:$0xff]
        %v258 = vld [vmem:[#allocation5 + $0x18] sm:$0xff]
        %v259 = vld [vmem:[#allocation5 + $0x20] sm:$0xff]
        %v260 = vld [vmem:[#allocation5 + $0x28] sm:$0xff]
        %v261 = vld [vmem:[#allocation5 + $0x30] sm:$0xff]
        %v262 = vld [vmem:[#allocation5 + $0x38] sm:$0xff]
        %v263 = vld [vmem:[#allocation5 + $0x40] sm:$0xff]
        %v264 = vld [vmem:[#allocation5 + $0x48] sm:$0xff]
        %v265 = vld [vmem:[#allocation5 + $0x50] sm:$0xff]
        %v266 = vld [vmem:[#allocation5 + $0x58] sm:$0xff]
        %v267 = vld [vmem:[#allocation5 + $0x60] sm:$0xff]
        %v268 = vld [vmem:[#allocation5 + $0x68] sm:$0xff]
        %v269 = vld [vmem:[#allocation5 + $0x70] sm:$0xff]
        %v270 = vld [vmem:[#allocation5 + $0x78] sm:$0xff]
        %v271 = vld [vmem:[#allocation5 + $0x80] sm:$0xff]
        %v272 = vld [vmem:[#allocation5 + $0x88] sm:$0xff]
        %v273 = vld [vmem:[#allocation5 + $0x90] sm:$0xff]
        %v274 = vld [vmem:[#allocation5 + $0x98] sm:$0xff]
        %v275 = vld [vmem:[#allocation5 + $0xa0] sm:$0xff]
        %v276 = vld [vmem:[#allocation5 + $0xa8] sm:$0xff]
        %v277 = vld [vmem:[#allocation5 + $0xb0] sm:$0xff]
        %v278 = vld [vmem:[#allocation5 + $0xb8] sm:$0xff]
        %v279 = vld [vmem:[#allocation5 + $0xc0] sm:$0xff]
        %v280 = vld [vmem:[#allocation5 + $0xc8] sm:$0xff]
        %v281 = vld [vmem:[#allocation5 + $0xd0] sm:$0xff]
        %v282 = vld [vmem:[#allocation5 + $0xd8] sm:$0xff]
        %v283 = vld [vmem:[#allocation5 + $0xe0] sm:$0xff]
        %v284 = vld [vmem:[#allocation5 + $0xe8] sm:$0xff]
        %v285 = vld [vmem:[#allocation5 + $0xf0] sm:$0xff]
        %v286 = vld [vmem:[#allocation5 + $0xf8] sm:$0xff]
        %v287 = vld [vmem:[#allocation7] sm:$0xff]
        %v289 = vlaneseq
        %v290 = vshrl.u32 %v289, 7
        %v291 = vsub.s32 0, %v290
        %v292 = vrot.slane %v287, %v291
        %v293 = vlaneseq
        %v294 = vshrl.u32 %v293, 7
        %v295 = vsub.s32 1, %v294
        %v296 = vrot.slane %v287, %v295
        %v297 = vlaneseq
        %v298 = vshrl.u32 %v297, 7
        %v299 = vsub.s32 2, %v298
        %v300 = vrot.slane %v287, %v299
        %v301 = vlaneseq
        %v302 = vshrl.u32 %v301, 7
        %v303 = vsub.s32 3, %v302
        %v304 = vrot.slane %v287, %v303
        %v305 = vlaneseq
        %v306 = vshrl.u32 %v305, 7
        %v307 = vsub.s32 4, %v306
        %v308 = vrot.slane %v287, %v307
        %v309 = vlaneseq
        %v310 = vshrl.u32 %v309, 7
        %v311 = vsub.s32 5, %v310
        %v312 = vrot.slane %v287, %v311
        %v313 = vlaneseq
        %v314 = vshrl.u32 %v313, 7
        %v315 = vsub.s32 6, %v314
        %v316 = vrot.slane %v287, %v315
        %v317 = vlaneseq
        %v318 = vshrl.u32 %v317, 7
        %v319 = vsub.s32 7, %v318
        %v320 = vrot.slane %v287, %v319
        %vm329 = vcmask 261120
        %v331 = vsel %vm329, %v254, 0
        %333 = vmatprep.subr.mxu0 0.0
        %334 = vmatpush1.msra.mxu0 0.0
        %335 = vmatprep.subr.mxu0 0.0
        %336 = vmatpush1.msra.mxu0 0.0
        %337 = vmatprep.subr.mxu0 0.0
        %338 = vmatpush1.msra.mxu0 0.0
        %339 = vmatprep.subr.mxu0 0.0
        %340 = vmatpush1.msra.mxu0 0.0
        %341 = vmatprep.subr.mxu0 0.0
        %342 = vmatpush1.msra.mxu0 0.0
        %343 = vmatprep.subr.mxu0 0.0
        %344 = vmatpush1.msra.mxu0 0.0
        %345 = vmatprep.subr.mxu0 0.0
        %346 = vmatpush1.msra.mxu0 0.0
        %347 = vmatprep.subr.mxu0 0.0
        %348 = vmatpush1.msra.mxu0 0.0
        %349 = vmatprep.subr.mxu0 0.0
        %350 = vmatpush1.msra.mxu0 0.0
        %351 = vmatprep.subr.mxu0 0.0
        %352 = vmatpush1.msra.mxu0 0.0
        %353 = vmatprep.subr.mxu0 0.0
        %354 = vmatpush1.msra.mxu0 0.0
        %355 = vmatprep.subr.mxu0 0.0
        %356 = vmatpush1.msra.mxu0 0.0
        %357 = vmatprep.subr.mxu0 %v280
        %358 = vmatpush1.msra.mxu0 %v279
        %359 = vmatprep.subr.mxu0 %v272
        %360 = vmatpush1.msra.mxu0 %v271
        %361 = vmatprep.subr.mxu0 %v264
        %362 = vmatpush1.msra.mxu0 %v263
        %363 = vmatprep.subr.mxu0 %v256
        %364 = vmatpush1.msra.mxu0 %v255
        %365 = vmatprep.subr.mxu0 0.0
        %366 = vmatpush2.msra.mxu0 0.0
        %367 = vmatprep.subr.mxu0 0.0
        %368 = vmatpush2.msra.mxu0 0.0
        %369 = vmatprep.subr.mxu0 0.0
        %370 = vmatpush2.msra.mxu0 0.0
        %371 = vmatprep.subr.mxu0 0.0
        %372 = vmatpush2.msra.mxu0 0.0
        %373 = vmatprep.subr.mxu0 0.0
        %374 = vmatpush2.msra.mxu0 0.0
        %375 = vmatprep.subr.mxu0 0.0
        %376 = vmatpush2.msra.mxu0 0.0
        %377 = vmatprep.subr.mxu0 0.0
        %378 = vmatpush2.msra.mxu0 0.0
        %379 = vmatprep.subr.mxu0 0.0
        %380 = vmatpush2.msra.mxu0 0.0
        %381 = vmatprep.subr.mxu0 0.0
        %382 = vmatpush2.msra.mxu0 0.0
        %383 = vmatprep.subr.mxu0 0.0
        %384 = vmatpush2.msra.mxu0 0.0
        %385 = vmatprep.subr.mxu0 0.0
        %386 = vmatpush2.msra.mxu0 0.0
        %387 = vmatprep.subr.mxu0 0.0
        %388 = vmatpush2.msra.mxu0 0.0
        %389 = vmatprep.subr.mxu0 0.0
        %390 = vmatpush2.msra.mxu0 0.0
        %391 = vmatprep.subr.mxu0 0.0
        %392 = vmatpush2.msra.mxu0 0.0
        %393 = vmatprep.subr.mxu0 0.0
        %394 = vmatpush2.msra.mxu0 0.0
        %395 = vmatprep.subr.mxu0 0.0
        %396 = vmatpush2.msra.mxu0 0.0
        %397 = vmatprep.mubr.f32.mxu0 0.0
        %398 = vmatmul.mubr.f32.gmra.mxu0 %v331
        %v399 = vpop.f32.mrf.mxu0
        %v400 = vadd.f32 %v292, %v399
        %v401 = vpop.f32.mrf.mxu0
        %v402 = vadd.f32 %v296, %v401
        %403 = vdwg.mxu0
        %404 = vmatprep.subr.mxu0 0.0
        %405 = vmatpush1.msra.mxu0 0.0
        %406 = vmatprep.subr.mxu0 0.0
        %407 = vmatpush1.msra.mxu0 0.0
        %408 = vmatprep.subr.mxu0 0.0
        %409 = vmatpush1.msra.mxu0 0.0
        %410 = vmatprep.subr.mxu0 0.0
        %411 = vmatpush1.msra.mxu0 0.0
        %412 = vmatprep.subr.mxu0 0.0
        %413 = vmatpush1.msra.mxu0 0.0
        %414 = vmatprep.subr.mxu0 0.0
        %415 = vmatpush1.msra.mxu0 0.0
        %416 = vmatprep.subr.mxu0 0.0
        %417 = vmatpush1.msra.mxu0 0.0
        %418 = vmatprep.subr.mxu0 0.0
        %419 = vmatpush1.msra.mxu0 0.0
        %420 = vmatprep.subr.mxu0 0.0
        %421 = vmatpush1.msra.mxu0 0.0
        %422 = vmatprep.subr.mxu0 0.0
        %423 = vmatpush1.msra.mxu0 0.0
        %424 = vmatprep.subr.mxu0 0.0
        %425 = vmatpush1.msra.mxu0 0.0
        %426 = vmatprep.subr.mxu0 0.0
        %427 = vmatpush1.msra.mxu0 0.0
        %428 = vmatprep.subr.mxu0 %v282
        %429 = vmatpush1.msra.mxu0 %v281
        %430 = vmatprep.subr.mxu0 %v274
        %431 = vmatpush1.msra.mxu0 %v273
        %432 = vmatprep.subr.mxu0 %v266
        %433 = vmatpush1.msra.mxu0 %v265
        %434 = vmatprep.subr.mxu0 %v258
        %435 = vmatpush1.msra.mxu0 %v257
        %436 = vmatprep.subr.mxu0 0.0
        %437 = vmatpush2.msra.mxu0 0.0
        %438 = vmatprep.subr.mxu0 0.0
        %439 = vmatpush2.msra.mxu0 0.0
        %440 = vmatprep.subr.mxu0 0.0
        %441 = vmatpush2.msra.mxu0 0.0
        %442 = vmatprep.subr.mxu0 0.0
        %443 = vmatpush2.msra.mxu0 0.0
        %444 = vmatprep.subr.mxu0 0.0
        %445 = vmatpush2.msra.mxu0 0.0
        %446 = vmatprep.subr.mxu0 0.0
        %447 = vmatpush2.msra.mxu0 0.0
        %448 = vmatprep.subr.mxu0 0.0
        %449 = vmatpush2.msra.mxu0 0.0
        %450 = vmatprep.subr.mxu0 0.0
        %451 = vmatpush2.msra.mxu0 0.0
        %452 = vmatprep.subr.mxu0 0.0
        %453 = vmatpush2.msra.mxu0 0.0
        %454 = vmatprep.subr.mxu0 0.0
        %455 = vmatpush2.msra.mxu0 0.0
        %456 = vmatprep.subr.mxu0 0.0
        %457 = vmatpush2.msra.mxu0 0.0
        %458 = vmatprep.subr.mxu0 0.0
        %459 = vmatpush2.msra.mxu0 0.0
        %460 = vmatprep.subr.mxu0 0.0
        %461 = vmatpush2.msra.mxu0 0.0
        %462 = vmatprep.subr.mxu0 0.0
        %463 = vmatpush2.msra.mxu0 0.0
        %464 = vmatprep.subr.mxu0 0.0
        %465 = vmatpush2.msra.mxu0 0.0
        %466 = vmatprep.subr.mxu0 0.0
        %467 = vmatpush2.msra.mxu0 0.0
        %468 = vmatprep.mubr.f32.mxu0 0.0
        %469 = vmatmul.mubr.f32.gmra.mxu0 %v331
        %v470 = vpop.f32.mrf.mxu0
        %v471 = vadd.f32 %v300, %v470
        %v472 = vpop.f32.mrf.mxu0
        %v473 = vadd.f32 %v304, %v472
        %474 = vdwg.mxu0
        %475 = vmatprep.subr.mxu0 0.0
        %476 = vmatpush1.msra.mxu0 0.0
        %477 = vmatprep.subr.mxu0 0.0
        %478 = vmatpush1.msra.mxu0 0.0
        %479 = vmatprep.subr.mxu0 0.0
        %480 = vmatpush1.msra.mxu0 0.0
        %481 = vmatprep.subr.mxu0 0.0
        %482 = vmatpush1.msra.mxu0 0.0
        %483 = vmatprep.subr.mxu0 0.0
        %484 = vmatpush1.msra.mxu0 0.0
        %485 = vmatprep.subr.mxu0 0.0
        %486 = vmatpush1.msra.mxu0 0.0
        %487 = vmatprep.subr.mxu0 0.0
        %488 = vmatpush1.msra.mxu0 0.0
        %489 = vmatprep.subr.mxu0 0.0
        %490 = vmatpush1.msra.mxu0 0.0
        %491 = vmatprep.subr.mxu0 0.0
        %492 = vmatpush1.msra.mxu0 0.0
        %493 = vmatprep.subr.mxu0 0.0
        %494 = vmatpush1.msra.mxu0 0.0
        %495 = vmatprep.subr.mxu0 0.0
        %496 = vmatpush1.msra.mxu0 0.0
        %497 = vmatprep.subr.mxu0 0.0
        %498 = vmatpush1.msra.mxu0 0.0
        %499 = vmatprep.subr.mxu0 %v284
        %500 = vmatpush1.msra.mxu0 %v283
        %501 = vmatprep.subr.mxu0 %v276
        %502 = vmatpush1.msra.mxu0 %v275
        %503 = vmatprep.subr.mxu0 %v268
        %504 = vmatpush1.msra.mxu0 %v267
        %505 = vmatprep.subr.mxu0 %v260
        %506 = vmatpush1.msra.mxu0 %v259
        %507 = vmatprep.subr.mxu0 0.0
        %508 = vmatpush2.msra.mxu0 0.0
        %509 = vmatprep.subr.mxu0 0.0
        %510 = vmatpush2.msra.mxu0 0.0
        %511 = vmatprep.subr.mxu0 0.0
        %512 = vmatpush2.msra.mxu0 0.0
        %513 = vmatprep.subr.mxu0 0.0
        %514 = vmatpush2.msra.mxu0 0.0
        %515 = vmatprep.subr.mxu0 0.0
        %516 = vmatpush2.msra.mxu0 0.0
        %517 = vmatprep.subr.mxu0 0.0
        %518 = vmatpush2.msra.mxu0 0.0
        %519 = vmatprep.subr.mxu0 0.0
        %520 = vmatpush2.msra.mxu0 0.0
        %521 = vmatprep.subr.mxu0 0.0
        %522 = vmatpush2.msra.mxu0 0.0
        %523 = vmatprep.subr.mxu0 0.0
        %524 = vmatpush2.msra.mxu0 0.0
        %525 = vmatprep.subr.mxu0 0.0
        %526 = vmatpush2.msra.mxu0 0.0
        %527 = vmatprep.subr.mxu0 0.0
        %528 = vmatpush2.msra.mxu0 0.0
        %529 = vmatprep.subr.mxu0 0.0
        %530 = vmatpush2.msra.mxu0 0.0
        %531 = vmatprep.subr.mxu0 0.0
        %532 = vmatpush2.msra.mxu0 0.0
        %533 = vmatprep.subr.mxu0 0.0
        %534 = vmatpush2.msra.mxu0 0.0
        %535 = vmatprep.subr.mxu0 0.0
        %536 = vmatpush2.msra.mxu0 0.0
        %537 = vmatprep.subr.mxu0 0.0
        %538 = vmatpush2.msra.mxu0 0.0
        %539 = vmatprep.mubr.f32.mxu0 0.0
        %540 = vmatmul.mubr.f32.gmra.mxu0 %v331
        %v541 = vpop.f32.mrf.mxu0
        %v542 = vadd.f32 %v308, %v541
        %v543 = vpop.f32.mrf.mxu0
        %v544 = vadd.f32 %v312, %v543
        %545 = vdwg.mxu0
        %546 = vmatprep.subr.mxu0 0.0
        %547 = vmatpush1.msra.mxu0 0.0
        %548 = vmatprep.subr.mxu0 0.0
        %549 = vmatpush1.msra.mxu0 0.0
        %550 = vmatprep.subr.mxu0 0.0
        %551 = vmatpush1.msra.mxu0 0.0
        %552 = vmatprep.subr.mxu0 0.0
        %553 = vmatpush1.msra.mxu0 0.0
        %554 = vmatprep.subr.mxu0 0.0
        %555 = vmatpush1.msra.mxu0 0.0
        %556 = vmatprep.subr.mxu0 0.0
        %557 = vmatpush1.msra.mxu0 0.0
        %558 = vmatprep.subr.mxu0 0.0
        %559 = vmatpush1.msra.mxu0 0.0
        %560 = vmatprep.subr.mxu0 0.0
        %561 = vmatpush1.msra.mxu0 0.0
        %562 = vmatprep.subr.mxu0 0.0
        %563 = vmatpush1.msra.mxu0 0.0
        %564 = vmatprep.subr.mxu0 0.0
        %565 = vmatpush1.msra.mxu0 0.0
        %566 = vmatprep.subr.mxu0 0.0
        %567 = vmatpush1.msra.mxu0 0.0
        %568 = vmatprep.subr.mxu0 0.0
        %569 = vmatpush1.msra.mxu0 0.0
        %570 = vmatprep.subr.mxu0 %v286
        %571 = vmatpush1.msra.mxu0 %v285
        %572 = vmatprep.subr.mxu0 %v278
        %573 = vmatpush1.msra.mxu0 %v277
        %574 = vmatprep.subr.mxu0 %v270
        %575 = vmatpush1.msra.mxu0 %v269
        %576 = vmatprep.subr.mxu0 %v262
        %577 = vmatpush1.msra.mxu0 %v261
        %578 = vmatprep.subr.mxu0 0.0
        %579 = vmatpush2.msra.mxu0 0.0
        %580 = vmatprep.subr.mxu0 0.0
        %581 = vmatpush2.msra.mxu0 0.0
        %582 = vmatprep.subr.mxu0 0.0
        %583 = vmatpush2.msra.mxu0 0.0
        %584 = vmatprep.subr.mxu0 0.0
        %585 = vmatpush2.msra.mxu0 0.0
        %586 = vmatprep.subr.mxu0 0.0
        %587 = vmatpush2.msra.mxu0 0.0
        %588 = vmatprep.subr.mxu0 0.0
        %589 = vmatpush2.msra.mxu0 0.0
        %590 = vmatprep.subr.mxu0 0.0
        %591 = vmatpush2.msra.mxu0 0.0
        %592 = vmatprep.subr.mxu0 0.0
        %593 = vmatpush2.msra.mxu0 0.0
        %594 = vmatprep.subr.mxu0 0.0
        %595 = vmatpush2.msra.mxu0 0.0
        %596 = vmatprep.subr.mxu0 0.0
        %597 = vmatpush2.msra.mxu0 0.0
        %598 = vmatprep.subr.mxu0 0.0
        %599 = vmatpush2.msra.mxu0 0.0
        %600 = vmatprep.subr.mxu0 0.0
        %601 = vmatpush2.msra.mxu0 0.0
        %602 = vmatprep.subr.mxu0 0.0
        %603 = vmatpush2.msra.mxu0 0.0
        %604 = vmatprep.subr.mxu0 0.0
        %605 = vmatpush2.msra.mxu0 0.0
        %606 = vmatprep.subr.mxu0 0.0
        %607 = vmatpush2.msra.mxu0 0.0
        %608 = vmatprep.subr.mxu0 0.0
        %609 = vmatpush2.msra.mxu0 0.0
        %610 = vmatprep.mubr.f32.mxu0 0.0
        %611 = vmatmul.mubr.f32.gmra.mxu0 %v331
        %v612 = vpop.f32.mrf.mxu0
        %v613 = vadd.f32 %v316, %v612
        %v614 = vpop.f32.mrf.mxu0
        %v615 = vadd.f32 %v320, %v614
        %616 = vdwg.mxu0
        %v617 = vmul.f32 %v400, 0.5
        %v618 = vmul.f32 %v402, 0.5
        %v619 = vmul.f32 %v471, 0.5
        %v620 = vmul.f32 %v473, 0.5
        %v621 = vmul.f32 %v542, 0.5
        %v622 = vmul.f32 %v544, 0.5
        %v623 = vmul.f32 %v613, 0.5
        %v624 = vmul.f32 %v615, 0.5
        %v625 = vmul.f32 %v400, %v400
        %v626 = vmul.f32 %v402, %v402
        %v627 = vmul.f32 %v471, %v471
        %v628 = vmul.f32 %v473, %v473
        %v629 = vmul.f32 %v542, %v542
        %v630 = vmul.f32 %v544, %v544
        %v631 = vmul.f32 %v613, %v613
        %v632 = vmul.f32 %v615, %v615
        %v633 = vmul.f32 %v625, %v400
        %v634 = vmul.f32 %v626, %v402
        %v635 = vmul.f32 %v627, %v471
        %v636 = vmul.f32 %v628, %v473
        %v637 = vmul.f32 %v629, %v542
        %v638 = vmul.f32 %v630, %v544
        %v639 = vmul.f32 %v631, %v613
        %v640 = vmul.f32 %v632, %v615
        %v641 = vmul.f32 %v633, 0.044715
        %v642 = vmul.f32 %v634, 0.044715
        %v643 = vmul.f32 %v635, 0.044715
        %v644 = vmul.f32 %v636, 0.044715
        %v645 = vmul.f32 %v637, 0.044715
        %v646 = vmul.f32 %v638, 0.044715
        %v647 = vmul.f32 %v639, 0.044715
        %v648 = vmul.f32 %v640, 0.044715
        %v649 = vadd.f32 %v400, %v641
        %v650 = vadd.f32 %v402, %v642
        %v651 = vadd.f32 %v471, %v643
        %v652 = vadd.f32 %v473, %v644
        %v653 = vadd.f32 %v542, %v645
        %v654 = vadd.f32 %v544, %v646
        %v655 = vadd.f32 %v613, %v647
        %v656 = vadd.f32 %v615, %v648
        %v657 = vmul.f32 %v649, 0.7978846
        %v658 = vmul.f32 %v650, 0.7978846
        %v659 = vmul.f32 %v651, 0.7978846
        %v660 = vmul.f32 %v652, 0.7978846
        %v661 = vmul.f32 %v653, 0.7978846
        %v662 = vmul.f32 %v654, 0.7978846
        %v663 = vmul.f32 %v655, 0.7978846
        %v664 = vmul.f32 %v656, 0.7978846
        %v665 = vtanh.pop %v657
        %v666 = vtanh.pop %v658
        %v667 = vtanh.pop %v659
        %v668 = vtanh.pop %v660
        %v669 = vtanh.pop %v661
        %v670 = vtanh.pop %v662
        %v671 = vtanh.pop %v663
        %v672 = vtanh.pop %v664
        %v673 = vadd.f32 %v665, 1.0
        %v674 = vadd.f32 %v666, 1.0
        %v675 = vadd.f32 %v667, 1.0
        %v676 = vadd.f32 %v668, 1.0
        %v677 = vadd.f32 %v669, 1.0
        %v678 = vadd.f32 %v670, 1.0
        %v679 = vadd.f32 %v671, 1.0
        %v680 = vadd.f32 %v672, 1.0
        %v681 = vmul.f32 %v617, %v673
        %v682 = vmul.f32 %v618, %v674
        %v683 = vmul.f32 %v619, %v675
        %v684 = vmul.f32 %v620, %v676
        %v685 = vmul.f32 %v621, %v677
        %v686 = vmul.f32 %v622, %v678
        %v687 = vmul.f32 %v623, %v679
        %v688 = vmul.f32 %v624, %v680
        %vm689 = vcmask 654336
        %690 = vst.msk [vmem:[#allocation2] sm:$0xff] %vm689, 0.0
        %691 = vst.msk [vmem:[#allocation2 + $0x8] sm:$0xff] %vm689, 0.0
        %vm692 = vcmask 650240
        %693 = vst.msk [vmem:[#allocation2 + $0x10] sm:$0xf] %vm692, 0.0
        %695 = vrot.lane.b32.xlu0 %v681, 8
        %v696 = vpop.permute.xlu0 %695
        %vm698 = vcmask 581696
        %699 = vst.msk [vmem:[#allocation2 + $0x2] sm:$0x1] %vm698, %v696
        %700 = vrot.lane.b32.xlu0 %v681, 72
        %v701 = vpop.permute.xlu0 %700
        %703 = vst.msk [vmem:[#allocation2 + $0x3] sm:$0x1] %vm698, %v701
        %705 = vrot.lane.b32.xlu0 %v682, 8
        %v706 = vpop.permute.xlu0 %705
        %708 = vst.msk [vmem:[#allocation2 + $0x4] sm:$0x1] %vm698, %v706
        %709 = vrot.lane.b32.xlu0 %v682, 72
        %v710 = vpop.permute.xlu0 %709
        %712 = vst.msk [vmem:[#allocation2 + $0x5] sm:$0x1] %vm698, %v710
        %714 = vrot.lane.b32.xlu0 %v683, 8
        %v715 = vpop.permute.xlu0 %714
        %717 = vst.msk [vmem:[#allocation2 + $0x6] sm:$0x1] %vm698, %v715
        %718 = vrot.lane.b32.xlu0 %v683, 72
        %v719 = vpop.permute.xlu0 %718
        %721 = vst.msk [vmem:[#allocation2 + $0x7] sm:$0x1] %vm698, %v719
        %723 = vrot.lane.b32.xlu0 %v684, 8
        %v724 = vpop.permute.xlu0 %723
        %726 = vst.msk [vmem:[#allocation2 + $0x8] sm:$0x1] %vm698, %v724
        %727 = vrot.lane.b32.xlu0 %v684, 72
        %v728 = vpop.permute.xlu0 %727
        %730 = vst.msk [vmem:[#allocation2 + $0x9] sm:$0x1] %vm698, %v728
        %732 = vrot.lane.b32.xlu0 %v685, 8
        %v733 = vpop.permute.xlu0 %732
        %735 = vst.msk [vmem:[#allocation2 + $0xa] sm:$0x1] %vm698, %v733
        %736 = vrot.lane.b32.xlu0 %v685, 72
        %v737 = vpop.permute.xlu0 %736
        %739 = vst.msk [vmem:[#allocation2 + $0xb] sm:$0x1] %vm698, %v737
        %741 = vrot.lane.b32.xlu0 %v686, 8
        %v742 = vpop.permute.xlu0 %741
        %744 = vst.msk [vmem:[#allocation2 + $0xc] sm:$0x1] %vm698, %v742
        %745 = vrot.lane.b32.xlu0 %v686, 72
        %v746 = vpop.permute.xlu0 %745
        %748 = vst.msk [vmem:[#allocation2 + $0xd] sm:$0x1] %vm698, %v746
        %750 = vrot.lane.b32.xlu0 %v687, 8
        %v751 = vpop.permute.xlu0 %750
        %753 = vst.msk [vmem:[#allocation2 + $0xe] sm:$0x1] %vm698, %v751
        %754 = vrot.lane.b32.xlu0 %v687, 72
        %v755 = vpop.permute.xlu0 %754
        %757 = vst.msk [vmem:[#allocation2 + $0xf] sm:$0x1] %vm698, %v755
        %759 = vrot.lane.b32.xlu0 %v688, 8
        %v760 = vpop.permute.xlu0 %759
        %762 = vst.msk [vmem:[#allocation2 + $0x10] sm:$0x1] %vm698, %v760
        %763 = vrot.lane.b32.xlu0 %v688, 72
        %v764 = vpop.permute.xlu0 %763
        %766 = vst.msk [vmem:[#allocation2 + $0x11] sm:$0x1] %vm698, %v764
        %v767 = vld [vmem:[#allocation2] sm:$0xff]
        %v768 = vld [vmem:[#allocation2 + $0x8] sm:$0xff]
        %v769 = vld [vmem:[#allocation8] sm:$0xff]
        %v770 = vld [vmem:[#allocation8 + $0x8] sm:$0xff]
        %v771 = vld [vmem:[#allocation8 + $0x10] sm:$0xff]
        %v772 = vld [vmem:[#allocation8 + $0x18] sm:$0xff]
        %v773 = vld [vmem:[#allocation8 + $0x20] sm:$0xff]
        %v774 = vld [vmem:[#allocation8 + $0x28] sm:$0xff]
        %v775 = vld [vmem:[#allocation8 + $0x30] sm:$0xff]
        %v776 = vld [vmem:[#allocation8 + $0x38] sm:$0xff]
        %v777 = vld [vmem:[#allocation8 + $0x40] sm:$0xff]
        %v778 = vld [vmem:[#allocation8 + $0x48] sm:$0xff]
        %v779 = vld [vmem:[#allocation8 + $0x50] sm:$0xff]
        %v780 = vld [vmem:[#allocation8 + $0x58] sm:$0xff]
        %v781 = vld [vmem:[#allocation8 + $0x60] sm:$0xff]
        %v782 = vld [vmem:[#allocation8 + $0x68] sm:$0xff]
        %v783 = vld [vmem:[#allocation8 + $0x70] sm:$0xff]
        %v784 = vld [vmem:[#allocation8 + $0x78] sm:$0xff]
        %v785 = vld [vmem:[#allocation8 + $0x80] sm:$0xff]
        %v786 = vld [vmem:[#allocation8 + $0x88] sm:$0xff]
        %v787 = vld [vmem:[#allocation8 + $0x90] sm:$0xff]
        %v788 = vld [vmem:[#allocation8 + $0x98] sm:$0xff]
        %v789 = vld [vmem:[#allocation8 + $0xa0] sm:$0xff]
        %v790 = vld [vmem:[#allocation8 + $0xa8] sm:$0xff]
        %v791 = vld [vmem:[#allocation8 + $0xb0] sm:$0xff]
        %v792 = vld [vmem:[#allocation8 + $0xb8] sm:$0xff]
        %v793 = vld [vmem:[#allocation8 + $0xc0] sm:$0xff]
        %v794 = vld [vmem:[#allocation8 + $0xc8] sm:$0xff]
        %v795 = vld [vmem:[#allocation8 + $0xd0] sm:$0xff]
        %v796 = vld [vmem:[#allocation8 + $0xd8] sm:$0xff]
        %v797 = vld [vmem:[#allocation8 + $0xe0] sm:$0xff]
        %v798 = vld [vmem:[#allocation8 + $0xe8] sm:$0xff]
        %v799 = vld [vmem:[#allocation8 + $0xf0] sm:$0xff]
        %v800 = vld [vmem:[#allocation8 + $0xf8] sm:$0xff]
        %v801 = vld [vmem:[#allocation8 + $0x100] sm:$0xff]
        %v802 = vld [vmem:[#allocation8 + $0x108] sm:$0xff]
        %v803 = vld [vmem:[#allocation8 + $0x110] sm:$0xff]
        %v804 = vld [vmem:[#allocation8 + $0x118] sm:$0xff]
        %v805 = vld [vmem:[#allocation8 + $0x120] sm:$0xff]
        %v806 = vld [vmem:[#allocation8 + $0x128] sm:$0xff]
        %v807 = vld [vmem:[#allocation8 + $0x130] sm:$0xff]
        %v808 = vld [vmem:[#allocation8 + $0x138] sm:$0xff]
        %v809 = vld [vmem:[#allocation8 + $0x140] sm:$0xff]
        %v810 = vld [vmem:[#allocation8 + $0x148] sm:$0xff]
        %v811 = vld [vmem:[#allocation8 + $0x150] sm:$0xff]
        %v812 = vld [vmem:[#allocation8 + $0x158] sm:$0xff]
        %v813 = vld [vmem:[#allocation8 + $0x160] sm:$0xff]
        %v814 = vld [vmem:[#allocation8 + $0x168] sm:$0xff]
        %v815 = vld [vmem:[#allocation8 + $0x170] sm:$0xff]
        %v816 = vld [vmem:[#allocation8 + $0x178] sm:$0xff]
        %v817 = vld [vmem:[#allocation8 + $0x180] sm:$0xff]
        %v818 = vld [vmem:[#allocation8 + $0x188] sm:$0xff]
        %v819 = vld [vmem:[#allocation8 + $0x190] sm:$0xff]
        %v820 = vld [vmem:[#allocation8 + $0x198] sm:$0xff]
        %v821 = vld [vmem:[#allocation8 + $0x1a0] sm:$0xff]
        %v822 = vld [vmem:[#allocation8 + $0x1a8] sm:$0xff]
        %v823 = vld [vmem:[#allocation8 + $0x1b0] sm:$0xff]
        %v824 = vld [vmem:[#allocation8 + $0x1b8] sm:$0xff]
        %v825 = vld [vmem:[#allocation8 + $0x1c0] sm:$0xff]
        %v826 = vld [vmem:[#allocation8 + $0x1c8] sm:$0xff]
        %v827 = vld [vmem:[#allocation8 + $0x1d0] sm:$0xff]
        %v828 = vld [vmem:[#allocation8 + $0x1d8] sm:$0xff]
        %v829 = vld [vmem:[#allocation8 + $0x1e0] sm:$0xff]
        %v830 = vld [vmem:[#allocation8 + $0x1e8] sm:$0xff]
        %v831 = vld [vmem:[#allocation8 + $0x1f0] sm:$0xff]
        %v832 = vld [vmem:[#allocation8 + $0x1f8] sm:$0xff]
        %v833 = vld [vmem:[#allocation8 + $0x200] sm:$0xff]
        %v834 = vld [vmem:[#allocation8 + $0x208] sm:$0xff]
        %v835 = vld [vmem:[#allocation8 + $0x210] sm:$0xff]
        %v836 = vld [vmem:[#allocation8 + $0x218] sm:$0xff]
        %v837 = vld [vmem:[#allocation8 + $0x220] sm:$0xff]
        %v838 = vld [vmem:[#allocation8 + $0x228] sm:$0xff]
        %v839 = vld [vmem:[#allocation8 + $0x230] sm:$0xff]
        %v840 = vld [vmem:[#allocation8 + $0x238] sm:$0xff]
        %v841 = vld [vmem:[#allocation8 + $0x240] sm:$0xff]
        %v842 = vld [vmem:[#allocation8 + $0x248] sm:$0xff]
        %v843 = vld [vmem:[#allocation8 + $0x250] sm:$0xff]
        %v844 = vld [vmem:[#allocation8 + $0x258] sm:$0xff]
        %v845 = vld [vmem:[#allocation8 + $0x260] sm:$0xff]
        %v846 = vld [vmem:[#allocation8 + $0x268] sm:$0xff]
        %v847 = vld [vmem:[#allocation8 + $0x270] sm:$0xff]
        %v848 = vld [vmem:[#allocation8 + $0x278] sm:$0xff]
        %v849 = vld [vmem:[#allocation2 + $0x1] sm:$0xff]
        %v850 = vld [vmem:[#allocation2 + $0x9] sm:$0xff]
        %s851 = scalar_lea.vmem [#allocation8], 640
        %v852 = vld [vmem:[%s851] sm:$0xff]
        %v853 = vld [vmem:[%s851 + $0x8] sm:$0xff]
        %v854 = vld [vmem:[%s851 + $0x10] sm:$0xff]
        %v855 = vld [vmem:[%s851 + $0x18] sm:$0xff]
        %v856 = vld [vmem:[%s851 + $0x20] sm:$0xff]
        %v857 = vld [vmem:[%s851 + $0x28] sm:$0xff]
        %v858 = vld [vmem:[%s851 + $0x30] sm:$0xff]
        %v859 = vld [vmem:[%s851 + $0x38] sm:$0xff]
        %v860 = vld [vmem:[%s851 + $0x40] sm:$0xff]
        %v861 = vld [vmem:[%s851 + $0x48] sm:$0xff]
        %v862 = vld [vmem:[%s851 + $0x50] sm:$0xff]
        %v863 = vld [vmem:[%s851 + $0x58] sm:$0xff]
        %v864 = vld [vmem:[%s851 + $0x60] sm:$0xff]
        %v865 = vld [vmem:[%s851 + $0x68] sm:$0xff]
        %v866 = vld [vmem:[%s851 + $0x70] sm:$0xff]
        %v867 = vld [vmem:[%s851 + $0x78] sm:$0xff]
        %v868 = vld [vmem:[%s851 + $0x80] sm:$0xff]
        %v869 = vld [vmem:[%s851 + $0x88] sm:$0xff]
        %v870 = vld [vmem:[%s851 + $0x90] sm:$0xff]
        %v871 = vld [vmem:[%s851 + $0x98] sm:$0xff]
        %v872 = vld [vmem:[%s851 + $0xa0] sm:$0xff]
        %v873 = vld [vmem:[%s851 + $0xa8] sm:$0xff]
        %v874 = vld [vmem:[%s851 + $0xb0] sm:$0xff]
        %v875 = vld [vmem:[%s851 + $0xb8] sm:$0xff]
        %v876 = vld [vmem:[%s851 + $0xc0] sm:$0xff]
        %v877 = vld [vmem:[%s851 + $0xc8] sm:$0xff]
        %v878 = vld [vmem:[%s851 + $0xd0] sm:$0xff]
        %v879 = vld [vmem:[%s851 + $0xd8] sm:$0xff]
        %v880 = vld [vmem:[%s851 + $0xe0] sm:$0xff]
        %v881 = vld [vmem:[%s851 + $0xe8] sm:$0xff]
        %v882 = vld [vmem:[%s851 + $0xf0] sm:$0xff]
        %v883 = vld [vmem:[%s851 + $0xf8] sm:$0xff]
        %v884 = vld [vmem:[%s851 + $0x100] sm:$0xff]
        %v885 = vld [vmem:[%s851 + $0x108] sm:$0xff]
        %v886 = vld [vmem:[%s851 + $0x110] sm:$0xff]
        %v887 = vld [vmem:[%s851 + $0x118] sm:$0xff]
        %v888 = vld [vmem:[%s851 + $0x120] sm:$0xff]
        %v889 = vld [vmem:[%s851 + $0x128] sm:$0xff]
        %v890 = vld [vmem:[%s851 + $0x130] sm:$0xff]
        %v891 = vld [vmem:[%s851 + $0x138] sm:$0xff]
        %v892 = vld [vmem:[%s851 + $0x140] sm:$0xff]
        %v893 = vld [vmem:[%s851 + $0x148] sm:$0xff]
        %v894 = vld [vmem:[%s851 + $0x150] sm:$0xff]
        %v895 = vld [vmem:[%s851 + $0x158] sm:$0xff]
        %v896 = vld [vmem:[%s851 + $0x160] sm:$0xff]
        %v897 = vld [vmem:[%s851 + $0x168] sm:$0xff]
        %v898 = vld [vmem:[%s851 + $0x170] sm:$0xff]
        %v899 = vld [vmem:[%s851 + $0x178] sm:$0xff]
        %v900 = vld [vmem:[%s851 + $0x180] sm:$0xff]
        %v901 = vld [vmem:[%s851 + $0x188] sm:$0xff]
        %v902 = vld [vmem:[%s851 + $0x190] sm:$0xff]
        %v903 = vld [vmem:[%s851 + $0x198] sm:$0xff]
        %v904 = vld [vmem:[%s851 + $0x1a0] sm:$0xff]
        %v905 = vld [vmem:[%s851 + $0x1a8] sm:$0xff]
        %v906 = vld [vmem:[%s851 + $0x1b0] sm:$0xff]
        %v907 = vld [vmem:[%s851 + $0x1b8] sm:$0xff]
        %v908 = vld [vmem:[%s851 + $0x1c0] sm:$0xff]
        %v909 = vld [vmem:[%s851 + $0x1c8] sm:$0xff]
        %v910 = vld [vmem:[%s851 + $0x1d0] sm:$0xff]
        %v911 = vld [vmem:[%s851 + $0x1d8] sm:$0xff]
        %v912 = vld [vmem:[%s851 + $0x1e0] sm:$0xff]
        %v913 = vld [vmem:[%s851 + $0x1e8] sm:$0xff]
        %v914 = vld [vmem:[%s851 + $0x1f0] sm:$0xff]
        %v915 = vld [vmem:[%s851 + $0x1f8] sm:$0xff]
        %v916 = vld [vmem:[%s851 + $0x200] sm:$0xff]
        %v917 = vld [vmem:[%s851 + $0x208] sm:$0xff]
        %v918 = vld [vmem:[%s851 + $0x210] sm:$0xff]
        %v919 = vld [vmem:[%s851 + $0x218] sm:$0xff]
        %v920 = vld [vmem:[%s851 + $0x220] sm:$0xff]
        %v921 = vld [vmem:[%s851 + $0x228] sm:$0xff]
        %v922 = vld [vmem:[%s851 + $0x230] sm:$0xff]
        %v923 = vld [vmem:[%s851 + $0x238] sm:$0xff]
        %v924 = vld [vmem:[%s851 + $0x240] sm:$0xff]
        %v925 = vld [vmem:[%s851 + $0x248] sm:$0xff]
        %v926 = vld [vmem:[%s851 + $0x250] sm:$0xff]
        %v927 = vld [vmem:[%s851 + $0x258] sm:$0xff]
        %v928 = vld [vmem:[%s851 + $0x260] sm:$0xff]
        %v929 = vld [vmem:[%s851 + $0x268] sm:$0xff]
        %v930 = vld [vmem:[%s851 + $0x270] sm:$0xff]
        %v931 = vld [vmem:[%s851 + $0x278] sm:$0xff]
        %v933 = vsel %vm689, %v849, 0
        %v936 = vsel %vm689, %v850, 0
        %938 = vmatprep.subr.mxu0 0.0
        %939 = vmatpush1.msra.mxu0 0.0
        %940 = vmatprep.subr.mxu0 0.0
        %941 = vmatpush1.msra.mxu0 0.0
        %942 = vmatprep.subr.mxu0 0.0
        %943 = vmatpush1.msra.mxu0 0.0
        %944 = vmatprep.subr.mxu0 0.0
        %945 = vmatpush1.msra.mxu0 0.0
        %946 = vmatprep.subr.mxu0 0.0
        %947 = vmatpush1.msra.mxu0 0.0
        %948 = vmatprep.subr.mxu0 0.0
        %949 = vmatpush1.msra.mxu0 0.0
        %950 = vmatprep.subr.mxu0 %v925
        %951 = vmatpush1.msra.mxu0 %v924
        %952 = vmatprep.subr.mxu0 %v917
        %953 = vmatpush1.msra.mxu0 %v916
        %954 = vmatprep.subr.mxu0 %v909
        %955 = vmatpush1.msra.mxu0 %v908
        %956 = vmatprep.subr.mxu0 %v901
        %957 = vmatpush1.msra.mxu0 %v900
        %958 = vmatprep.subr.mxu0 %v893
        %959 = vmatpush1.msra.mxu0 %v892
        %960 = vmatprep.subr.mxu0 %v885
        %961 = vmatpush1.msra.mxu0 %v884
        %962 = vmatprep.subr.mxu0 %v877
        %963 = vmatpush1.msra.mxu0 %v876
        %964 = vmatprep.subr.mxu0 %v869
        %965 = vmatpush1.msra.mxu0 %v868
        %966 = vmatprep.subr.mxu0 %v861
        %967 = vmatpush1.msra.mxu0 %v860
        %968 = vmatprep.subr.mxu0 %v853
        %969 = vmatpush1.msra.mxu0 %v852
        %970 = vmatprep.subr.mxu0 0.0
        %971 = vmatpush2.msra.mxu0 0.0
        %972 = vmatprep.subr.mxu0 0.0
        %973 = vmatpush2.msra.mxu0 0.0
        %974 = vmatprep.subr.mxu0 0.0
        %975 = vmatpush2.msra.mxu0 0.0
        %976 = vmatprep.subr.mxu0 0.0
        %977 = vmatpush2.msra.mxu0 0.0
        %978 = vmatprep.subr.mxu0 0.0
        %979 = vmatpush2.msra.mxu0 0.0
        %980 = vmatprep.subr.mxu0 0.0
        %981 = vmatpush2.msra.mxu0 0.0
        %982 = vmatprep.subr.mxu0 0.0
        %983 = vmatpush2.msra.mxu0 0.0
        %984 = vmatprep.subr.mxu0 0.0
        %985 = vmatpush2.msra.mxu0 0.0
        %986 = vmatprep.subr.mxu0 0.0
        %987 = vmatpush2.msra.mxu0 0.0
        %988 = vmatprep.subr.mxu0 0.0
        %989 = vmatpush2.msra.mxu0 0.0
        %990 = vmatprep.subr.mxu0 0.0
        %991 = vmatpush2.msra.mxu0 0.0
        %992 = vmatprep.subr.mxu0 0.0
        %993 = vmatpush2.msra.mxu0 0.0
        %994 = vmatprep.subr.mxu0 0.0
        %995 = vmatpush2.msra.mxu0 0.0
        %996 = vmatprep.subr.mxu0 0.0
        %997 = vmatpush2.msra.mxu0 0.0
        %998 = vmatprep.subr.mxu0 0.0
        %999 = vmatpush2.msra.mxu0 0.0
        %1000 = vmatprep.subr.mxu0 0.0
        %1001 = vmatpush2.msra.mxu0 0.0
        %1002 = vmatprep.mubr.f32.mxu0 0.0
        %1003 = vmatmul.mubr.f32.gmra.mxu0 %v933
        %v1004 = vpop.f32.mrf.mxu0
        %v1005 = vadd.f32 0.0, %v1004
        %v1006 = vpop.f32.mrf.mxu0
        %v1007 = vadd.f32 0.0, %v1006
        %1008 = vmatprep.mubr.f32.mxu0 0.0
        %1009 = vmatmul.mubr.f32.gmra.mxu0 %v936
        %v1010 = vpop.f32.mrf.mxu0
        %v1011 = vadd.f32 0.0, %v1010
        %v1012 = vpop.f32.mrf.mxu0
        %v1013 = vadd.f32 0.0, %v1012
        %1014 = vdwg.mxu0
        %1015 = vmatprep.subr.mxu0 0.0
        %1016 = vmatpush1.msra.mxu0 0.0
        %1017 = vmatprep.subr.mxu0 0.0
        %1018 = vmatpush1.msra.mxu0 0.0
        %1019 = vmatprep.subr.mxu0 0.0
        %1020 = vmatpush1.msra.mxu0 0.0
        %1021 = vmatprep.subr.mxu0 0.0
        %1022 = vmatpush1.msra.mxu0 0.0
        %1023 = vmatprep.subr.mxu0 0.0
        %1024 = vmatpush1.msra.mxu0 0.0
        %1025 = vmatprep.subr.mxu0 0.0
        %1026 = vmatpush1.msra.mxu0 0.0
        %1027 = vmatprep.subr.mxu0 %v927
        %1028 = vmatpush1.msra.mxu0 %v926
        %1029 = vmatprep.subr.mxu0 %v919
        %1030 = vmatpush1.msra.mxu0 %v918
        %1031 = vmatprep.subr.mxu0 %v911
        %1032 = vmatpush1.msra.mxu0 %v910
        %1033 = vmatprep.subr.mxu0 %v903
        %1034 = vmatpush1.msra.mxu0 %v902
        %1035 = vmatprep.subr.mxu0 %v895
        %1036 = vmatpush1.msra.mxu0 %v894
        %1037 = vmatprep.subr.mxu0 %v887
        %1038 = vmatpush1.msra.mxu0 %v886
        %1039 = vmatprep.subr.mxu0 %v879
        %1040 = vmatpush1.msra.mxu0 %v878
        %1041 = vmatprep.subr.mxu0 %v871
        %1042 = vmatpush1.msra.mxu0 %v870
        %1043 = vmatprep.subr.mxu0 %v863
        %1044 = vmatpush1.msra.mxu0 %v862
        %1045 = vmatprep.subr.mxu0 %v855
        %1046 = vmatpush1.msra.mxu0 %v854
        %1047 = vmatprep.subr.mxu0 0.0
        %1048 = vmatpush2.msra.mxu0 0.0
        %1049 = vmatprep.subr.mxu0 0.0
        %1050 = vmatpush2.msra.mxu0 0.0
        %1051 = vmatprep.subr.mxu0 0.0
        %1052 = vmatpush2.msra.mxu0 0.0
        %1053 = vmatprep.subr.mxu0 0.0
        %1054 = vmatpush2.msra.mxu0 0.0
        %1055 = vmatprep.subr.mxu0 0.0
        %1056 = vmatpush2.msra.mxu0 0.0
        %1057 = vmatprep.subr.mxu0 0.0
        %1058 = vmatpush2.msra.mxu0 0.0
        %1059 = vmatprep.subr.mxu0 0.0
        %1060 = vmatpush2.msra.mxu0 0.0
        %1061 = vmatprep.subr.mxu0 0.0
        %1062 = vmatpush2.msra.mxu0 0.0
        %1063 = vmatprep.subr.mxu0 0.0
        %1064 = vmatpush2.msra.mxu0 0.0
        %1065 = vmatprep.subr.mxu0 0.0
        %1066 = vmatpush2.msra.mxu0 0.0
        %1067 = vmatprep.subr.mxu0 0.0
        %1068 = vmatpush2.msra.mxu0 0.0
        %1069 = vmatprep.subr.mxu0 0.0
        %1070 = vmatpush2.msra.mxu0 0.0
        %1071 = vmatprep.subr.mxu0 0.0
        %1072 = vmatpush2.msra.mxu0 0.0
        %1073 = vmatprep.subr.mxu0 0.0
        %1074 = vmatpush2.msra.mxu0 0.0
        %1075 = vmatprep.subr.mxu0 0.0
        %1076 = vmatpush2.msra.mxu0 0.0
        %1077 = vmatprep.subr.mxu0 0.0
        %1078 = vmatpush2.msra.mxu0 0.0
        %1079 = vmatprep.mubr.f32.mxu0 0.0
        %1080 = vmatmul.mubr.f32.gmra.mxu0 %v933
        %v1081 = vpop.f32.mrf.mxu0
        %v1082 = vadd.f32 0.0, %v1081
        %v1083 = vpop.f32.mrf.mxu0
        %v1084 = vadd.f32 0.0, %v1083
        %1085 = vmatprep.mubr.f32.mxu0 0.0
        %1086 = vmatmul.mubr.f32.gmra.mxu0 %v936
        %v1087 = vpop.f32.mrf.mxu0
        %v1088 = vadd.f32 0.0, %v1087
        %v1089 = vpop.f32.mrf.mxu0
        %v1090 = vadd.f32 0.0, %v1089
        %1091 = vdwg.mxu0
        %1092 = vmatprep.subr.mxu0 0.0
        %1093 = vmatpush1.msra.mxu0 0.0
        %1094 = vmatprep.subr.mxu0 0.0
        %1095 = vmatpush1.msra.mxu0 0.0
        %1096 = vmatprep.subr.mxu0 0.0
        %1097 = vmatpush1.msra.mxu0 0.0
        %1098 = vmatprep.subr.mxu0 0.0
        %1099 = vmatpush1.msra.mxu0 0.0
        %1100 = vmatprep.subr.mxu0 0.0
        %1101 = vmatpush1.msra.mxu0 0.0
        %1102 = vmatprep.subr.mxu0 0.0
        %1103 = vmatpush1.msra.mxu0 0.0
        %1104 = vmatprep.subr.mxu0 %v929
        %1105 = vmatpush1.msra.mxu0 %v928
        %1106 = vmatprep.subr.mxu0 %v921
        %1107 = vmatpush1.msra.mxu0 %v920
        %1108 = vmatprep.subr.mxu0 %v913
        %1109 = vmatpush1.msra.mxu0 %v912
        %1110 = vmatprep.subr.mxu0 %v905
        %1111 = vmatpush1.msra.mxu0 %v904
        %1112 = vmatprep.subr.mxu0 %v897
        %1113 = vmatpush1.msra.mxu0 %v896
        %1114 = vmatprep.subr.mxu0 %v889
        %1115 = vmatpush1.msra.mxu0 %v888
        %1116 = vmatprep.subr.mxu0 %v881
        %1117 = vmatpush1.msra.mxu0 %v880
        %1118 = vmatprep.subr.mxu0 %v873
        %1119 = vmatpush1.msra.mxu0 %v872
        %1120 = vmatprep.subr.mxu0 %v865
        %1121 = vmatpush1.msra.mxu0 %v864
        %1122 = vmatprep.subr.mxu0 %v857
        %1123 = vmatpush1.msra.mxu0 %v856
        %1124 = vmatprep.subr.mxu0 0.0
        %1125 = vmatpush2.msra.mxu0 0.0
        %1126 = vmatprep.subr.mxu0 0.0
        %1127 = vmatpush2.msra.mxu0 0.0
        %1128 = vmatprep.subr.mxu0 0.0
        %1129 = vmatpush2.msra.mxu0 0.0
        %1130 = vmatprep.subr.mxu0 0.0
        %1131 = vmatpush2.msra.mxu0 0.0
        %1132 = vmatprep.subr.mxu0 0.0
        %1133 = vmatpush2.msra.mxu0 0.0
        %1134 = vmatprep.subr.mxu0 0.0
        %1135 = vmatpush2.msra.mxu0 0.0
        %1136 = vmatprep.subr.mxu0 0.0
        %1137 = vmatpush2.msra.mxu0 0.0
        %1138 = vmatprep.subr.mxu0 0.0
        %1139 = vmatpush2.msra.mxu0 0.0
        %1140 = vmatprep.subr.mxu0 0.0
        %1141 = vmatpush2.msra.mxu0 0.0
        %1142 = vmatprep.subr.mxu0 0.0
        %1143 = vmatpush2.msra.mxu0 0.0
        %1144 = vmatprep.subr.mxu0 0.0
        %1145 = vmatpush2.msra.mxu0 0.0
        %1146 = vmatprep.subr.mxu0 0.0
        %1147 = vmatpush2.msra.mxu0 0.0
        %1148 = vmatprep.subr.mxu0 0.0
        %1149 = vmatpush2.msra.mxu0 0.0
        %1150 = vmatprep.subr.mxu0 0.0
        %1151 = vmatpush2.msra.mxu0 0.0
        %1152 = vmatprep.subr.mxu0 0.0
        %1153 = vmatpush2.msra.mxu0 0.0
        %1154 = vmatprep.subr.mxu0 0.0
        %1155 = vmatpush2.msra.mxu0 0.0
        %1156 = vmatprep.mubr.f32.mxu0 0.0
        %1157 = vmatmul.mubr.f32.gmra.mxu0 %v933
        %v1158 = vpop.f32.mrf.mxu0
        %v1159 = vadd.f32 0.0, %v1158
        %v1160 = vpop.f32.mrf.mxu0
        %v1161 = vadd.f32 0.0, %v1160
        %1162 = vmatprep.mubr.f32.mxu0 0.0
        %1163 = vmatmul.mubr.f32.gmra.mxu0 %v936
        %v1164 = vpop.f32.mrf.mxu0
        %v1165 = vadd.f32 0.0, %v1164
        %v1166 = vpop.f32.mrf.mxu0
        %v1167 = vadd.f32 0.0, %v1166
        %1168 = vdwg.mxu0
        %1169 = vmatprep.subr.mxu0 0.0
        %1170 = vmatpush1.msra.mxu0 0.0
        %1171 = vmatprep.subr.mxu0 0.0
        %1172 = vmatpush1.msra.mxu0 0.0
        %1173 = vmatprep.subr.mxu0 0.0
        %1174 = vmatpush1.msra.mxu0 0.0
        %1175 = vmatprep.subr.mxu0 0.0
        %1176 = vmatpush1.msra.mxu0 0.0
        %1177 = vmatprep.subr.mxu0 0.0
        %1178 = vmatpush1.msra.mxu0 0.0
        %1179 = vmatprep.subr.mxu0 0.0
        %1180 = vmatpush1.msra.mxu0 0.0
        %1181 = vmatprep.subr.mxu0 %v931
        %1182 = vmatpush1.msra.mxu0 %v930
        %1183 = vmatprep.subr.mxu0 %v923
        %1184 = vmatpush1.msra.mxu0 %v922
        %1185 = vmatprep.subr.mxu0 %v915
        %1186 = vmatpush1.msra.mxu0 %v914
        %1187 = vmatprep.subr.mxu0 %v907
        %1188 = vmatpush1.msra.mxu0 %v906
        %1189 = vmatprep.subr.mxu0 %v899
        %1190 = vmatpush1.msra.mxu0 %v898
        %1191 = vmatprep.subr.mxu0 %v891
        %1192 = vmatpush1.msra.mxu0 %v890
        %1193 = vmatprep.subr.mxu0 %v883
        %1194 = vmatpush1.msra.mxu0 %v882
        %1195 = vmatprep.subr.mxu0 %v875
        %1196 = vmatpush1.msra.mxu0 %v874
        %1197 = vmatprep.subr.mxu0 %v867
        %1198 = vmatpush1.msra.mxu0 %v866
        %1199 = vmatprep.subr.mxu0 %v859
        %1200 = vmatpush1.msra.mxu0 %v858
        %1201 = vmatprep.subr.mxu0 0.0
        %1202 = vmatpush2.msra.mxu0 0.0
        %1203 = vmatprep.subr.mxu0 0.0
        %1204 = vmatpush2.msra.mxu0 0.0
        %1205 = vmatprep.subr.mxu0 0.0
        %1206 = vmatpush2.msra.mxu0 0.0
        %1207 = vmatprep.subr.mxu0 0.0
        %1208 = vmatpush2.msra.mxu0 0.0
        %1209 = vmatprep.subr.mxu0 0.0
        %1210 = vmatpush2.msra.mxu0 0.0
        %1211 = vmatprep.subr.mxu0 0.0
        %1212 = vmatpush2.msra.mxu0 0.0
        %1213 = vmatprep.subr.mxu0 0.0
        %1214 = vmatpush2.msra.mxu0 0.0
        %1215 = vmatprep.subr.mxu0 0.0
        %1216 = vmatpush2.msra.mxu0 0.0
        %1217 = vmatprep.subr.mxu0 0.0
        %1218 = vmatpush2.msra.mxu0 0.0
        %1219 = vmatprep.subr.mxu0 0.0
        %1220 = vmatpush2.msra.mxu0 0.0
        %1221 = vmatprep.subr.mxu0 0.0
        %1222 = vmatpush2.msra.mxu0 0.0
        %1223 = vmatprep.subr.mxu0 0.0
        %1224 = vmatpush2.msra.mxu0 0.0
        %1225 = vmatprep.subr.mxu0 0.0
        %1226 = vmatpush2.msra.mxu0 0.0
        %1227 = vmatprep.subr.mxu0 0.0
        %1228 = vmatpush2.msra.mxu0 0.0
        %1229 = vmatprep.subr.mxu0 0.0
        %1230 = vmatpush2.msra.mxu0 0.0
        %1231 = vmatprep.subr.mxu0 0.0
        %1232 = vmatpush2.msra.mxu0 0.0
        %1233 = vmatprep.mubr.f32.mxu0 0.0
        %1234 = vmatmul.mubr.f32.gmra.mxu0 %v933
        %v1235 = vpop.f32.mrf.mxu0
        %v1236 = vadd.f32 0.0, %v1235
        %v1237 = vpop.f32.mrf.mxu0
        %v1238 = vadd.f32 0.0, %v1237
        %1239 = vmatprep.mubr.f32.mxu0 0.0
        %1240 = vmatmul.mubr.f32.gmra.mxu0 %v936
        %v1241 = vpop.f32.mrf.mxu0
        %v1242 = vadd.f32 0.0, %v1241
        %v1243 = vpop.f32.mrf.mxu0
        %v1244 = vadd.f32 0.0, %v1243
        %1245 = vdwg.mxu0
        %v1247 = vsel %vm689, %v767, 0
        %v1250 = vsel %vm689, %v768, 0
        %1252 = vmatprep.subr.mxu0 0.0
        %1253 = vmatpush1.msra.mxu0 0.0
        %1254 = vmatprep.subr.mxu0 0.0
        %1255 = vmatpush1.msra.mxu0 0.0
        %1256 = vmatprep.subr.mxu0 0.0
        %1257 = vmatpush1.msra.mxu0 0.0
        %1258 = vmatprep.subr.mxu0 0.0
        %1259 = vmatpush1.msra.mxu0 0.0
        %1260 = vmatprep.subr.mxu0 0.0
        %1261 = vmatpush1.msra.mxu0 0.0
        %1262 = vmatprep.subr.mxu0 0.0
        %1263 = vmatpush1.msra.mxu0 0.0
        %1264 = vmatprep.subr.mxu0 %v842
        %1265 = vmatpush1.msra.mxu0 %v841
        %1266 = vmatprep.subr.mxu0 %v834
        %1267 = vmatpush1.msra.mxu0 %v833
        %1268 = vmatprep.subr.mxu0 %v826
        %1269 = vmatpush1.msra.mxu0 %v825
        %1270 = vmatprep.subr.mxu0 %v818
        %1271 = vmatpush1.msra.mxu0 %v817
        %1272 = vmatprep.subr.mxu0 %v810
        %1273 = vmatpush1.msra.mxu0 %v809
        %1274 = vmatprep.subr.mxu0 %v802
        %1275 = vmatpush1.msra.mxu0 %v801
        %1276 = vmatprep.subr.mxu0 %v794
        %1277 = vmatpush1.msra.mxu0 %v793
        %1278 = vmatprep.subr.mxu0 %v786
        %1279 = vmatpush1.msra.mxu0 %v785
        %1280 = vmatprep.subr.mxu0 %v778
        %1281 = vmatpush1.msra.mxu0 %v777
        %1282 = vmatprep.subr.mxu0 %v770
        %1283 = vmatpush1.msra.mxu0 %v769
        %1284 = vmatprep.subr.mxu0 0.0
        %1285 = vmatpush2.msra.mxu0 0.0
        %1286 = vmatprep.subr.mxu0 0.0
        %1287 = vmatpush2.msra.mxu0 0.0
        %1288 = vmatprep.subr.mxu0 0.0
        %1289 = vmatpush2.msra.mxu0 0.0
        %1290 = vmatprep.subr.mxu0 0.0
        %1291 = vmatpush2.msra.mxu0 0.0
        %1292 = vmatprep.subr.mxu0 0.0
        %1293 = vmatpush2.msra.mxu0 0.0
        %1294 = vmatprep.subr.mxu0 0.0
        %1295 = vmatpush2.msra.mxu0 0.0
        %1296 = vmatprep.subr.mxu0 0.0
        %1297 = vmatpush2.msra.mxu0 0.0
        %1298 = vmatprep.subr.mxu0 0.0
        %1299 = vmatpush2.msra.mxu0 0.0
        %1300 = vmatprep.subr.mxu0 0.0
        %1301 = vmatpush2.msra.mxu0 0.0
        %1302 = vmatprep.subr.mxu0 0.0
        %1303 = vmatpush2.msra.mxu0 0.0
        %1304 = vmatprep.subr.mxu0 0.0
        %1305 = vmatpush2.msra.mxu0 0.0
        %1306 = vmatprep.subr.mxu0 0.0
        %1307 = vmatpush2.msra.mxu0 0.0
        %1308 = vmatprep.subr.mxu0 0.0
        %1309 = vmatpush2.msra.mxu0 0.0
        %1310 = vmatprep.subr.mxu0 0.0
        %1311 = vmatpush2.msra.mxu0 0.0
        %1312 = vmatprep.subr.mxu0 0.0
        %1313 = vmatpush2.msra.mxu0 0.0
        %1314 = vmatprep.subr.mxu0 0.0
        %1315 = vmatpush2.msra.mxu0 0.0
        %1316 = vmatprep.mubr.f32.mxu0 0.0
        %1317 = vmatmul.mubr.f32.gmra.mxu0 %v1247
        %v1318 = vpop.f32.mrf.mxu0
        %v1319 = vadd.f32 %v1005, %v1318
        %v1320 = vpop.f32.mrf.mxu0
        %v1321 = vadd.f32 %v1007, %v1320
        %1322 = vmatprep.mubr.f32.mxu0 0.0
        %1323 = vmatmul.mubr.f32.gmra.mxu0 %v1250
        %v1324 = vpop.f32.mrf.mxu0
        %v1325 = vadd.f32 %v1011, %v1324
        %v1326 = vpop.f32.mrf.mxu0
        %v1327 = vadd.f32 %v1013, %v1326
        %1328 = vdwg.mxu0
        %1329 = vmatprep.subr.mxu0 0.0
        %1330 = vmatpush1.msra.mxu0 0.0
        %1331 = vmatprep.subr.mxu0 0.0
        %1332 = vmatpush1.msra.mxu0 0.0
        %1333 = vmatprep.subr.mxu0 0.0
        %1334 = vmatpush1.msra.mxu0 0.0
        %1335 = vmatprep.subr.mxu0 0.0
        %1336 = vmatpush1.msra.mxu0 0.0
        %1337 = vmatprep.subr.mxu0 0.0
        %1338 = vmatpush1.msra.mxu0 0.0
        %1339 = vmatprep.subr.mxu0 0.0
        %1340 = vmatpush1.msra.mxu0 0.0
        %1341 = vmatprep.subr.mxu0 %v844
        %1342 = vmatpush1.msra.mxu0 %v843
        %1343 = vmatprep.subr.mxu0 %v836
        %1344 = vmatpush1.msra.mxu0 %v835
        %1345 = vmatprep.subr.mxu0 %v828
        %1346 = vmatpush1.msra.mxu0 %v827
        %1347 = vmatprep.subr.mxu0 %v820
        %1348 = vmatpush1.msra.mxu0 %v819
        %1349 = vmatprep.subr.mxu0 %v812
        %1350 = vmatpush1.msra.mxu0 %v811
        %1351 = vmatprep.subr.mxu0 %v804
        %1352 = vmatpush1.msra.mxu0 %v803
        %1353 = vmatprep.subr.mxu0 %v796
        %1354 = vmatpush1.msra.mxu0 %v795
        %1355 = vmatprep.subr.mxu0 %v788
        %1356 = vmatpush1.msra.mxu0 %v787
        %1357 = vmatprep.subr.mxu0 %v780
        %1358 = vmatpush1.msra.mxu0 %v779
        %1359 = vmatprep.subr.mxu0 %v772
        %1360 = vmatpush1.msra.mxu0 %v771
        %1361 = vmatprep.subr.mxu0 0.0
        %1362 = vmatpush2.msra.mxu0 0.0
        %1363 = vmatprep.subr.mxu0 0.0
        %1364 = vmatpush2.msra.mxu0 0.0
        %1365 = vmatprep.subr.mxu0 0.0
        %1366 = vmatpush2.msra.mxu0 0.0
        %1367 = vmatprep.subr.mxu0 0.0
        %1368 = vmatpush2.msra.mxu0 0.0
        %1369 = vmatprep.subr.mxu0 0.0
        %1370 = vmatpush2.msra.mxu0 0.0
        %1371 = vmatprep.subr.mxu0 0.0
        %1372 = vmatpush2.msra.mxu0 0.0
        %1373 = vmatprep.subr.mxu0 0.0
        %1374 = vmatpush2.msra.mxu0 0.0
        %1375 = vmatprep.subr.mxu0 0.0
        %1376 = vmatpush2.msra.mxu0 0.0
        %1377 = vmatprep.subr.mxu0 0.0
        %1378 = vmatpush2.msra.mxu0 0.0
        %1379 = vmatprep.subr.mxu0 0.0
        %1380 = vmatpush2.msra.mxu0 0.0
        %1381 = vmatprep.subr.mxu0 0.0
        %1382 = vmatpush2.msra.mxu0 0.0
        %1383 = vmatprep.subr.mxu0 0.0
        %1384 = vmatpush2.msra.mxu0 0.0
        %1385 = vmatprep.subr.mxu0 0.0
        %1386 = vmatpush2.msra.mxu0 0.0
        %1387 = vmatprep.subr.mxu0 0.0
        %1388 = vmatpush2.msra.mxu0 0.0
        %1389 = vmatprep.subr.mxu0 0.0
        %1390 = vmatpush2.msra.mxu0 0.0
        %1391 = vmatprep.subr.mxu0 0.0
        %1392 = vmatpush2.msra.mxu0 0.0
        %1393 = vmatprep.mubr.f32.mxu0 0.0
        %1394 = vmatmul.mubr.f32.gmra.mxu0 %v1247
        %v1395 = vpop.f32.mrf.mxu0
        %v1396 = vadd.f32 %v1082, %v1395
        %v1397 = vpop.f32.mrf.mxu0
        %v1398 = vadd.f32 %v1084, %v1397
        %1399 = vmatprep.mubr.f32.mxu0 0.0
        %1400 = vmatmul.mubr.f32.gmra.mxu0 %v1250
        %v1401 = vpop.f32.mrf.mxu0
        %v1402 = vadd.f32 %v1088, %v1401
        %v1403 = vpop.f32.mrf.mxu0
        %v1404 = vadd.f32 %v1090, %v1403
        %1405 = vdwg.mxu0
        %1406 = vmatprep.subr.mxu0 0.0
        %1407 = vmatpush1.msra.mxu0 0.0
        %1408 = vmatprep.subr.mxu0 0.0
        %1409 = vmatpush1.msra.mxu0 0.0
        %1410 = vmatprep.subr.mxu0 0.0
        %1411 = vmatpush1.msra.mxu0 0.0
        %1412 = vmatprep.subr.mxu0 0.0
        %1413 = vmatpush1.msra.mxu0 0.0
        %1414 = vmatprep.subr.mxu0 0.0
        %1415 = vmatpush1.msra.mxu0 0.0
        %1416 = vmatprep.subr.mxu0 0.0
        %1417 = vmatpush1.msra.mxu0 0.0
        %1418 = vmatprep.subr.mxu0 %v846
        %1419 = vmatpush1.msra.mxu0 %v845
        %1420 = vmatprep.subr.mxu0 %v838
        %1421 = vmatpush1.msra.mxu0 %v837
        %1422 = vmatprep.subr.mxu0 %v830
        %1423 = vmatpush1.msra.mxu0 %v829
        %1424 = vmatprep.subr.mxu0 %v822
        %1425 = vmatpush1.msra.mxu0 %v821
        %1426 = vmatprep.subr.mxu0 %v814
        %1427 = vmatpush1.msra.mxu0 %v813
        %1428 = vmatprep.subr.mxu0 %v806
        %1429 = vmatpush1.msra.mxu0 %v805
        %1430 = vmatprep.subr.mxu0 %v798
        %1431 = vmatpush1.msra.mxu0 %v797
        %1432 = vmatprep.subr.mxu0 %v790
        %1433 = vmatpush1.msra.mxu0 %v789
        %1434 = vmatprep.subr.mxu0 %v782
        %1435 = vmatpush1.msra.mxu0 %v781
        %1436 = vmatprep.subr.mxu0 %v774
        %1437 = vmatpush1.msra.mxu0 %v773
        %1438 = vmatprep.subr.mxu0 0.0
        %1439 = vmatpush2.msra.mxu0 0.0
        %1440 = vmatprep.subr.mxu0 0.0
        %1441 = vmatpush2.msra.mxu0 0.0
        %1442 = vmatprep.subr.mxu0 0.0
        %1443 = vmatpush2.msra.mxu0 0.0
        %1444 = vmatprep.subr.mxu0 0.0
        %1445 = vmatpush2.msra.mxu0 0.0
        %1446 = vmatprep.subr.mxu0 0.0
        %1447 = vmatpush2.msra.mxu0 0.0
        %1448 = vmatprep.subr.mxu0 0.0
        %1449 = vmatpush2.msra.mxu0 0.0
        %1450 = vmatprep.subr.mxu0 0.0
        %1451 = vmatpush2.msra.mxu0 0.0
        %1452 = vmatprep.subr.mxu0 0.0
        %1453 = vmatpush2.msra.mxu0 0.0
        %1454 = vmatprep.subr.mxu0 0.0
        %1455 = vmatpush2.msra.mxu0 0.0
        %1456 = vmatprep.subr.mxu0 0.0
        %1457 = vmatpush2.msra.mxu0 0.0
        %1458 = vmatprep.subr.mxu0 0.0
        %1459 = vmatpush2.msra.mxu0 0.0
        %1460 = vmatprep.subr.mxu0 0.0
        %1461 = vmatpush2.msra.mxu0 0.0
        %1462 = vmatprep.subr.mxu0 0.0
        %1463 = vmatpush2.msra.mxu0 0.0
        %1464 = vmatprep.subr.mxu0 0.0
        %1465 = vmatpush2.msra.mxu0 0.0
        %1466 = vmatprep.subr.mxu0 0.0
        %1467 = vmatpush2.msra.mxu0 0.0
        %1468 = vmatprep.subr.mxu0 0.0
        %1469 = vmatpush2.msra.mxu0 0.0
        %1470 = vmatprep.mubr.f32.mxu0 0.0
        %1471 = vmatmul.mubr.f32.gmra.mxu0 %v1247
        %v1472 = vpop.f32.mrf.mxu0
        %v1473 = vadd.f32 %v1159, %v1472
        %v1474 = vpop.f32.mrf.mxu0
        %v1475 = vadd.f32 %v1161, %v1474
        %1476 = vmatprep.mubr.f32.mxu0 0.0
        %1477 = vmatmul.mubr.f32.gmra.mxu0 %v1250
        %v1478 = vpop.f32.mrf.mxu0
        %v1479 = vadd.f32 %v1165, %v1478
        %v1480 = vpop.f32.mrf.mxu0
        %v1481 = vadd.f32 %v1167, %v1480
        %1482 = vdwg.mxu0
        %1483 = vmatprep.subr.mxu0 0.0
        %1484 = vmatpush1.msra.mxu0 0.0
        %1485 = vmatprep.subr.mxu0 0.0
        %1486 = vmatpush1.msra.mxu0 0.0
        %1487 = vmatprep.subr.mxu0 0.0
        %1488 = vmatpush1.msra.mxu0 0.0
        %1489 = vmatprep.subr.mxu0 0.0
        %1490 = vmatpush1.msra.mxu0 0.0
        %1491 = vmatprep.subr.mxu0 0.0
        %1492 = vmatpush1.msra.mxu0 0.0
        %1493 = vmatprep.subr.mxu0 0.0
        %1494 = vmatpush1.msra.mxu0 0.0
        %1495 = vmatprep.subr.mxu0 %v848
        %1496 = vmatpush1.msra.mxu0 %v847
        %1497 = vmatprep.subr.mxu0 %v840
        %1498 = vmatpush1.msra.mxu0 %v839
        %1499 = vmatprep.subr.mxu0 %v832
        %1500 = vmatpush1.msra.mxu0 %v831
        %1501 = vmatprep.subr.mxu0 %v824
        %1502 = vmatpush1.msra.mxu0 %v823
        %1503 = vmatprep.subr.mxu0 %v816
        %1504 = vmatpush1.msra.mxu0 %v815
        %1505 = vmatprep.subr.mxu0 %v808
        %1506 = vmatpush1.msra.mxu0 %v807
        %1507 = vmatprep.subr.mxu0 %v800
        %1508 = vmatpush1.msra.mxu0 %v799
        %1509 = vmatprep.subr.mxu0 %v792
        %1510 = vmatpush1.msra.mxu0 %v791
        %1511 = vmatprep.subr.mxu0 %v784
        %1512 = vmatpush1.msra.mxu0 %v783
        %1513 = vmatprep.subr.mxu0 %v776
        %1514 = vmatpush1.msra.mxu0 %v775
        %1515 = vmatprep.subr.mxu0 0.0
        %1516 = vmatpush2.msra.mxu0 0.0
        %1517 = vmatprep.subr.mxu0 0.0
        %1518 = vmatpush2.msra.mxu0 0.0
        %1519 = vmatprep.subr.mxu0 0.0
        %1520 = vmatpush2.msra.mxu0 0.0
        %1521 = vmatprep.subr.mxu0 0.0
        %1522 = vmatpush2.msra.mxu0 0.0
        %1523 = vmatprep.subr.mxu0 0.0
        %1524 = vmatpush2.msra.mxu0 0.0
        %1525 = vmatprep.subr.mxu0 0.0
        %1526 = vmatpush2.msra.mxu0 0.0
        %1527 = vmatprep.subr.mxu0 0.0
        %1528 = vmatpush2.msra.mxu0 0.0
        %1529 = vmatprep.subr.mxu0 0.0
        %1530 = vmatpush2.msra.mxu0 0.0
        %1531 = vmatprep.subr.mxu0 0.0
        %1532 = vmatpush2.msra.mxu0 0.0
        %1533 = vmatprep.subr.mxu0 0.0
        %1534 = vmatpush2.msra.mxu0 0.0
        %1535 = vmatprep.subr.mxu0 0.0
        %1536 = vmatpush2.msra.mxu0 0.0
        %1537 = vmatprep.subr.mxu0 0.0
        %1538 = vmatpush2.msra.mxu0 0.0
        %1539 = vmatprep.subr.mxu0 0.0
        %1540 = vmatpush2.msra.mxu0 0.0
        %1541 = vmatprep.subr.mxu0 0.0
        %1542 = vmatpush2.msra.mxu0 0.0
        %1543 = vmatprep.subr.mxu0 0.0
        %1544 = vmatpush2.msra.mxu0 0.0
        %1545 = vmatprep.subr.mxu0 0.0
        %1546 = vmatpush2.msra.mxu0 0.0
        %1547 = vmatprep.mubr.f32.mxu0 0.0
        %1548 = vmatmul.mubr.f32.gmra.mxu0 %v1247
        %v1549 = vpop.f32.mrf.mxu0
        %v1550 = vadd.f32 %v1236, %v1549
        %v1551 = vpop.f32.mrf.mxu0
        %v1552 = vadd.f32 %v1238, %v1551
        %1553 = vmatprep.mubr.f32.mxu0 0.0
        %1554 = vmatmul.mubr.f32.gmra.mxu0 %v1250
        %v1555 = vpop.f32.mrf.mxu0
        %v1556 = vadd.f32 %v1242, %v1555
        %v1557 = vpop.f32.mrf.mxu0
        %v1558 = vadd.f32 %v1244, %v1557
        %1559 = vdwg.mxu0
        %v1560 = vld [vmem:[#allocation2 + $0x2] sm:$0xff]
        %v1561 = vld [vmem:[#allocation2 + $0xa] sm:$0xff]
        %s1562 = scalar_lea.vmem [#allocation8], 1280
        %v1563 = vld [vmem:[%s1562] sm:$0xff]
        %v1564 = vld [vmem:[%s1562 + $0x8] sm:$0xff]
        %v1565 = vld [vmem:[%s1562 + $0x10] sm:$0xff]
        %v1566 = vld [vmem:[%s1562 + $0x18] sm:$0xff]
        %v1567 = vld [vmem:[%s1562 + $0x20] sm:$0xff]
        %v1568 = vld [vmem:[%s1562 + $0x28] sm:$0xff]
        %v1569 = vld [vmem:[%s1562 + $0x30] sm:$0xff]
        %v1570 = vld [vmem:[%s1562 + $0x38] sm:$0xff]
        %v1571 = vld [vmem:[%s1562 + $0x40] sm:$0xff]
        %v1572 = vld [vmem:[%s1562 + $0x48] sm:$0xff]
        %v1573 = vld [vmem:[%s1562 + $0x50] sm:$0xff]
        %v1574 = vld [vmem:[%s1562 + $0x58] sm:$0xff]
        %v1575 = vld [vmem:[%s1562 + $0x60] sm:$0xff]
        %v1576 = vld [vmem:[%s1562 + $0x68] sm:$0xff]
        %v1577 = vld [vmem:[%s1562 + $0x70] sm:$0xff]
        %v1578 = vld [vmem:[%s1562 + $0x78] sm:$0xff]
        %v1579 = vld [vmem:[%s1562 + $0x80] sm:$0xff]
        %v1580 = vld [vmem:[%s1562 + $0x88] sm:$0xff]
        %v1581 = vld [vmem:[%s1562 + $0x90] sm:$0xff]
        %v1582 = vld [vmem:[%s1562 + $0x98] sm:$0xff]
        %v1583 = vld [vmem:[%s1562 + $0xa0] sm:$0xff]
        %v1584 = vld [vmem:[%s1562 + $0xa8] sm:$0xff]
        %v1585 = vld [vmem:[%s1562 + $0xb0] sm:$0xff]
        %v1586 = vld [vmem:[%s1562 + $0xb8] sm:$0xff]
        %v1587 = vld [vmem:[%s1562 + $0xc0] sm:$0xff]
        %v1588 = vld [vmem:[%s1562 + $0xc8] sm:$0xff]
        %v1589 = vld [vmem:[%s1562 + $0xd0] sm:$0xff]
        %v1590 = vld [vmem:[%s1562 + $0xd8] sm:$0xff]
        %v1591 = vld [vmem:[%s1562 + $0xe0] sm:$0xff]
        %v1592 = vld [vmem:[%s1562 + $0xe8] sm:$0xff]
        %v1593 = vld [vmem:[%s1562 + $0xf0] sm:$0xff]
        %v1594 = vld [vmem:[%s1562 + $0xf8] sm:$0xff]
        %v1595 = vld [vmem:[%s1562 + $0x100] sm:$0xff]
        %v1596 = vld [vmem:[%s1562 + $0x108] sm:$0xff]
        %v1597 = vld [vmem:[%s1562 + $0x110] sm:$0xff]
        %v1598 = vld [vmem:[%s1562 + $0x118] sm:$0xff]
        %v1599 = vld [vmem:[%s1562 + $0x120] sm:$0xff]
        %v1600 = vld [vmem:[%s1562 + $0x128] sm:$0xff]
        %v1601 = vld [vmem:[%s1562 + $0x130] sm:$0xff]
        %v1602 = vld [vmem:[%s1562 + $0x138] sm:$0xff]
        %v1603 = vld [vmem:[%s1562 + $0x140] sm:$0xff]
        %v1604 = vld [vmem:[%s1562 + $0x148] sm:$0xff]
        %v1605 = vld [vmem:[%s1562 + $0x150] sm:$0xff]
        %v1606 = vld [vmem:[%s1562 + $0x158] sm:$0xff]
        %v1607 = vld [vmem:[%s1562 + $0x160] sm:$0xff]
        %v1608 = vld [vmem:[%s1562 + $0x168] sm:$0xff]
        %v1609 = vld [vmem:[%s1562 + $0x170] sm:$0xff]
        %v1610 = vld [vmem:[%s1562 + $0x178] sm:$0xff]
        %v1611 = vld [vmem:[%s1562 + $0x180] sm:$0xff]
        %v1612 = vld [vmem:[%s1562 + $0x188] sm:$0xff]
        %v1613 = vld [vmem:[%s1562 + $0x190] sm:$0xff]
        %v1614 = vld [vmem:[%s1562 + $0x198] sm:$0xff]
        %v1615 = vld [vmem:[%s1562 + $0x1a0] sm:$0xff]
        %v1616 = vld [vmem:[%s1562 + $0x1a8] sm:$0xff]
        %v1617 = vld [vmem:[%s1562 + $0x1b0] sm:$0xff]
        %v1618 = vld [vmem:[%s1562 + $0x1b8] sm:$0xff]
        %v1619 = vld [vmem:[%s1562 + $0x1c0] sm:$0xff]
        %v1620 = vld [vmem:[%s1562 + $0x1c8] sm:$0xff]
        %v1621 = vld [vmem:[%s1562 + $0x1d0] sm:$0xff]
        %v1622 = vld [vmem:[%s1562 + $0x1d8] sm:$0xff]
        %v1623 = vld [vmem:[%s1562 + $0x1e0] sm:$0xff]
        %v1624 = vld [vmem:[%s1562 + $0x1e8] sm:$0xff]
        %v1625 = vld [vmem:[%s1562 + $0x1f0] sm:$0xff]
        %v1626 = vld [vmem:[%s1562 + $0x1f8] sm:$0xff]
        %v1627 = vld [vmem:[%s1562 + $0x200] sm:$0xff]
        %v1628 = vld [vmem:[%s1562 + $0x208] sm:$0xff]
        %v1629 = vld [vmem:[%s1562 + $0x210] sm:$0xff]
        %v1630 = vld [vmem:[%s1562 + $0x218] sm:$0xff]
        %v1631 = vld [vmem:[%s1562 + $0x220] sm:$0xff]
        %v1632 = vld [vmem:[%s1562 + $0x228] sm:$0xff]
        %v1633 = vld [vmem:[%s1562 + $0x230] sm:$0xff]
        %v1634 = vld [vmem:[%s1562 + $0x238] sm:$0xff]
        %v1635 = vld [vmem:[%s1562 + $0x240] sm:$0xff]
        %v1636 = vld [vmem:[%s1562 + $0x248] sm:$0xff]
        %v1637 = vld [vmem:[%s1562 + $0x250] sm:$0xff]
        %v1638 = vld [vmem:[%s1562 + $0x258] sm:$0xff]
        %v1639 = vld [vmem:[%s1562 + $0x260] sm:$0xff]
        %v1640 = vld [vmem:[%s1562 + $0x268] sm:$0xff]
        %v1641 = vld [vmem:[%s1562 + $0x270] sm:$0xff]
        %v1642 = vld [vmem:[%s1562 + $0x278] sm:$0xff]
        %v1644 = vsel %vm689, %v1560, 0
        %v1647 = vsel %vm689, %v1561, 0
        %1649 = vmatprep.subr.mxu0 0.0
        %1650 = vmatpush1.msra.mxu0 0.0
        %1651 = vmatprep.subr.mxu0 0.0
        %1652 = vmatpush1.msra.mxu0 0.0
        %1653 = vmatprep.subr.mxu0 0.0
        %1654 = vmatpush1.msra.mxu0 0.0
        %1655 = vmatprep.subr.mxu0 0.0
        %1656 = vmatpush1.msra.mxu0 0.0
        %1657 = vmatprep.subr.mxu0 0.0
        %1658 = vmatpush1.msra.mxu0 0.0
        %1659 = vmatprep.subr.mxu0 0.0
        %1660 = vmatpush1.msra.mxu0 0.0
        %1661 = vmatprep.subr.mxu0 %v1636
        %1662 = vmatpush1.msra.mxu0 %v1635
        %1663 = vmatprep.subr.mxu0 %v1628
        %1664 = vmatpush1.msra.mxu0 %v1627
        %1665 = vmatprep.subr.mxu0 %v1620
        %1666 = vmatpush1.msra.mxu0 %v1619
        %1667 = vmatprep.subr.mxu0 %v1612
        %1668 = vmatpush1.msra.mxu0 %v1611
        %1669 = vmatprep.subr.mxu0 %v1604
        %1670 = vmatpush1.msra.mxu0 %v1603
        %1671 = vmatprep.subr.mxu0 %v1596
        %1672 = vmatpush1.msra.mxu0 %v1595
        %1673 = vmatprep.subr.mxu0 %v1588
        %1674 = vmatpush1.msra.mxu0 %v1587
        %1675 = vmatprep.subr.mxu0 %v1580
        %1676 = vmatpush1.msra.mxu0 %v1579
        %1677 = vmatprep.subr.mxu0 %v1572
        %1678 = vmatpush1.msra.mxu0 %v1571
        %1679 = vmatprep.subr.mxu0 %v1564
        %1680 = vmatpush1.msra.mxu0 %v1563
        %1681 = vmatprep.subr.mxu0 0.0
        %1682 = vmatpush2.msra.mxu0 0.0
        %1683 = vmatprep.subr.mxu0 0.0
        %1684 = vmatpush2.msra.mxu0 0.0
        %1685 = vmatprep.subr.mxu0 0.0
        %1686 = vmatpush2.msra.mxu0 0.0
        %1687 = vmatprep.subr.mxu0 0.0
        %1688 = vmatpush2.msra.mxu0 0.0
        %1689 = vmatprep.subr.mxu0 0.0
        %1690 = vmatpush2.msra.mxu0 0.0
        %1691 = vmatprep.subr.mxu0 0.0
        %1692 = vmatpush2.msra.mxu0 0.0
        %1693 = vmatprep.subr.mxu0 0.0
        %1694 = vmatpush2.msra.mxu0 0.0
        %1695 = vmatprep.subr.mxu0 0.0
        %1696 = vmatpush2.msra.mxu0 0.0
        %1697 = vmatprep.subr.mxu0 0.0
        %1698 = vmatpush2.msra.mxu0 0.0
        %1699 = vmatprep.subr.mxu0 0.0
        %1700 = vmatpush2.msra.mxu0 0.0
        %1701 = vmatprep.subr.mxu0 0.0
        %1702 = vmatpush2.msra.mxu0 0.0
        %1703 = vmatprep.subr.mxu0 0.0
        %1704 = vmatpush2.msra.mxu0 0.0
        %1705 = vmatprep.subr.mxu0 0.0
        %1706 = vmatpush2.msra.mxu0 0.0
        %1707 = vmatprep.subr.mxu0 0.0
        %1708 = vmatpush2.msra.mxu0 0.0
        %1709 = vmatprep.subr.mxu0 0.0
        %1710 = vmatpush2.msra.mxu0 0.0
        %1711 = vmatprep.subr.mxu0 0.0
        %1712 = vmatpush2.msra.mxu0 0.0
        %1713 = vmatprep.mubr.f32.mxu0 0.0
        %1714 = vmatmul.mubr.f32.gmra.mxu0 %v1644
        %v1715 = vpop.f32.mrf.mxu0
        %v1716 = vadd.f32 0.0, %v1715
        %v1717 = vpop.f32.mrf.mxu0
        %v1718 = vadd.f32 0.0, %v1717
        %1719 = vmatprep.mubr.f32.mxu0 0.0
        %1720 = vmatmul.mubr.f32.gmra.mxu0 %v1647
        %v1721 = vpop.f32.mrf.mxu0
        %v1722 = vadd.f32 0.0, %v1721
        %v1723 = vpop.f32.mrf.mxu0
        %v1724 = vadd.f32 0.0, %v1723
        %1725 = vdwg.mxu0
        %1726 = vmatprep.subr.mxu0 0.0
        %1727 = vmatpush1.msra.mxu0 0.0
        %1728 = vmatprep.subr.mxu0 0.0
        %1729 = vmatpush1.msra.mxu0 0.0
        %1730 = vmatprep.subr.mxu0 0.0
        %1731 = vmatpush1.msra.mxu0 0.0
        %1732 = vmatprep.subr.mxu0 0.0
        %1733 = vmatpush1.msra.mxu0 0.0
        %1734 = vmatprep.subr.mxu0 0.0
        %1735 = vmatpush1.msra.mxu0 0.0
        %1736 = vmatprep.subr.mxu0 0.0
        %1737 = vmatpush1.msra.mxu0 0.0
        %1738 = vmatprep.subr.mxu0 %v1638
        %1739 = vmatpush1.msra.mxu0 %v1637
        %1740 = vmatprep.subr.mxu0 %v1630
        %1741 = vmatpush1.msra.mxu0 %v1629
        %1742 = vmatprep.subr.mxu0 %v1622
        %1743 = vmatpush1.msra.mxu0 %v1621
        %1744 = vmatprep.subr.mxu0 %v1614
        %1745 = vmatpush1.msra.mxu0 %v1613
        %1746 = vmatprep.subr.mxu0 %v1606
        %1747 = vmatpush1.msra.mxu0 %v1605
        %1748 = vmatprep.subr.mxu0 %v1598
        %1749 = vmatpush1.msra.mxu0 %v1597
        %1750 = vmatprep.subr.mxu0 %v1590
        %1751 = vmatpush1.msra.mxu0 %v1589
        %1752 = vmatprep.subr.mxu0 %v1582
        %1753 = vmatpush1.msra.mxu0 %v1581
        %1754 = vmatprep.subr.mxu0 %v1574
        %1755 = vmatpush1.msra.mxu0 %v1573
        %1756 = vmatprep.subr.mxu0 %v1566
        %1757 = vmatpush1.msra.mxu0 %v1565
        %1758 = vmatprep.subr.mxu0 0.0
        %1759 = vmatpush2.msra.mxu0 0.0
        %1760 = vmatprep.subr.mxu0 0.0
        %1761 = vmatpush2.msra.mxu0 0.0
        %1762 = vmatprep.subr.mxu0 0.0
        %1763 = vmatpush2.msra.mxu0 0.0
        %1764 = vmatprep.subr.mxu0 0.0
        %1765 = vmatpush2.msra.mxu0 0.0
        %1766 = vmatprep.subr.mxu0 0.0
        %1767 = vmatpush2.msra.mxu0 0.0
        %1768 = vmatprep.subr.mxu0 0.0
        %1769 = vmatpush2.msra.mxu0 0.0
        %1770 = vmatprep.subr.mxu0 0.0
        %1771 = vmatpush2.msra.mxu0 0.0
        %1772 = vmatprep.subr.mxu0 0.0
        %1773 = vmatpush2.msra.mxu0 0.0
        %1774 = vmatprep.subr.mxu0 0.0
        %1775 = vmatpush2.msra.mxu0 0.0
        %1776 = vmatprep.subr.mxu0 0.0
        %1777 = vmatpush2.msra.mxu0 0.0
        %1778 = vmatprep.subr.mxu0 0.0
        %1779 = vmatpush2.msra.mxu0 0.0
        %1780 = vmatprep.subr.mxu0 0.0
        %1781 = vmatpush2.msra.mxu0 0.0
        %1782 = vmatprep.subr.mxu0 0.0
        %1783 = vmatpush2.msra.mxu0 0.0
        %1784 = vmatprep.subr.mxu0 0.0
        %1785 = vmatpush2.msra.mxu0 0.0
        %1786 = vmatprep.subr.mxu0 0.0
        %1787 = vmatpush2.msra.mxu0 0.0
        %1788 = vmatprep.subr.mxu0 0.0
        %1789 = vmatpush2.msra.mxu0 0.0
        %1790 = vmatprep.mubr.f32.mxu0 0.0
        %1791 = vmatmul.mubr.f32.gmra.mxu0 %v1644
        %v1792 = vpop.f32.mrf.mxu0
        %v1793 = vadd.f32 0.0, %v1792
        %v1794 = vpop.f32.mrf.mxu0
        %v1795 = vadd.f32 0.0, %v1794
        %1796 = vmatprep.mubr.f32.mxu0 0.0
        %1797 = vmatmul.mubr.f32.gmra.mxu0 %v1647
        %v1798 = vpop.f32.mrf.mxu0
        %v1799 = vadd.f32 0.0, %v1798
        %v1800 = vpop.f32.mrf.mxu0
        %v1801 = vadd.f32 0.0, %v1800
        %1802 = vdwg.mxu0
        %1803 = vmatprep.subr.mxu0 0.0
        %1804 = vmatpush1.msra.mxu0 0.0
        %1805 = vmatprep.subr.mxu0 0.0
        %1806 = vmatpush1.msra.mxu0 0.0
        %1807 = vmatprep.subr.mxu0 0.0
        %1808 = vmatpush1.msra.mxu0 0.0
        %1809 = vmatprep.subr.mxu0 0.0
        %1810 = vmatpush1.msra.mxu0 0.0
        %1811 = vmatprep.subr.mxu0 0.0
        %1812 = vmatpush1.msra.mxu0 0.0
        %1813 = vmatprep.subr.mxu0 0.0
        %1814 = vmatpush1.msra.mxu0 0.0
        %1815 = vmatprep.subr.mxu0 %v1640
        %1816 = vmatpush1.msra.mxu0 %v1639
        %1817 = vmatprep.subr.mxu0 %v1632
        %1818 = vmatpush1.msra.mxu0 %v1631
        %1819 = vmatprep.subr.mxu0 %v1624
        %1820 = vmatpush1.msra.mxu0 %v1623
        %1821 = vmatprep.subr.mxu0 %v1616
        %1822 = vmatpush1.msra.mxu0 %v1615
        %1823 = vmatprep.subr.mxu0 %v1608
        %1824 = vmatpush1.msra.mxu0 %v1607
        %1825 = vmatprep.subr.mxu0 %v1600
        %1826 = vmatpush1.msra.mxu0 %v1599
        %1827 = vmatprep.subr.mxu0 %v1592
        %1828 = vmatpush1.msra.mxu0 %v1591
        %1829 = vmatprep.subr.mxu0 %v1584
        %1830 = vmatpush1.msra.mxu0 %v1583
        %1831 = vmatprep.subr.mxu0 %v1576
        %1832 = vmatpush1.msra.mxu0 %v1575
        %1833 = vmatprep.subr.mxu0 %v1568
        %1834 = vmatpush1.msra.mxu0 %v1567
        %1835 = vmatprep.subr.mxu0 0.0
        %1836 = vmatpush2.msra.mxu0 0.0
        %1837 = vmatprep.subr.mxu0 0.0
        %1838 = vmatpush2.msra.mxu0 0.0
        %1839 = vmatprep.subr.mxu0 0.0
        %1840 = vmatpush2.msra.mxu0 0.0
        %1841 = vmatprep.subr.mxu0 0.0
        %1842 = vmatpush2.msra.mxu0 0.0
        %1843 = vmatprep.subr.mxu0 0.0
        %1844 = vmatpush2.msra.mxu0 0.0
        %1845 = vmatprep.subr.mxu0 0.0
        %1846 = vmatpush2.msra.mxu0 0.0
        %1847 = vmatprep.subr.mxu0 0.0
        %1848 = vmatpush2.msra.mxu0 0.0
        %1849 = vmatprep.subr.mxu0 0.0
        %1850 = vmatpush2.msra.mxu0 0.0
        %1851 = vmatprep.subr.mxu0 0.0
        %1852 = vmatpush2.msra.mxu0 0.0
        %1853 = vmatprep.subr.mxu0 0.0
        %1854 = vmatpush2.msra.mxu0 0.0
        %1855 = vmatprep.subr.mxu0 0.0
        %1856 = vmatpush2.msra.mxu0 0.0
        %1857 = vmatprep.subr.mxu0 0.0
        %1858 = vmatpush2.msra.mxu0 0.0
        %1859 = vmatprep.subr.mxu0 0.0
        %1860 = vmatpush2.msra.mxu0 0.0
        %1861 = vmatprep.subr.mxu0 0.0
        %1862 = vmatpush2.msra.mxu0 0.0
        %1863 = vmatprep.subr.mxu0 0.0
        %1864 = vmatpush2.msra.mxu0 0.0
        %1865 = vmatprep.subr.mxu0 0.0
        %1866 = vmatpush2.msra.mxu0 0.0
        %1867 = vmatprep.mubr.f32.mxu0 0.0
        %1868 = vmatmul.mubr.f32.gmra.mxu0 %v1644
        %v1869 = vpop.f32.mrf.mxu0
        %v1870 = vadd.f32 0.0, %v1869
        %v1871 = vpop.f32.mrf.mxu0
        %v1872 = vadd.f32 0.0, %v1871
        %1873 = vmatprep.mubr.f32.mxu0 0.0
        %1874 = vmatmul.mubr.f32.gmra.mxu0 %v1647
        %v1875 = vpop.f32.mrf.mxu0
        %v1876 = vadd.f32 0.0, %v1875
        %v1877 = vpop.f32.mrf.mxu0
        %v1878 = vadd.f32 0.0, %v1877
        %1879 = vdwg.mxu0
        %1880 = vmatprep.subr.mxu0 0.0
        %1881 = vmatpush1.msra.mxu0 0.0
        %1882 = vmatprep.subr.mxu0 0.0
        %1883 = vmatpush1.msra.mxu0 0.0
        %1884 = vmatprep.subr.mxu0 0.0
        %1885 = vmatpush1.msra.mxu0 0.0
        %1886 = vmatprep.subr.mxu0 0.0
        %1887 = vmatpush1.msra.mxu0 0.0
        %1888 = vmatprep.subr.mxu0 0.0
        %1889 = vmatpush1.msra.mxu0 0.0
        %1890 = vmatprep.subr.mxu0 0.0
        %1891 = vmatpush1.msra.mxu0 0.0
        %1892 = vmatprep.subr.mxu0 %v1642
        %1893 = vmatpush1.msra.mxu0 %v1641
        %1894 = vmatprep.subr.mxu0 %v1634
        %1895 = vmatpush1.msra.mxu0 %v1633
        %1896 = vmatprep.subr.mxu0 %v1626
        %1897 = vmatpush1.msra.mxu0 %v1625
        %1898 = vmatprep.subr.mxu0 %v1618
        %1899 = vmatpush1.msra.mxu0 %v1617
        %1900 = vmatprep.subr.mxu0 %v1610
        %1901 = vmatpush1.msra.mxu0 %v1609
        %1902 = vmatprep.subr.mxu0 %v1602
        %1903 = vmatpush1.msra.mxu0 %v1601
        %1904 = vmatprep.subr.mxu0 %v1594
        %1905 = vmatpush1.msra.mxu0 %v1593
        %1906 = vmatprep.subr.mxu0 %v1586
        %1907 = vmatpush1.msra.mxu0 %v1585
        %1908 = vmatprep.subr.mxu0 %v1578
        %1909 = vmatpush1.msra.mxu0 %v1577
        %1910 = vmatprep.subr.mxu0 %v1570
        %1911 = vmatpush1.msra.mxu0 %v1569
        %1912 = vmatprep.subr.mxu0 0.0
        %1913 = vmatpush2.msra.mxu0 0.0
        %1914 = vmatprep.subr.mxu0 0.0
        %1915 = vmatpush2.msra.mxu0 0.0
        %1916 = vmatprep.subr.mxu0 0.0
        %1917 = vmatpush2.msra.mxu0 0.0
        %1918 = vmatprep.subr.mxu0 0.0
        %1919 = vmatpush2.msra.mxu0 0.0
        %1920 = vmatprep.subr.mxu0 0.0
        %1921 = vmatpush2.msra.mxu0 0.0
        %1922 = vmatprep.subr.mxu0 0.0
        %1923 = vmatpush2.msra.mxu0 0.0
        %1924 = vmatprep.subr.mxu0 0.0
        %1925 = vmatpush2.msra.mxu0 0.0
        %1926 = vmatprep.subr.mxu0 0.0
        %1927 = vmatpush2.msra.mxu0 0.0
        %1928 = vmatprep.subr.mxu0 0.0
        %1929 = vmatpush2.msra.mxu0 0.0
        %1930 = vmatprep.subr.mxu0 0.0
        %1931 = vmatpush2.msra.mxu0 0.0
        %1932 = vmatprep.subr.mxu0 0.0
        %1933 = vmatpush2.msra.mxu0 0.0
        %1934 = vmatprep.subr.mxu0 0.0
        %1935 = vmatpush2.msra.mxu0 0.0
        %1936 = vmatprep.subr.mxu0 0.0
        %1937 = vmatpush2.msra.mxu0 0.0
        %1938 = vmatprep.subr.mxu0 0.0
        %1939 = vmatpush2.msra.mxu0 0.0
        %1940 = vmatprep.subr.mxu0 0.0
        %1941 = vmatpush2.msra.mxu0 0.0
        %1942 = vmatprep.subr.mxu0 0.0
        %1943 = vmatpush2.msra.mxu0 0.0
        %1944 = vmatprep.mubr.f32.mxu0 0.0
        %1945 = vmatmul.mubr.f32.gmra.mxu0 %v1644
        %v1946 = vpop.f32.mrf.mxu0
        %v1947 = vadd.f32 0.0, %v1946
        %v1948 = vpop.f32.mrf.mxu0
        %v1949 = vadd.f32 0.0, %v1948
        %1950 = vmatprep.mubr.f32.mxu0 0.0
        %1951 = vmatmul.mubr.f32.gmra.mxu0 %v1647
        %v1952 = vpop.f32.mrf.mxu0
        %v1953 = vadd.f32 0.0, %v1952
        %v1954 = vpop.f32.mrf.mxu0
        %v1955 = vadd.f32 0.0, %v1954
        %1956 = vdwg.mxu0
        %v1957 = vadd.f32 %v1319, %v1716
        %v1958 = vadd.f32 %v1321, %v1718
        %v1959 = vadd.f32 %v1396, %v1793
        %v1960 = vadd.f32 %v1398, %v1795
        %v1961 = vadd.f32 %v1473, %v1870
        %v1962 = vadd.f32 %v1475, %v1872
        %v1963 = vadd.f32 %v1550, %v1947
        %v1964 = vadd.f32 %v1552, %v1949
        %v1965 = vadd.f32 %v1325, %v1722
        %v1966 = vadd.f32 %v1327, %v1724
        %v1967 = vadd.f32 %v1402, %v1799
        %v1968 = vadd.f32 %v1404, %v1801
        %v1969 = vadd.f32 %v1479, %v1876
        %v1970 = vadd.f32 %v1481, %v1878
        %v1971 = vadd.f32 %v1556, %v1953
        %v1972 = vadd.f32 %v1558, %v1955
        %v1973 = vld [vmem:[#allocation2 + $0x3] sm:$0xff]
        %v1974 = vld [vmem:[#allocation2 + $0xb] sm:$0xff]
        %s1975 = scalar_lea.vmem [#allocation8], 1920
        %v1976 = vld [vmem:[%s1975] sm:$0xff]
        %v1977 = vld [vmem:[%s1975 + $0x8] sm:$0xff]
        %v1978 = vld [vmem:[%s1975 + $0x10] sm:$0xff]
        %v1979 = vld [vmem:[%s1975 + $0x18] sm:$0xff]
        %v1980 = vld [vmem:[%s1975 + $0x20] sm:$0xff]
        %v1981 = vld [vmem:[%s1975 + $0x28] sm:$0xff]
        %v1982 = vld [vmem:[%s1975 + $0x30] sm:$0xff]
        %v1983 = vld [vmem:[%s1975 + $0x38] sm:$0xff]
        %v1984 = vld [vmem:[%s1975 + $0x40] sm:$0xff]
        %v1985 = vld [vmem:[%s1975 + $0x48] sm:$0xff]
        %v1986 = vld [vmem:[%s1975 + $0x50] sm:$0xff]
        %v1987 = vld [vmem:[%s1975 + $0x58] sm:$0xff]
        %v1988 = vld [vmem:[%s1975 + $0x60] sm:$0xff]
        %v1989 = vld [vmem:[%s1975 + $0x68] sm:$0xff]
        %v1990 = vld [vmem:[%s1975 + $0x70] sm:$0xff]
        %v1991 = vld [vmem:[%s1975 + $0x78] sm:$0xff]
        %v1992 = vld [vmem:[%s1975 + $0x80] sm:$0xff]
        %v1993 = vld [vmem:[%s1975 + $0x88] sm:$0xff]
        %v1994 = vld [vmem:[%s1975 + $0x90] sm:$0xff]
        %v1995 = vld [vmem:[%s1975 + $0x98] sm:$0xff]
        %v1996 = vld [vmem:[%s1975 + $0xa0] sm:$0xff]
        %v1997 = vld [vmem:[%s1975 + $0xa8] sm:$0xff]
        %v1998 = vld [vmem:[%s1975 + $0xb0] sm:$0xff]
        %v1999 = vld [vmem:[%s1975 + $0xb8] sm:$0xff]
        %v2000 = vld [vmem:[%s1975 + $0xc0] sm:$0xff]
        %v2001 = vld [vmem:[%s1975 + $0xc8] sm:$0xff]
        %v2002 = vld [vmem:[%s1975 + $0xd0] sm:$0xff]
        %v2003 = vld [vmem:[%s1975 + $0xd8] sm:$0xff]
        %v2004 = vld [vmem:[%s1975 + $0xe0] sm:$0xff]
        %v2005 = vld [vmem:[%s1975 + $0xe8] sm:$0xff]
        %v2006 = vld [vmem:[%s1975 + $0xf0] sm:$0xff]
        %v2007 = vld [vmem:[%s1975 + $0xf8] sm:$0xff]
        %v2008 = vld [vmem:[%s1975 + $0x100] sm:$0xff]
        %v2009 = vld [vmem:[%s1975 + $0x108] sm:$0xff]
        %v2010 = vld [vmem:[%s1975 + $0x110] sm:$0xff]
        %v2011 = vld [vmem:[%s1975 + $0x118] sm:$0xff]
        %v2012 = vld [vmem:[%s1975 + $0x120] sm:$0xff]
        %v2013 = vld [vmem:[%s1975 + $0x128] sm:$0xff]
        %v2014 = vld [vmem:[%s1975 + $0x130] sm:$0xff]
        %v2015 = vld [vmem:[%s1975 + $0x138] sm:$0xff]
        %v2016 = vld [vmem:[%s1975 + $0x140] sm:$0xff]
        %v2017 = vld [vmem:[%s1975 + $0x148] sm:$0xff]
        %v2018 = vld [vmem:[%s1975 + $0x150] sm:$0xff]
        %v2019 = vld [vmem:[%s1975 + $0x158] sm:$0xff]
        %v2020 = vld [vmem:[%s1975 + $0x160] sm:$0xff]
        %v2021 = vld [vmem:[%s1975 + $0x168] sm:$0xff]
        %v2022 = vld [vmem:[%s1975 + $0x170] sm:$0xff]
        %v2023 = vld [vmem:[%s1975 + $0x178] sm:$0xff]
        %v2024 = vld [vmem:[%s1975 + $0x180] sm:$0xff]
        %v2025 = vld [vmem:[%s1975 + $0x188] sm:$0xff]
        %v2026 = vld [vmem:[%s1975 + $0x190] sm:$0xff]
        %v2027 = vld [vmem:[%s1975 + $0x198] sm:$0xff]
        %v2028 = vld [vmem:[%s1975 + $0x1a0] sm:$0xff]
        %v2029 = vld [vmem:[%s1975 + $0x1a8] sm:$0xff]
        %v2030 = vld [vmem:[%s1975 + $0x1b0] sm:$0xff]
        %v2031 = vld [vmem:[%s1975 + $0x1b8] sm:$0xff]
        %v2032 = vld [vmem:[%s1975 + $0x1c0] sm:$0xff]
        %v2033 = vld [vmem:[%s1975 + $0x1c8] sm:$0xff]
        %v2034 = vld [vmem:[%s1975 + $0x1d0] sm:$0xff]
        %v2035 = vld [vmem:[%s1975 + $0x1d8] sm:$0xff]
        %v2036 = vld [vmem:[%s1975 + $0x1e0] sm:$0xff]
        %v2037 = vld [vmem:[%s1975 + $0x1e8] sm:$0xff]
        %v2038 = vld [vmem:[%s1975 + $0x1f0] sm:$0xff]
        %v2039 = vld [vmem:[%s1975 + $0x1f8] sm:$0xff]
        %v2040 = vld [vmem:[%s1975 + $0x200] sm:$0xff]
        %v2041 = vld [vmem:[%s1975 + $0x208] sm:$0xff]
        %v2042 = vld [vmem:[%s1975 + $0x210] sm:$0xff]
        %v2043 = vld [vmem:[%s1975 + $0x218] sm:$0xff]
        %v2044 = vld [vmem:[%s1975 + $0x220] sm:$0xff]
        %v2045 = vld [vmem:[%s1975 + $0x228] sm:$0xff]
        %v2046 = vld [vmem:[%s1975 + $0x230] sm:$0xff]
        %v2047 = vld [vmem:[%s1975 + $0x238] sm:$0xff]
        %v2048 = vld [vmem:[%s1975 + $0x240] sm:$0xff]
        %v2049 = vld [vmem:[%s1975 + $0x248] sm:$0xff]
        %v2050 = vld [vmem:[%s1975 + $0x250] sm:$0xff]
        %v2051 = vld [vmem:[%s1975 + $0x258] sm:$0xff]
        %v2052 = vld [vmem:[%s1975 + $0x260] sm:$0xff]
        %v2053 = vld [vmem:[%s1975 + $0x268] sm:$0xff]
        %v2054 = vld [vmem:[%s1975 + $0x270] sm:$0xff]
        %v2055 = vld [vmem:[%s1975 + $0x278] sm:$0xff]
        %v2057 = vsel %vm689, %v1973, 0
        %v2060 = vsel %vm689, %v1974, 0
        %2062 = vmatprep.subr.mxu0 0.0
        %2063 = vmatpush1.msra.mxu0 0.0
        %2064 = vmatprep.subr.mxu0 0.0
        %2065 = vmatpush1.msra.mxu0 0.0
        %2066 = vmatprep.subr.mxu0 0.0
        %2067 = vmatpush1.msra.mxu0 0.0
        %2068 = vmatprep.subr.mxu0 0.0
        %2069 = vmatpush1.msra.mxu0 0.0
        %2070 = vmatprep.subr.mxu0 0.0
        %2071 = vmatpush1.msra.mxu0 0.0
        %2072 = vmatprep.subr.mxu0 0.0
        %2073 = vmatpush1.msra.mxu0 0.0
        %2074 = vmatprep.subr.mxu0 %v2049
        %2075 = vmatpush1.msra.mxu0 %v2048
        %2076 = vmatprep.subr.mxu0 %v2041
        %2077 = vmatpush1.msra.mxu0 %v2040
        %2078 = vmatprep.subr.mxu0 %v2033
        %2079 = vmatpush1.msra.mxu0 %v2032
        %2080 = vmatprep.subr.mxu0 %v2025
        %2081 = vmatpush1.msra.mxu0 %v2024
        %2082 = vmatprep.subr.mxu0 %v2017
        %2083 = vmatpush1.msra.mxu0 %v2016
        %2084 = vmatprep.subr.mxu0 %v2009
        %2085 = vmatpush1.msra.mxu0 %v2008
        %2086 = vmatprep.subr.mxu0 %v2001
        %2087 = vmatpush1.msra.mxu0 %v2000
        %2088 = vmatprep.subr.mxu0 %v1993
        %2089 = vmatpush1.msra.mxu0 %v1992
        %2090 = vmatprep.subr.mxu0 %v1985
        %2091 = vmatpush1.msra.mxu0 %v1984
        %2092 = vmatprep.subr.mxu0 %v1977
        %2093 = vmatpush1.msra.mxu0 %v1976
        %2094 = vmatprep.subr.mxu0 0.0
        %2095 = vmatpush2.msra.mxu0 0.0
        %2096 = vmatprep.subr.mxu0 0.0
        %2097 = vmatpush2.msra.mxu0 0.0
        %2098 = vmatprep.subr.mxu0 0.0
        %2099 = vmatpush2.msra.mxu0 0.0
        %2100 = vmatprep.subr.mxu0 0.0
        %2101 = vmatpush2.msra.mxu0 0.0
        %2102 = vmatprep.subr.mxu0 0.0
        %2103 = vmatpush2.msra.mxu0 0.0
        %2104 = vmatprep.subr.mxu0 0.0
        %2105 = vmatpush2.msra.mxu0 0.0
        %2106 = vmatprep.subr.mxu0 0.0
        %2107 = vmatpush2.msra.mxu0 0.0
        %2108 = vmatprep.subr.mxu0 0.0
        %2109 = vmatpush2.msra.mxu0 0.0
        %2110 = vmatprep.subr.mxu0 0.0
        %2111 = vmatpush2.msra.mxu0 0.0
        %2112 = vmatprep.subr.mxu0 0.0
        %2113 = vmatpush2.msra.mxu0 0.0
        %2114 = vmatprep.subr.mxu0 0.0
        %2115 = vmatpush2.msra.mxu0 0.0
        %2116 = vmatprep.subr.mxu0 0.0
        %2117 = vmatpush2.msra.mxu0 0.0
        %2118 = vmatprep.subr.mxu0 0.0
        %2119 = vmatpush2.msra.mxu0 0.0
        %2120 = vmatprep.subr.mxu0 0.0
        %2121 = vmatpush2.msra.mxu0 0.0
        %2122 = vmatprep.subr.mxu0 0.0
        %2123 = vmatpush2.msra.mxu0 0.0
        %2124 = vmatprep.subr.mxu0 0.0
        %2125 = vmatpush2.msra.mxu0 0.0
        %2126 = vmatprep.mubr.f32.mxu0 0.0
        %2127 = vmatmul.mubr.f32.gmra.mxu0 %v2057
        %v2128 = vpop.f32.mrf.mxu0
        %v2129 = vadd.f32 0.0, %v2128
        %v2130 = vpop.f32.mrf.mxu0
        %v2131 = vadd.f32 0.0, %v2130
        %2132 = vmatprep.mubr.f32.mxu0 0.0
        %2133 = vmatmul.mubr.f32.gmra.mxu0 %v2060
        %v2134 = vpop.f32.mrf.mxu0
        %v2135 = vadd.f32 0.0, %v2134
        %v2136 = vpop.f32.mrf.mxu0
        %v2137 = vadd.f32 0.0, %v2136
        %2138 = vdwg.mxu0
        %2139 = vmatprep.subr.mxu0 0.0
        %2140 = vmatpush1.msra.mxu0 0.0
        %2141 = vmatprep.subr.mxu0 0.0
        %2142 = vmatpush1.msra.mxu0 0.0
        %2143 = vmatprep.subr.mxu0 0.0
        %2144 = vmatpush1.msra.mxu0 0.0
        %2145 = vmatprep.subr.mxu0 0.0
        %2146 = vmatpush1.msra.mxu0 0.0
        %2147 = vmatprep.subr.mxu0 0.0
        %2148 = vmatpush1.msra.mxu0 0.0
        %2149 = vmatprep.subr.mxu0 0.0
        %2150 = vmatpush1.msra.mxu0 0.0
        %2151 = vmatprep.subr.mxu0 %v2051
        %2152 = vmatpush1.msra.mxu0 %v2050
        %2153 = vmatprep.subr.mxu0 %v2043
        %2154 = vmatpush1.msra.mxu0 %v2042
        %2155 = vmatprep.subr.mxu0 %v2035
        %2156 = vmatpush1.msra.mxu0 %v2034
        %2157 = vmatprep.subr.mxu0 %v2027
        %2158 = vmatpush1.msra.mxu0 %v2026
        %2159 = vmatprep.subr.mxu0 %v2019
        %2160 = vmatpush1.msra.mxu0 %v2018
        %2161 = vmatprep.subr.mxu0 %v2011
        %2162 = vmatpush1.msra.mxu0 %v2010
        %2163 = vmatprep.subr.mxu0 %v2003
        %2164 = vmatpush1.msra.mxu0 %v2002
        %2165 = vmatprep.subr.mxu0 %v1995
        %2166 = vmatpush1.msra.mxu0 %v1994
        %2167 = vmatprep.subr.mxu0 %v1987
        %2168 = vmatpush1.msra.mxu0 %v1986
        %2169 = vmatprep.subr.mxu0 %v1979
        %2170 = vmatpush1.msra.mxu0 %v1978
        %2171 = vmatprep.subr.mxu0 0.0
        %2172 = vmatpush2.msra.mxu0 0.0
        %2173 = vmatprep.subr.mxu0 0.0
        %2174 = vmatpush2.msra.mxu0 0.0
        %2175 = vmatprep.subr.mxu0 0.0
        %2176 = vmatpush2.msra.mxu0 0.0
        %2177 = vmatprep.subr.mxu0 0.0
        %2178 = vmatpush2.msra.mxu0 0.0
        %2179 = vmatprep.subr.mxu0 0.0
        %2180 = vmatpush2.msra.mxu0 0.0
        %2181 = vmatprep.subr.mxu0 0.0
        %2182 = vmatpush2.msra.mxu0 0.0
        %2183 = vmatprep.subr.mxu0 0.0
        %2184 = vmatpush2.msra.mxu0 0.0
        %2185 = vmatprep.subr.mxu0 0.0
        %2186 = vmatpush2.msra.mxu0 0.0
        %2187 = vmatprep.subr.mxu0 0.0
        %2188 = vmatpush2.msra.mxu0 0.0
        %2189 = vmatprep.subr.mxu0 0.0
        %2190 = vmatpush2.msra.mxu0 0.0
        %2191 = vmatprep.subr.mxu0 0.0
        %2192 = vmatpush2.msra.mxu0 0.0
        %2193 = vmatprep.subr.mxu0 0.0
        %2194 = vmatpush2.msra.mxu0 0.0
        %2195 = vmatprep.subr.mxu0 0.0
        %2196 = vmatpush2.msra.mxu0 0.0
        %2197 = vmatprep.subr.mxu0 0.0
        %2198 = vmatpush2.msra.mxu0 0.0
        %2199 = vmatprep.subr.mxu0 0.0
        %2200 = vmatpush2.msra.mxu0 0.0
        %2201 = vmatprep.subr.mxu0 0.0
        %2202 = vmatpush2.msra.mxu0 0.0
        %2203 = vmatprep.mubr.f32.mxu0 0.0
        %2204 = vmatmul.mubr.f32.gmra.mxu0 %v2057
        %v2205 = vpop.f32.mrf.mxu0
        %v2206 = vadd.f32 0.0, %v2205
        %v2207 = vpop.f32.mrf.mxu0
        %v2208 = vadd.f32 0.0, %v2207
        %2209 = vmatprep.mubr.f32.mxu0 0.0
        %2210 = vmatmul.mubr.f32.gmra.mxu0 %v2060
        %v2211 = vpop.f32.mrf.mxu0
        %v2212 = vadd.f32 0.0, %v2211
        %v2213 = vpop.f32.mrf.mxu0
        %v2214 = vadd.f32 0.0, %v2213
        %2215 = vdwg.mxu0
        %2216 = vmatprep.subr.mxu0 0.0
        %2217 = vmatpush1.msra.mxu0 0.0
        %2218 = vmatprep.subr.mxu0 0.0
        %2219 = vmatpush1.msra.mxu0 0.0
        %2220 = vmatprep.subr.mxu0 0.0
        %2221 = vmatpush1.msra.mxu0 0.0
        %2222 = vmatprep.subr.mxu0 0.0
        %2223 = vmatpush1.msra.mxu0 0.0
        %2224 = vmatprep.subr.mxu0 0.0
        %2225 = vmatpush1.msra.mxu0 0.0
        %2226 = vmatprep.subr.mxu0 0.0
        %2227 = vmatpush1.msra.mxu0 0.0
        %2228 = vmatprep.subr.mxu0 %v2053
        %2229 = vmatpush1.msra.mxu0 %v2052
        %2230 = vmatprep.subr.mxu0 %v2045
        %2231 = vmatpush1.msra.mxu0 %v2044
        %2232 = vmatprep.subr.mxu0 %v2037
        %2233 = vmatpush1.msra.mxu0 %v2036
        %2234 = vmatprep.subr.mxu0 %v2029
        %2235 = vmatpush1.msra.mxu0 %v2028
        %2236 = vmatprep.subr.mxu0 %v2021
        %2237 = vmatpush1.msra.mxu0 %v2020
        %2238 = vmatprep.subr.mxu0 %v2013
        %2239 = vmatpush1.msra.mxu0 %v2012
        %2240 = vmatprep.subr.mxu0 %v2005
        %2241 = vmatpush1.msra.mxu0 %v2004
        %2242 = vmatprep.subr.mxu0 %v1997
        %2243 = vmatpush1.msra.mxu0 %v1996
        %2244 = vmatprep.subr.mxu0 %v1989
        %2245 = vmatpush1.msra.mxu0 %v1988
        %2246 = vmatprep.subr.mxu0 %v1981
        %2247 = vmatpush1.msra.mxu0 %v1980
        %2248 = vmatprep.subr.mxu0 0.0
        %2249 = vmatpush2.msra.mxu0 0.0
        %2250 = vmatprep.subr.mxu0 0.0
        %2251 = vmatpush2.msra.mxu0 0.0
        %2252 = vmatprep.subr.mxu0 0.0
        %2253 = vmatpush2.msra.mxu0 0.0
        %2254 = vmatprep.subr.mxu0 0.0
        %2255 = vmatpush2.msra.mxu0 0.0
        %2256 = vmatprep.subr.mxu0 0.0
        %2257 = vmatpush2.msra.mxu0 0.0
        %2258 = vmatprep.subr.mxu0 0.0
        %2259 = vmatpush2.msra.mxu0 0.0
        %2260 = vmatprep.subr.mxu0 0.0
        %2261 = vmatpush2.msra.mxu0 0.0
        %2262 = vmatprep.subr.mxu0 0.0
        %2263 = vmatpush2.msra.mxu0 0.0
        %2264 = vmatprep.subr.mxu0 0.0
        %2265 = vmatpush2.msra.mxu0 0.0
        %2266 = vmatprep.subr.mxu0 0.0
        %2267 = vmatpush2.msra.mxu0 0.0
        %2268 = vmatprep.subr.mxu0 0.0
        %2269 = vmatpush2.msra.mxu0 0.0
        %2270 = vmatprep.subr.mxu0 0.0
        %2271 = vmatpush2.msra.mxu0 0.0
        %2272 = vmatprep.subr.mxu0 0.0
        %2273 = vmatpush2.msra.mxu0 0.0
        %2274 = vmatprep.subr.mxu0 0.0
        %2275 = vmatpush2.msra.mxu0 0.0
        %2276 = vmatprep.subr.mxu0 0.0
        %2277 = vmatpush2.msra.mxu0 0.0
        %2278 = vmatprep.subr.mxu0 0.0
        %2279 = vmatpush2.msra.mxu0 0.0
        %2280 = vmatprep.mubr.f32.mxu0 0.0
        %2281 = vmatmul.mubr.f32.gmra.mxu0 %v2057
        %v2282 = vpop.f32.mrf.mxu0
        %v2283 = vadd.f32 0.0, %v2282
        %v2284 = vpop.f32.mrf.mxu0
        %v2285 = vadd.f32 0.0, %v2284
        %2286 = vmatprep.mubr.f32.mxu0 0.0
        %2287 = vmatmul.mubr.f32.gmra.mxu0 %v2060
        %v2288 = vpop.f32.mrf.mxu0
        %v2289 = vadd.f32 0.0, %v2288
        %v2290 = vpop.f32.mrf.mxu0
        %v2291 = vadd.f32 0.0, %v2290
        %2292 = vdwg.mxu0
        %2293 = vmatprep.subr.mxu0 0.0
        %2294 = vmatpush1.msra.mxu0 0.0
        %2295 = vmatprep.subr.mxu0 0.0
        %2296 = vmatpush1.msra.mxu0 0.0
        %2297 = vmatprep.subr.mxu0 0.0
        %2298 = vmatpush1.msra.mxu0 0.0
        %2299 = vmatprep.subr.mxu0 0.0
        %2300 = vmatpush1.msra.mxu0 0.0
        %2301 = vmatprep.subr.mxu0 0.0
        %2302 = vmatpush1.msra.mxu0 0.0
        %2303 = vmatprep.subr.mxu0 0.0
        %2304 = vmatpush1.msra.mxu0 0.0
        %2305 = vmatprep.subr.mxu0 %v2055
        %2306 = vmatpush1.msra.mxu0 %v2054
        %2307 = vmatprep.subr.mxu0 %v2047
        %2308 = vmatpush1.msra.mxu0 %v2046
        %2309 = vmatprep.subr.mxu0 %v2039
        %2310 = vmatpush1.msra.mxu0 %v2038
        %2311 = vmatprep.subr.mxu0 %v2031
        %2312 = vmatpush1.msra.mxu0 %v2030
        %2313 = vmatprep.subr.mxu0 %v2023
        %2314 = vmatpush1.msra.mxu0 %v2022
        %2315 = vmatprep.subr.mxu0 %v2015
        %2316 = vmatpush1.msra.mxu0 %v2014
        %2317 = vmatprep.subr.mxu0 %v2007
        %2318 = vmatpush1.msra.mxu0 %v2006
        %2319 = vmatprep.subr.mxu0 %v1999
        %2320 = vmatpush1.msra.mxu0 %v1998
        %2321 = vmatprep.subr.mxu0 %v1991
        %2322 = vmatpush1.msra.mxu0 %v1990
        %2323 = vmatprep.subr.mxu0 %v1983
        %2324 = vmatpush1.msra.mxu0 %v1982
        %2325 = vmatprep.subr.mxu0 0.0
        %2326 = vmatpush2.msra.mxu0 0.0
        %2327 = vmatprep.subr.mxu0 0.0
        %2328 = vmatpush2.msra.mxu0 0.0
        %2329 = vmatprep.subr.mxu0 0.0
        %2330 = vmatpush2.msra.mxu0 0.0
        %2331 = vmatprep.subr.mxu0 0.0
        %2332 = vmatpush2.msra.mxu0 0.0
        %2333 = vmatprep.subr.mxu0 0.0
        %2334 = vmatpush2.msra.mxu0 0.0
        %2335 = vmatprep.subr.mxu0 0.0
        %2336 = vmatpush2.msra.mxu0 0.0
        %2337 = vmatprep.subr.mxu0 0.0
        %2338 = vmatpush2.msra.mxu0 0.0
        %2339 = vmatprep.subr.mxu0 0.0
        %2340 = vmatpush2.msra.mxu0 0.0
        %2341 = vmatprep.subr.mxu0 0.0
        %2342 = vmatpush2.msra.mxu0 0.0
        %2343 = vmatprep.subr.mxu0 0.0
        %2344 = vmatpush2.msra.mxu0 0.0
        %2345 = vmatprep.subr.mxu0 0.0
        %2346 = vmatpush2.msra.mxu0 0.0
        %2347 = vmatprep.subr.mxu0 0.0
        %2348 = vmatpush2.msra.mxu0 0.0
        %2349 = vmatprep.subr.mxu0 0.0
        %2350 = vmatpush2.msra.mxu0 0.0
        %2351 = vmatprep.subr.mxu0 0.0
        %2352 = vmatpush2.msra.mxu0 0.0
        %2353 = vmatprep.subr.mxu0 0.0
        %2354 = vmatpush2.msra.mxu0 0.0
        %2355 = vmatprep.subr.mxu0 0.0
        %2356 = vmatpush2.msra.mxu0 0.0
        %2357 = vmatprep.mubr.f32.mxu0 0.0
        %2358 = vmatmul.mubr.f32.gmra.mxu0 %v2057
        %v2359 = vpop.f32.mrf.mxu0
        %v2360 = vadd.f32 0.0, %v2359
        %v2361 = vpop.f32.mrf.mxu0
        %v2362 = vadd.f32 0.0, %v2361
        %2363 = vmatprep.mubr.f32.mxu0 0.0
        %2364 = vmatmul.mubr.f32.gmra.mxu0 %v2060
        %v2365 = vpop.f32.mrf.mxu0
        %v2366 = vadd.f32 0.0, %v2365
        %v2367 = vpop.f32.mrf.mxu0
        %v2368 = vadd.f32 0.0, %v2367
        %2369 = vdwg.mxu0
        %v2370 = vadd.f32 %v1957, %v2129
        %v2371 = vadd.f32 %v1958, %v2131
        %v2372 = vadd.f32 %v1959, %v2206
        %v2373 = vadd.f32 %v1960, %v2208
        %v2374 = vadd.f32 %v1961, %v2283
        %v2375 = vadd.f32 %v1962, %v2285
        %v2376 = vadd.f32 %v1963, %v2360
        %v2377 = vadd.f32 %v1964, %v2362
        %v2378 = vadd.f32 %v1965, %v2135
        %v2379 = vadd.f32 %v1966, %v2137
        %v2380 = vadd.f32 %v1967, %v2212
        %v2381 = vadd.f32 %v1968, %v2214
        %v2382 = vadd.f32 %v1969, %v2289
        %v2383 = vadd.f32 %v1970, %v2291
        %v2384 = vadd.f32 %v1971, %v2366
        %v2385 = vadd.f32 %v1972, %v2368
        %v2386 = vld [vmem:[#allocation2 + $0x4] sm:$0xff]
        %v2387 = vld [vmem:[#allocation2 + $0xc] sm:$0xff]
        %s2388 = scalar_lea.vmem [#allocation8], 2560
        %v2389 = vld [vmem:[%s2388] sm:$0xff]
        %v2390 = vld [vmem:[%s2388 + $0x8] sm:$0xff]
        %v2391 = vld [vmem:[%s2388 + $0x10] sm:$0xff]
        %v2392 = vld [vmem:[%s2388 + $0x18] sm:$0xff]
        %v2393 = vld [vmem:[%s2388 + $0x20] sm:$0xff]
        %v2394 = vld [vmem:[%s2388 + $0x28] sm:$0xff]
        %v2395 = vld [vmem:[%s2388 + $0x30] sm:$0xff]
        %v2396 = vld [vmem:[%s2388 + $0x38] sm:$0xff]
        %v2397 = vld [vmem:[%s2388 + $0x40] sm:$0xff]
        %v2398 = vld [vmem:[%s2388 + $0x48] sm:$0xff]
        %v2399 = vld [vmem:[%s2388 + $0x50] sm:$0xff]
        %v2400 = vld [vmem:[%s2388 + $0x58] sm:$0xff]
        %v2401 = vld [vmem:[%s2388 + $0x60] sm:$0xff]
        %v2402 = vld [vmem:[%s2388 + $0x68] sm:$0xff]
        %v2403 = vld [vmem:[%s2388 + $0x70] sm:$0xff]
        %v2404 = vld [vmem:[%s2388 + $0x78] sm:$0xff]
        %v2405 = vld [vmem:[%s2388 + $0x80] sm:$0xff]
        %v2406 = vld [vmem:[%s2388 + $0x88] sm:$0xff]
        %v2407 = vld [vmem:[%s2388 + $0x90] sm:$0xff]
        %v2408 = vld [vmem:[%s2388 + $0x98] sm:$0xff]
        %v2409 = vld [vmem:[%s2388 + $0xa0] sm:$0xff]
        %v2410 = vld [vmem:[%s2388 + $0xa8] sm:$0xff]
        %v2411 = vld [vmem:[%s2388 + $0xb0] sm:$0xff]
        %v2412 = vld [vmem:[%s2388 + $0xb8] sm:$0xff]
        %v2413 = vld [vmem:[%s2388 + $0xc0] sm:$0xff]
        %v2414 = vld [vmem:[%s2388 + $0xc8] sm:$0xff]
        %v2415 = vld [vmem:[%s2388 + $0xd0] sm:$0xff]
        %v2416 = vld [vmem:[%s2388 + $0xd8] sm:$0xff]
        %v2417 = vld [vmem:[%s2388 + $0xe0] sm:$0xff]
        %v2418 = vld [vmem:[%s2388 + $0xe8] sm:$0xff]
        %v2419 = vld [vmem:[%s2388 + $0xf0] sm:$0xff]
        %v2420 = vld [vmem:[%s2388 + $0xf8] sm:$0xff]
        %v2421 = vld [vmem:[%s2388 + $0x100] sm:$0xff]
        %v2422 = vld [vmem:[%s2388 + $0x108] sm:$0xff]
        %v2423 = vld [vmem:[%s2388 + $0x110] sm:$0xff]
        %v2424 = vld [vmem:[%s2388 + $0x118] sm:$0xff]
        %v2425 = vld [vmem:[%s2388 + $0x120] sm:$0xff]
        %v2426 = vld [vmem:[%s2388 + $0x128] sm:$0xff]
        %v2427 = vld [vmem:[%s2388 + $0x130] sm:$0xff]
        %v2428 = vld [vmem:[%s2388 + $0x138] sm:$0xff]
        %v2429 = vld [vmem:[%s2388 + $0x140] sm:$0xff]
        %v2430 = vld [vmem:[%s2388 + $0x148] sm:$0xff]
        %v2431 = vld [vmem:[%s2388 + $0x150] sm:$0xff]
        %v2432 = vld [vmem:[%s2388 + $0x158] sm:$0xff]
        %v2433 = vld [vmem:[%s2388 + $0x160] sm:$0xff]
        %v2434 = vld [vmem:[%s2388 + $0x168] sm:$0xff]
        %v2435 = vld [vmem:[%s2388 + $0x170] sm:$0xff]
        %v2436 = vld [vmem:[%s2388 + $0x178] sm:$0xff]
        %v2437 = vld [vmem:[%s2388 + $0x180] sm:$0xff]
        %v2438 = vld [vmem:[%s2388 + $0x188] sm:$0xff]
        %v2439 = vld [vmem:[%s2388 + $0x190] sm:$0xff]
        %v2440 = vld [vmem:[%s2388 + $0x198] sm:$0xff]
        %v2441 = vld [vmem:[%s2388 + $0x1a0] sm:$0xff]
        %v2442 = vld [vmem:[%s2388 + $0x1a8] sm:$0xff]
        %v2443 = vld [vmem:[%s2388 + $0x1b0] sm:$0xff]
        %v2444 = vld [vmem:[%s2388 + $0x1b8] sm:$0xff]
        %v2445 = vld [vmem:[%s2388 + $0x1c0] sm:$0xff]
        %v2446 = vld [vmem:[%s2388 + $0x1c8] sm:$0xff]
        %v2447 = vld [vmem:[%s2388 + $0x1d0] sm:$0xff]
        %v2448 = vld [vmem:[%s2388 + $0x1d8] sm:$0xff]
        %v2449 = vld [vmem:[%s2388 + $0x1e0] sm:$0xff]
        %v2450 = vld [vmem:[%s2388 + $0x1e8] sm:$0xff]
        %v2451 = vld [vmem:[%s2388 + $0x1f0] sm:$0xff]
        %v2452 = vld [vmem:[%s2388 + $0x1f8] sm:$0xff]
        %v2453 = vld [vmem:[%s2388 + $0x200] sm:$0xff]
        %v2454 = vld [vmem:[%s2388 + $0x208] sm:$0xff]
        %v2455 = vld [vmem:[%s2388 + $0x210] sm:$0xff]
        %v2456 = vld [vmem:[%s2388 + $0x218] sm:$0xff]
        %v2457 = vld [vmem:[%s2388 + $0x220] sm:$0xff]
        %v2458 = vld [vmem:[%s2388 + $0x228] sm:$0xff]
        %v2459 = vld [vmem:[%s2388 + $0x230] sm:$0xff]
        %v2460 = vld [vmem:[%s2388 + $0x238] sm:$0xff]
        %v2461 = vld [vmem:[%s2388 + $0x240] sm:$0xff]
        %v2462 = vld [vmem:[%s2388 + $0x248] sm:$0xff]
        %v2463 = vld [vmem:[%s2388 + $0x250] sm:$0xff]
        %v2464 = vld [vmem:[%s2388 + $0x258] sm:$0xff]
        %v2465 = vld [vmem:[%s2388 + $0x260] sm:$0xff]
        %v2466 = vld [vmem:[%s2388 + $0x268] sm:$0xff]
        %v2467 = vld [vmem:[%s2388 + $0x270] sm:$0xff]
        %v2468 = vld [vmem:[%s2388 + $0x278] sm:$0xff]
        %v2470 = vsel %vm689, %v2386, 0
        %v2473 = vsel %vm689, %v2387, 0
        %2475 = vmatprep.subr.mxu0 0.0
        %2476 = vmatpush1.msra.mxu0 0.0
        %2477 = vmatprep.subr.mxu0 0.0
        %2478 = vmatpush1.msra.mxu0 0.0
        %2479 = vmatprep.subr.mxu0 0.0
        %2480 = vmatpush1.msra.mxu0 0.0
        %2481 = vmatprep.subr.mxu0 0.0
        %2482 = vmatpush1.msra.mxu0 0.0
        %2483 = vmatprep.subr.mxu0 0.0
        %2484 = vmatpush1.msra.mxu0 0.0
        %2485 = vmatprep.subr.mxu0 0.0
        %2486 = vmatpush1.msra.mxu0 0.0
        %2487 = vmatprep.subr.mxu0 %v2462
        %2488 = vmatpush1.msra.mxu0 %v2461
        %2489 = vmatprep.subr.mxu0 %v2454
        %2490 = vmatpush1.msra.mxu0 %v2453
        %2491 = vmatprep.subr.mxu0 %v2446
        %2492 = vmatpush1.msra.mxu0 %v2445
        %2493 = vmatprep.subr.mxu0 %v2438
        %2494 = vmatpush1.msra.mxu0 %v2437
        %2495 = vmatprep.subr.mxu0 %v2430
        %2496 = vmatpush1.msra.mxu0 %v2429
        %2497 = vmatprep.subr.mxu0 %v2422
        %2498 = vmatpush1.msra.mxu0 %v2421
        %2499 = vmatprep.subr.mxu0 %v2414
        %2500 = vmatpush1.msra.mxu0 %v2413
        %2501 = vmatprep.subr.mxu0 %v2406
        %2502 = vmatpush1.msra.mxu0 %v2405
        %2503 = vmatprep.subr.mxu0 %v2398
        %2504 = vmatpush1.msra.mxu0 %v2397
        %2505 = vmatprep.subr.mxu0 %v2390
        %2506 = vmatpush1.msra.mxu0 %v2389
        %2507 = vmatprep.subr.mxu0 0.0
        %2508 = vmatpush2.msra.mxu0 0.0
        %2509 = vmatprep.subr.mxu0 0.0
        %2510 = vmatpush2.msra.mxu0 0.0
        %2511 = vmatprep.subr.mxu0 0.0
        %2512 = vmatpush2.msra.mxu0 0.0
        %2513 = vmatprep.subr.mxu0 0.0
        %2514 = vmatpush2.msra.mxu0 0.0
        %2515 = vmatprep.subr.mxu0 0.0
        %2516 = vmatpush2.msra.mxu0 0.0
        %2517 = vmatprep.subr.mxu0 0.0
        %2518 = vmatpush2.msra.mxu0 0.0
        %2519 = vmatprep.subr.mxu0 0.0
        %2520 = vmatpush2.msra.mxu0 0.0
        %2521 = vmatprep.subr.mxu0 0.0
        %2522 = vmatpush2.msra.mxu0 0.0
        %2523 = vmatprep.subr.mxu0 0.0
        %2524 = vmatpush2.msra.mxu0 0.0
        %2525 = vmatprep.subr.mxu0 0.0
        %2526 = vmatpush2.msra.mxu0 0.0
        %2527 = vmatprep.subr.mxu0 0.0
        %2528 = vmatpush2.msra.mxu0 0.0
        %2529 = vmatprep.subr.mxu0 0.0
        %2530 = vmatpush2.msra.mxu0 0.0
        %2531 = vmatprep.subr.mxu0 0.0
        %2532 = vmatpush2.msra.mxu0 0.0
        %2533 = vmatprep.subr.mxu0 0.0
        %2534 = vmatpush2.msra.mxu0 0.0
        %2535 = vmatprep.subr.mxu0 0.0
        %2536 = vmatpush2.msra.mxu0 0.0
        %2537 = vmatprep.subr.mxu0 0.0
        %2538 = vmatpush2.msra.mxu0 0.0
        %2539 = vmatprep.mubr.f32.mxu0 0.0
        %2540 = vmatmul.mubr.f32.gmra.mxu0 %v2470
        %v2541 = vpop.f32.mrf.mxu0
        %v2542 = vadd.f32 0.0, %v2541
        %v2543 = vpop.f32.mrf.mxu0
        %v2544 = vadd.f32 0.0, %v2543
        %2545 = vmatprep.mubr.f32.mxu0 0.0
        %2546 = vmatmul.mubr.f32.gmra.mxu0 %v2473
        %v2547 = vpop.f32.mrf.mxu0
        %v2548 = vadd.f32 0.0, %v2547
        %v2549 = vpop.f32.mrf.mxu0
        %v2550 = vadd.f32 0.0, %v2549
        %2551 = vdwg.mxu0
        %2552 = vmatprep.subr.mxu0 0.0
        %2553 = vmatpush1.msra.mxu0 0.0
        %2554 = vmatprep.subr.mxu0 0.0
        %2555 = vmatpush1.msra.mxu0 0.0
        %2556 = vmatprep.subr.mxu0 0.0
        %2557 = vmatpush1.msra.mxu0 0.0
        %2558 = vmatprep.subr.mxu0 0.0
        %2559 = vmatpush1.msra.mxu0 0.0
        %2560 = vmatprep.subr.mxu0 0.0
        %2561 = vmatpush1.msra.mxu0 0.0
        %2562 = vmatprep.subr.mxu0 0.0
        %2563 = vmatpush1.msra.mxu0 0.0
        %2564 = vmatprep.subr.mxu0 %v2464
        %2565 = vmatpush1.msra.mxu0 %v2463
        %2566 = vmatprep.subr.mxu0 %v2456
        %2567 = vmatpush1.msra.mxu0 %v2455
        %2568 = vmatprep.subr.mxu0 %v2448
        %2569 = vmatpush1.msra.mxu0 %v2447
        %2570 = vmatprep.subr.mxu0 %v2440
        %2571 = vmatpush1.msra.mxu0 %v2439
        %2572 = vmatprep.subr.mxu0 %v2432
        %2573 = vmatpush1.msra.mxu0 %v2431
        %2574 = vmatprep.subr.mxu0 %v2424
        %2575 = vmatpush1.msra.mxu0 %v2423
        %2576 = vmatprep.subr.mxu0 %v2416
        %2577 = vmatpush1.msra.mxu0 %v2415
        %2578 = vmatprep.subr.mxu0 %v2408
        %2579 = vmatpush1.msra.mxu0 %v2407
        %2580 = vmatprep.subr.mxu0 %v2400
        %2581 = vmatpush1.msra.mxu0 %v2399
        %2582 = vmatprep.subr.mxu0 %v2392
        %2583 = vmatpush1.msra.mxu0 %v2391
        %2584 = vmatprep.subr.mxu0 0.0
        %2585 = vmatpush2.msra.mxu0 0.0
        %2586 = vmatprep.subr.mxu0 0.0
        %2587 = vmatpush2.msra.mxu0 0.0
        %2588 = vmatprep.subr.mxu0 0.0
        %2589 = vmatpush2.msra.mxu0 0.0
        %2590 = vmatprep.subr.mxu0 0.0
        %2591 = vmatpush2.msra.mxu0 0.0
        %2592 = vmatprep.subr.mxu0 0.0
        %2593 = vmatpush2.msra.mxu0 0.0
        %2594 = vmatprep.subr.mxu0 0.0
        %2595 = vmatpush2.msra.mxu0 0.0
        %2596 = vmatprep.subr.mxu0 0.0
        %2597 = vmatpush2.msra.mxu0 0.0
        %2598 = vmatprep.subr.mxu0 0.0
        %2599 = vmatpush2.msra.mxu0 0.0
        %2600 = vmatprep.subr.mxu0 0.0
        %2601 = vmatpush2.msra.mxu0 0.0
        %2602 = vmatprep.subr.mxu0 0.0
        %2603 = vmatpush2.msra.mxu0 0.0
        %2604 = vmatprep.subr.mxu0 0.0
        %2605 = vmatpush2.msra.mxu0 0.0
        %2606 = vmatprep.subr.mxu0 0.0
        %2607 = vmatpush2.msra.mxu0 0.0
        %2608 = vmatprep.subr.mxu0 0.0
        %2609 = vmatpush2.msra.mxu0 0.0
        %2610 = vmatprep.subr.mxu0 0.0
        %2611 = vmatpush2.msra.mxu0 0.0
        %2612 = vmatprep.subr.mxu0 0.0
        %2613 = vmatpush2.msra.mxu0 0.0
        %2614 = vmatprep.subr.mxu0 0.0
        %2615 = vmatpush2.msra.mxu0 0.0
        %2616 = vmatprep.mubr.f32.mxu0 0.0
        %2617 = vmatmul.mubr.f32.gmra.mxu0 %v2470
        %v2618 = vpop.f32.mrf.mxu0
        %v2619 = vadd.f32 0.0, %v2618
        %v2620 = vpop.f32.mrf.mxu0
        %v2621 = vadd.f32 0.0, %v2620
        %2622 = vmatprep.mubr.f32.mxu0 0.0
        %2623 = vmatmul.mubr.f32.gmra.mxu0 %v2473
        %v2624 = vpop.f32.mrf.mxu0
        %v2625 = vadd.f32 0.0, %v2624
        %v2626 = vpop.f32.mrf.mxu0
        %v2627 = vadd.f32 0.0, %v2626
        %2628 = vdwg.mxu0
        %2629 = vmatprep.subr.mxu0 0.0
        %2630 = vmatpush1.msra.mxu0 0.0
        %2631 = vmatprep.subr.mxu0 0.0
        %2632 = vmatpush1.msra.mxu0 0.0
        %2633 = vmatprep.subr.mxu0 0.0
        %2634 = vmatpush1.msra.mxu0 0.0
        %2635 = vmatprep.subr.mxu0 0.0
        %2636 = vmatpush1.msra.mxu0 0.0
        %2637 = vmatprep.subr.mxu0 0.0
        %2638 = vmatpush1.msra.mxu0 0.0
        %2639 = vmatprep.subr.mxu0 0.0
        %2640 = vmatpush1.msra.mxu0 0.0
        %2641 = vmatprep.subr.mxu0 %v2466
        %2642 = vmatpush1.msra.mxu0 %v2465
        %2643 = vmatprep.subr.mxu0 %v2458
        %2644 = vmatpush1.msra.mxu0 %v2457
        %2645 = vmatprep.subr.mxu0 %v2450
        %2646 = vmatpush1.msra.mxu0 %v2449
        %2647 = vmatprep.subr.mxu0 %v2442
        %2648 = vmatpush1.msra.mxu0 %v2441
        %2649 = vmatprep.subr.mxu0 %v2434
        %2650 = vmatpush1.msra.mxu0 %v2433
        %2651 = vmatprep.subr.mxu0 %v2426
        %2652 = vmatpush1.msra.mxu0 %v2425
        %2653 = vmatprep.subr.mxu0 %v2418
        %2654 = vmatpush1.msra.mxu0 %v2417
        %2655 = vmatprep.subr.mxu0 %v2410
        %2656 = vmatpush1.msra.mxu0 %v2409
        %2657 = vmatprep.subr.mxu0 %v2402
        %2658 = vmatpush1.msra.mxu0 %v2401
        %2659 = vmatprep.subr.mxu0 %v2394
        %2660 = vmatpush1.msra.mxu0 %v2393
        %2661 = vmatprep.subr.mxu0 0.0
        %2662 = vmatpush2.msra.mxu0 0.0
        %2663 = vmatprep.subr.mxu0 0.0
        %2664 = vmatpush2.msra.mxu0 0.0
        %2665 = vmatprep.subr.mxu0 0.0
        %2666 = vmatpush2.msra.mxu0 0.0
        %2667 = vmatprep.subr.mxu0 0.0
        %2668 = vmatpush2.msra.mxu0 0.0
        %2669 = vmatprep.subr.mxu0 0.0
        %2670 = vmatpush2.msra.mxu0 0.0
        %2671 = vmatprep.subr.mxu0 0.0
        %2672 = vmatpush2.msra.mxu0 0.0
        %2673 = vmatprep.subr.mxu0 0.0
        %2674 = vmatpush2.msra.mxu0 0.0
        %2675 = vmatprep.subr.mxu0 0.0
        %2676 = vmatpush2.msra.mxu0 0.0
        %2677 = vmatprep.subr.mxu0 0.0
        %2678 = vmatpush2.msra.mxu0 0.0
        %2679 = vmatprep.subr.mxu0 0.0
        %2680 = vmatpush2.msra.mxu0 0.0
        %2681 = vmatprep.subr.mxu0 0.0
        %2682 = vmatpush2.msra.mxu0 0.0
        %2683 = vmatprep.subr.mxu0 0.0
        %2684 = vmatpush2.msra.mxu0 0.0
        %2685 = vmatprep.subr.mxu0 0.0
        %2686 = vmatpush2.msra.mxu0 0.0
        %2687 = vmatprep.subr.mxu0 0.0
        %2688 = vmatpush2.msra.mxu0 0.0
        %2689 = vmatprep.subr.mxu0 0.0
        %2690 = vmatpush2.msra.mxu0 0.0
        %2691 = vmatprep.subr.mxu0 0.0
        %2692 = vmatpush2.msra.mxu0 0.0
        %2693 = vmatprep.mubr.f32.mxu0 0.0
        %2694 = vmatmul.mubr.f32.gmra.mxu0 %v2470
        %v2695 = vpop.f32.mrf.mxu0
        %v2696 = vadd.f32 0.0, %v2695
        %v2697 = vpop.f32.mrf.mxu0
        %v2698 = vadd.f32 0.0, %v2697
        %2699 = vmatprep.mubr.f32.mxu0 0.0
        %2700 = vmatmul.mubr.f32.gmra.mxu0 %v2473
        %v2701 = vpop.f32.mrf.mxu0
        %v2702 = vadd.f32 0.0, %v2701
        %v2703 = vpop.f32.mrf.mxu0
        %v2704 = vadd.f32 0.0, %v2703
        %2705 = vdwg.mxu0
        %2706 = vmatprep.subr.mxu0 0.0
        %2707 = vmatpush1.msra.mxu0 0.0
        %2708 = vmatprep.subr.mxu0 0.0
        %2709 = vmatpush1.msra.mxu0 0.0
        %2710 = vmatprep.subr.mxu0 0.0
        %2711 = vmatpush1.msra.mxu0 0.0
        %2712 = vmatprep.subr.mxu0 0.0
        %2713 = vmatpush1.msra.mxu0 0.0
        %2714 = vmatprep.subr.mxu0 0.0
        %2715 = vmatpush1.msra.mxu0 0.0
        %2716 = vmatprep.subr.mxu0 0.0
        %2717 = vmatpush1.msra.mxu0 0.0
        %2718 = vmatprep.subr.mxu0 %v2468
        %2719 = vmatpush1.msra.mxu0 %v2467
        %2720 = vmatprep.subr.mxu0 %v2460
        %2721 = vmatpush1.msra.mxu0 %v2459
        %2722 = vmatprep.subr.mxu0 %v2452
        %2723 = vmatpush1.msra.mxu0 %v2451
        %2724 = vmatprep.subr.mxu0 %v2444
        %2725 = vmatpush1.msra.mxu0 %v2443
        %2726 = vmatprep.subr.mxu0 %v2436
        %2727 = vmatpush1.msra.mxu0 %v2435
        %2728 = vmatprep.subr.mxu0 %v2428
        %2729 = vmatpush1.msra.mxu0 %v2427
        %2730 = vmatprep.subr.mxu0 %v2420
        %2731 = vmatpush1.msra.mxu0 %v2419
        %2732 = vmatprep.subr.mxu0 %v2412
        %2733 = vmatpush1.msra.mxu0 %v2411
        %2734 = vmatprep.subr.mxu0 %v2404
        %2735 = vmatpush1.msra.mxu0 %v2403
        %2736 = vmatprep.subr.mxu0 %v2396
        %2737 = vmatpush1.msra.mxu0 %v2395
        %2738 = vmatprep.subr.mxu0 0.0
        %2739 = vmatpush2.msra.mxu0 0.0
        %2740 = vmatprep.subr.mxu0 0.0
        %2741 = vmatpush2.msra.mxu0 0.0
        %2742 = vmatprep.subr.mxu0 0.0
        %2743 = vmatpush2.msra.mxu0 0.0
        %2744 = vmatprep.subr.mxu0 0.0
        %2745 = vmatpush2.msra.mxu0 0.0
        %2746 = vmatprep.subr.mxu0 0.0
        %2747 = vmatpush2.msra.mxu0 0.0
        %2748 = vmatprep.subr.mxu0 0.0
        %2749 = vmatpush2.msra.mxu0 0.0
        %2750 = vmatprep.subr.mxu0 0.0
        %2751 = vmatpush2.msra.mxu0 0.0
        %2752 = vmatprep.subr.mxu0 0.0
        %2753 = vmatpush2.msra.mxu0 0.0
        %2754 = vmatprep.subr.mxu0 0.0
        %2755 = vmatpush2.msra.mxu0 0.0
        %2756 = vmatprep.subr.mxu0 0.0
        %2757 = vmatpush2.msra.mxu0 0.0
        %2758 = vmatprep.subr.mxu0 0.0
        %2759 = vmatpush2.msra.mxu0 0.0
        %2760 = vmatprep.subr.mxu0 0.0
        %2761 = vmatpush2.msra.mxu0 0.0
        %2762 = vmatprep.subr.mxu0 0.0
        %2763 = vmatpush2.msra.mxu0 0.0
        %2764 = vmatprep.subr.mxu0 0.0
        %2765 = vmatpush2.msra.mxu0 0.0
        %2766 = vmatprep.subr.mxu0 0.0
        %2767 = vmatpush2.msra.mxu0 0.0
        %2768 = vmatprep.subr.mxu0 0.0
        %2769 = vmatpush2.msra.mxu0 0.0
        %2770 = vmatprep.mubr.f32.mxu0 0.0
        %2771 = vmatmul.mubr.f32.gmra.mxu0 %v2470
        %v2772 = vpop.f32.mrf.mxu0
        %v2773 = vadd.f32 0.0, %v2772
        %v2774 = vpop.f32.mrf.mxu0
        %v2775 = vadd.f32 0.0, %v2774
        %2776 = vmatprep.mubr.f32.mxu0 0.0
        %2777 = vmatmul.mubr.f32.gmra.mxu0 %v2473
        %v2778 = vpop.f32.mrf.mxu0
        %v2779 = vadd.f32 0.0, %v2778
        %v2780 = vpop.f32.mrf.mxu0
        %v2781 = vadd.f32 0.0, %v2780
        %2782 = vdwg.mxu0
        %v2783 = vadd.f32 %v2370, %v2542
        %v2784 = vadd.f32 %v2371, %v2544
        %v2785 = vadd.f32 %v2372, %v2619
        %v2786 = vadd.f32 %v2373, %v2621
        %v2787 = vadd.f32 %v2374, %v2696
        %v2788 = vadd.f32 %v2375, %v2698
        %v2789 = vadd.f32 %v2376, %v2773
        %v2790 = vadd.f32 %v2377, %v2775
        %v2791 = vadd.f32 %v2378, %v2548
        %v2792 = vadd.f32 %v2379, %v2550
        %v2793 = vadd.f32 %v2380, %v2625
        %v2794 = vadd.f32 %v2381, %v2627
        %v2795 = vadd.f32 %v2382, %v2702
        %v2796 = vadd.f32 %v2383, %v2704
        %v2797 = vadd.f32 %v2384, %v2779
        %v2798 = vadd.f32 %v2385, %v2781
        %v2799 = vmul.f32 %v2783, 0.5
        %v2800 = vmul.f32 %v2784, 0.5
        %v2801 = vmul.f32 %v2785, 0.5
        %v2802 = vmul.f32 %v2786, 0.5
        %v2803 = vmul.f32 %v2787, 0.5
        %v2804 = vmul.f32 %v2788, 0.5
        %v2805 = vmul.f32 %v2789, 0.5
        %v2806 = vmul.f32 %v2790, 0.5
        %v2807 = vmul.f32 %v2791, 0.5
        %v2808 = vmul.f32 %v2792, 0.5
        %v2809 = vmul.f32 %v2793, 0.5
        %v2810 = vmul.f32 %v2794, 0.5
        %v2811 = vmul.f32 %v2795, 0.5
        %v2812 = vmul.f32 %v2796, 0.5
        %v2813 = vmul.f32 %v2797, 0.5
        %v2814 = vmul.f32 %v2798, 0.5
        %v2815 = vmul.f32 %v2783, %v2783
        %v2816 = vmul.f32 %v2784, %v2784
        %v2817 = vmul.f32 %v2785, %v2785
        %v2818 = vmul.f32 %v2786, %v2786
        %v2819 = vmul.f32 %v2787, %v2787
        %v2820 = vmul.f32 %v2788, %v2788
        %v2821 = vmul.f32 %v2789, %v2789
        %v2822 = vmul.f32 %v2790, %v2790
        %v2823 = vmul.f32 %v2791, %v2791
        %v2824 = vmul.f32 %v2792, %v2792
        %v2825 = vmul.f32 %v2793, %v2793
        %v2826 = vmul.f32 %v2794, %v2794
        %v2827 = vmul.f32 %v2795, %v2795
        %v2828 = vmul.f32 %v2796, %v2796
        %v2829 = vmul.f32 %v2797, %v2797
        %v2830 = vmul.f32 %v2798, %v2798
        %v2831 = vmul.f32 %v2815, %v2783
        %v2832 = vmul.f32 %v2816, %v2784
        %v2833 = vmul.f32 %v2817, %v2785
        %v2834 = vmul.f32 %v2818, %v2786
        %v2835 = vmul.f32 %v2819, %v2787
        %v2836 = vmul.f32 %v2820, %v2788
        %v2837 = vmul.f32 %v2821, %v2789
        %v2838 = vmul.f32 %v2822, %v2790
        %v2839 = vmul.f32 %v2823, %v2791
        %v2840 = vmul.f32 %v2824, %v2792
        %v2841 = vmul.f32 %v2825, %v2793
        %v2842 = vmul.f32 %v2826, %v2794
        %v2843 = vmul.f32 %v2827, %v2795
        %v2844 = vmul.f32 %v2828, %v2796
        %v2845 = vmul.f32 %v2829, %v2797
        %v2846 = vmul.f32 %v2830, %v2798
        %v2847 = vmul.f32 %v2831, 0.044715
        %v2848 = vmul.f32 %v2832, 0.044715
        %v2849 = vmul.f32 %v2833, 0.044715
        %v2850 = vmul.f32 %v2834, 0.044715
        %v2851 = vmul.f32 %v2835, 0.044715
        %v2852 = vmul.f32 %v2836, 0.044715
        %v2853 = vmul.f32 %v2837, 0.044715
        %v2854 = vmul.f32 %v2838, 0.044715
        %v2855 = vmul.f32 %v2839, 0.044715
        %v2856 = vmul.f32 %v2840, 0.044715
        %v2857 = vmul.f32 %v2841, 0.044715
        %v2858 = vmul.f32 %v2842, 0.044715
        %v2859 = vmul.f32 %v2843, 0.044715
        %v2860 = vmul.f32 %v2844, 0.044715
        %v2861 = vmul.f32 %v2845, 0.044715
        %v2862 = vmul.f32 %v2846, 0.044715
        %v2863 = vadd.f32 %v2783, %v2847
        %v2864 = vadd.f32 %v2784, %v2848
        %v2865 = vadd.f32 %v2785, %v2849
        %v2866 = vadd.f32 %v2786, %v2850
        %v2867 = vadd.f32 %v2787, %v2851
        %v2868 = vadd.f32 %v2788, %v2852
        %v2869 = vadd.f32 %v2789, %v2853
        %v2870 = vadd.f32 %v2790, %v2854
        %v2871 = vadd.f32 %v2791, %v2855
        %v2872 = vadd.f32 %v2792, %v2856
        %v2873 = vadd.f32 %v2793, %v2857
        %v2874 = vadd.f32 %v2794, %v2858
        %v2875 = vadd.f32 %v2795, %v2859
        %v2876 = vadd.f32 %v2796, %v2860
        %v2877 = vadd.f32 %v2797, %v2861
        %v2878 = vadd.f32 %v2798, %v2862
        %v2879 = vmul.f32 %v2863, 0.7978846
        %v2880 = vmul.f32 %v2864, 0.7978846
        %v2881 = vmul.f32 %v2865, 0.7978846
        %v2882 = vmul.f32 %v2866, 0.7978846
        %v2883 = vmul.f32 %v2867, 0.7978846
        %v2884 = vmul.f32 %v2868, 0.7978846
        %v2885 = vmul.f32 %v2869, 0.7978846
        %v2886 = vmul.f32 %v2870, 0.7978846
        %v2887 = vmul.f32 %v2871, 0.7978846
        %v2888 = vmul.f32 %v2872, 0.7978846
        %v2889 = vmul.f32 %v2873, 0.7978846
        %v2890 = vmul.f32 %v2874, 0.7978846
        %v2891 = vmul.f32 %v2875, 0.7978846
        %v2892 = vmul.f32 %v2876, 0.7978846
        %v2893 = vmul.f32 %v2877, 0.7978846
        %v2894 = vmul.f32 %v2878, 0.7978846
        %v2895 = vtanh.pop %v2879
        %v2896 = vtanh.pop %v2880
        %v2897 = vtanh.pop %v2881
        %v2898 = vtanh.pop %v2882
        %v2899 = vtanh.pop %v2883
        %v2900 = vtanh.pop %v2884
        %v2901 = vtanh.pop %v2885
        %v2902 = vtanh.pop %v2886
        %v2903 = vtanh.pop %v2887
        %v2904 = vtanh.pop %v2888
        %v2905 = vtanh.pop %v2889
        %v2906 = vtanh.pop %v2890
        %v2907 = vtanh.pop %v2891
        %v2908 = vtanh.pop %v2892
        %v2909 = vtanh.pop %v2893
        %v2910 = vtanh.pop %v2894
        %v2911 = vadd.f32 %v2895, 1.0
        %v2912 = vadd.f32 %v2896, 1.0
        %v2913 = vadd.f32 %v2897, 1.0
        %v2914 = vadd.f32 %v2898, 1.0
        %v2915 = vadd.f32 %v2899, 1.0
        %v2916 = vadd.f32 %v2900, 1.0
        %v2917 = vadd.f32 %v2901, 1.0
        %v2918 = vadd.f32 %v2902, 1.0
        %v2919 = vadd.f32 %v2903, 1.0
        %v2920 = vadd.f32 %v2904, 1.0
        %v2921 = vadd.f32 %v2905, 1.0
        %v2922 = vadd.f32 %v2906, 1.0
        %v2923 = vadd.f32 %v2907, 1.0
        %v2924 = vadd.f32 %v2908, 1.0
        %v2925 = vadd.f32 %v2909, 1.0
        %v2926 = vadd.f32 %v2910, 1.0
        %v2927 = vmul.f32 %v2799, %v2911
        %v2928 = vmul.f32 %v2800, %v2912
        %v2929 = vmul.f32 %v2801, %v2913
        %v2930 = vmul.f32 %v2802, %v2914
        %v2931 = vmul.f32 %v2803, %v2915
        %v2932 = vmul.f32 %v2804, %v2916
        %v2933 = vmul.f32 %v2805, %v2917
        %v2934 = vmul.f32 %v2806, %v2918
        %v2935 = vmul.f32 %v2807, %v2919
        %v2936 = vmul.f32 %v2808, %v2920
        %v2937 = vmul.f32 %v2809, %v2921
        %v2938 = vmul.f32 %v2810, %v2922
        %v2939 = vmul.f32 %v2811, %v2923
        %v2940 = vmul.f32 %v2812, %v2924
        %v2941 = vmul.f32 %v2813, %v2925
        %v2942 = vmul.f32 %v2814, %v2926
        %2943 = vst [vmem:[%s253] sm:$0xff] %v2927
        %2944 = vst [vmem:[%s253 + $0x8] sm:$0xff] %v2928
        %2945 = vst [vmem:[%s253 + $0x10] sm:$0xff] %v2929
        %2946 = vst [vmem:[%s253 + $0x18] sm:$0xff] %v2930
        %2947 = vst [vmem:[%s253 + $0x20] sm:$0xff] %v2931
        %2948 = vst [vmem:[%s253 + $0x28] sm:$0xff] %v2932
        %2949 = vst [vmem:[%s253 + $0x30] sm:$0xff] %v2933
        %2950 = vst [vmem:[%s253 + $0x38] sm:$0xff] %v2934
        %2951 = vst [vmem:[%s253 + $0x40] sm:$0xff] %v2935
        %2952 = vst [vmem:[%s253 + $0x48] sm:$0xff] %v2936
        %2953 = vst [vmem:[%s253 + $0x50] sm:$0xff] %v2937
        %2954 = vst [vmem:[%s253 + $0x58] sm:$0xff] %v2938
        %2955 = vst [vmem:[%s253 + $0x60] sm:$0xff] %v2939
        %2956 = vst [vmem:[%s253 + $0x68] sm:$0xff] %v2940
        %2957 = vst [vmem:[%s253 + $0x70] sm:$0xff] %v2941
        %2958 = vst [vmem:[%s253 + $0x78] sm:$0xff] %v2942
        %p2959 = scmp.lt.s32.totalorder %s20, 1
        %s2960 = scalar_select %p2959, %s20, 1
        %s2961 = smul.addr %s2960, 16
        %s2962 = smul.addr %s2961, 8
        %s2963 = scalar_lea.vmem %s4, %s2962
        // Predicated region
        $region53: #{projection_forward.1} parent=35 // pred_check
          %p2964 = pneg %p127
        $region54: #{projection_forward.1} parent=35 // pred_check_branch
          %2966 = sbr.rel (%p2964) target = $region56
        $region55: #{projection_forward.1} parent=35 // pred_region
          _
        $region56: #{projection_forward.1} parent=35 // pred_fallthru
          _
      $region36: #{projection_forward.1} parent=5 // pred_fallthru
        _
      %p2967 = scmp.le.s32.totalorder 2, %s15
      // Predicated region
      $region57: #{projection_forward.1} parent=5 // pred_check
        %p2968 = pneg %p2967
      $region58: #{projection_forward.1} parent=5 // pred_check_branch
        %2970 = sbr.rel (%p2968) target = $region60
      $region59: #{projection_forward.1} parent=5 // pred_region
        %s2971 = ssub.s32 %s15, 2
        // Predicated region
        $region61: #{projection_forward.1} parent=59 // pred_check
          %p2972 = pneg %p133
        $region62: #{projection_forward.1} parent=59 // pred_check_branch
          %2974 = sbr.rel (%p2972) target = $region64
        $region63: #{projection_forward.1} parent=59 // pred_region
          %p2975 = scmp.lt.s32.totalorder %s21, 1
          %s2976 = scalar_select %p2975, %s21, 1
          %s2977 = smul.addr %s2976, 16
          %s2978 = smul.addr %s2977, 8
          %s2979 = scalar_lea.vmem %s4, %s2978
        $region64: #{projection_forward.1} parent=59 // pred_fallthru
          _
      $region60: #{projection_forward.1} parent=5 // pred_fallthru
        _
    $region6: #{projection_forward.1} parent=1 // loop_footer
      %s19 = sadd.s32 1, %s15
    $region7: #{projection_forward.1} parent=1 // loop_footer_branch
      %14 = sbr.rel target = $region3
    $region8: #{projection_forward.1} parent=1 // loop_exit
      _
    %2980 = vsyncpa [#allocation4], 1
    %s2981 = scalar_lea.sflag [#allocation4], 1
    %2982 = vsyncpa %s2981, 1
    %2983 = vsyncpa [#allocation6], 1
    %2984 = vsyncpa [#allocation9], 1

</llo_original>
